<compile_context>
chip_gen: v7x
topology: tpu7x:2x2x1
jax: 0.10.0
libtpu: 0.0.40
codegen_flags: <defaults>
</compile_context>

<pallas_src>
import functools

import jax
import jax.numpy as jnp
from jax import lax
from jax.experimental import pallas as pl
from jax.experimental.pallas import tpu as pltpu

N_LABELS = 11
_LAYER_DEFS = [(3, 8), (8, 16), (16, 16), (16, N_LABELS)]  # (Cin, Cout) per conv

# bf16 operands + f32 accumulation on the MXU (set to jnp.float32 to disable).
_MATMUL_DTYPE = jnp.bfloat16

# Per-grid-step VMEM working-set target (safe under every chip's scoped limit).
_VMEM_WORKSET_BUDGET = 12 * 1024 * 1024

# Canonical ordering of the 8 off-centre 3x3 taps -> row in the mask table.
_TAP_OFFSETS = [(dy, dx) for dy in (-1, 0, 1) for dx in (-1, 0, 1)
                if (dy, dx) != (0, 0)]
_MASK_ROW = {off: i for i, off in enumerate(_TAP_OFFSETS)}


def _round_up(n, m):
    return ((n + m - 1) // m) * m


def _fused_parts_kernel(*refs, W, n_layers):
    """Whole PartsModel forward for a (C, Bt*HW_pad) lane block.

    Layout: channels on sublanes, flattened batch*spatial on the lane axis.
    Each 3x3 SAME conv = 9 rolled+masked taps, each fed directly to a small
    MXU matmul and accumulated in f32 (no im2col patch buffer).
    """
    x_ref, m_ref = refs[0], refs[1]
    wb_refs = refs[2:2 + 2 * n_layers]
    o_ref = refs[2 + 2 * n_layers]

    hwt = x_ref.shape[1]
    max_cin = max(wb_refs[2 * l].shape[2] for l in range(n_layers))

    # Hoist the 8 border masks once per kernel invocation (applied to every
    # tap of every layer with a plain multiply; no per-tap comparisons).
    mask_bc = {}
    for off, row in _MASK_ROW.items():
        m = m_ref[row:row + 1, :]                         # (1, HWT) f32
        mask_bc[off] = jnp.broadcast_to(m, (max_cin, hwt))

    def conv3x3(h, w_ref, b_ref, relu):
        """h: (cin, HWT) f32 -> (cout, HWT) f32, 3x3 SAME conv (+ReLU)."""
        cin = h.shape[0]
        acc = None
        for ky in range(3):
            for kx in range(3):
                dy, dx = ky - 1, kx - 1
                off = dy * W + dx
                if off == 0:
                    tap = h                               # centre tap: no roll/mask
                else:
                    tap = pltpu.roll(h, (-off) % hwt, axis=1)
                    m = mask_bc[(dy, dx)]
                    tap = tap * (m if cin == max_cin else m[:cin, :])
                t = ky * 3 + kx
                # (cout, cin) x (cin, HWT) -> (cout, HWT), f32 accumulation.
                contrib = jnp.dot(w_ref[t], tap.astype(w_ref.dtype),
                                  preferred_element_type=jnp.float32)
                acc = contrib if acc is None else acc + contrib
        acc = acc + b_ref[...]                            # (cout, 1) bcast
        return jnp.maximum(acc, 0.0) if relu else acc

    h = x_ref[...]                                        # (cin_p0, HWT) f32
    for l in range(n_layers):
        h = conv3x3(h, wb_refs[2 * l], wb_refs[2 * l + 1],
                    relu=(l < n_layers - 1))

    # Channel softmax (sublane reduction).  EUP approx reciprocal + one
    # Newton step so the probabilities sum to 1 to ~1e-6.
    mx = jnp.max(h, axis=0, keepdims=True)
    ex = jnp.exp(h - mx)
    denom = jnp.sum(ex, axis=0, keepdims=True)
    r = pl.reciprocal(denom, approx=True)
    r = r * (2.0 - denom * r)
    o_ref[...] = (ex * r).astype(o_ref.dtype)


def _prep_weight(w_hwio, cin_p, dtype):
    """(3,3,Cin,Cout) HWIO -> (9, Cout, Cin_p): one (Cout, Cin_p) weight per tap."""
    kh, kw, cin, cout = w_hwio.shape
    w = jnp.transpose(w_hwio, (0, 1, 3, 2)).reshape(kh * kw, cout, cin)
    if cin_p != cin:
        w = jnp.pad(w, ((0, 0), (0, 0), (0, cin_p - cin)))
    return w.astype(dtype)


def _border_masks(H, W, hw_pad):
    """(8, HW_pad) f32: 1.0 where the (dy,dx) tap is in-bounds, else 0.0."""
    hw = H * W
    yy = jnp.arange(hw, dtype=jnp.int32) // W
    xx = jnp.arange(hw, dtype=jnp.int32) % W
    rows = []
    for (dy, dx) in _TAP_OFFSETS:
        ok = jnp.ones((hw,), dtype=bool)
        if dy == -1:
            ok = ok & (yy >= 1)
        if dy == 1:
            ok = ok & (yy <= H - 2)
        if dx == -1:
            ok = ok & (xx >= 1)
        if dx == 1:
            ok = ok & (xx <= W - 2)
        rows.append(ok)
    m = jnp.stack(rows).astype(jnp.float32)               # (8, HW)
    if hw_pad != hw:
        m = jnp.pad(m, ((0, 0), (0, hw_pad - hw)))
    return m


def _pick_bt(B, hw_pad, budget_bytes):
    """Largest images-per-step that fits the VMEM budget and keeps >=2
    parallel grid steps whenever B >= 2 (so both v7x TCs get work)."""
    per_image = 256 * hw_pad * 4     # rough f32 working-set rows per lane col
    max_bt = max(1, budget_bytes // per_image)
    best = 1
    for bt in range(1, B + 1):
        if B % bt or bt > max_bt:
            continue
        if B >= 2 and (B // bt) < 2:
            continue
        best = bt
    return best


def parts_model_forward(params, x_nchw, *, matmul_dtype=_MATMUL_DTYPE):
    """PartsModel.forward: NCHW in -> NCHW out (softmaxed label maps)."""
    B, C, H, W = x_nchw.shape
    HW = H * W
    hw_pad = _round_up(HW, 128)           # lane-dense stores
    n_labels = params[-1][0].shape[-1]
    n_layers = len(params)
    cin_p0 = _round_up(C, 8)

    bt = _pick_bt(B, hw_pad, _VMEM_WORKSET_BUDGET)
    hwt = bt * hw_pad
    n_steps = B // bt

    # (B,C,H,W) -> channels on sublanes, flattened batch*spatial on lanes.
    x = x_nchw.reshape(B, C, HW).astype(jnp.float32)
    if hw_pad != HW:
        x = jnp.pad(x, ((0, 0), (0, 0), (0, hw_pad - HW)))
    x = jnp.transpose(x, (1, 0, 2)).reshape(C, B * hw_pad)
    if cin_p0 != C:
        x = jnp.pad(x, ((0, cin_p0 - C), (0, 0)))          # pad channels once

    masks = jnp.tile(_border_masks(H, W, hw_pad), (1, bt))  # (8, HWT)

    flat = []
    for (wgt, bias) in params:
        cin = wgt.shape[2]
        flat.append(_prep_weight(wgt, _round_up(cin, 8), matmul_dtype))
        flat.append(bias.reshape(-1, 1).astype(jnp.float32))

    def _const_spec(a):
        zeros = (0,) * a.ndim
        return pl.BlockSpec(a.shape, lambda g, _z=zeros: _z)

    # Explicit VMEM budget: activations/taps/acc + double-buffered in/out +
    # broadcast masks (~256 f32 rows per lane column) + constants, 2x headroom,
    # capped safely below v7x's 64 MiB physical VMEM.
    est_bytes = 256 * hwt * 4 + 8 * hwt * 4
    est_bytes += sum(int(a.size) * a.dtype.itemsize for a in flat)
    vmem_limit = int(min(48 * 1024 * 1024, max(2 * est_bytes, 16 * 1024 * 1024)))

    out = pl.pallas_call(
        functools.partial(_fused_parts_kernel, W=W, n_layers=n_layers),
        out_shape=jax.ShapeDtypeStruct((n_labels, B * hw_pad), jnp.float32),
        grid=(n_steps,),
        in_specs=[pl.BlockSpec((cin_p0, hwt), lambda g: (0, g)),
                  _const_spec(masks)] + [_const_spec(a) for a in flat],
        out_specs=pl.BlockSpec((n_labels, hwt), lambda g: (0, g)),
        compiler_params=pltpu.CompilerParams(
            dimension_semantics=("parallel",),    # batch split across v7x's 2 TCs
            vmem_limit_bytes=vmem_limit),
    )(x, masks, *flat)

    out = out.reshape(n_labels, B, hw_pad)[:, :, :HW]
    return jnp.transpose(out, (1, 0, 2)).reshape(B, n_labels, H, W)


# ---------------------------------------------------------------------------
# Parameter construction (PyTorch-Conv2d-default-style uniform init).
# ---------------------------------------------------------------------------
def init_params(key):
    params = []
    for i, (cin, cout) in enumerate(_LAYER_DEFS):
        kw_, kb_ = jax.random.split(jax.random.fold_in(key, i))
        bound = 1.0 / (cin * 9) ** 0.5
        w = jax.random.uniform(kw_, (3, 3, cin, cout), jnp.float32,
                               minval=-bound, maxval=bound)
        b = jax.random.uniform(kb_, (cout,), jnp.float32,
                               minval=-bound, maxval=bound)
        params.append((w, b))
    return params


# Pure-JAX reference of the same network (for correctness validation).
def _reference_forward(params, x_nchw):
    h = x_nchw
    n = len(params)
    for i, (w, b) in enumerate(params):
        h = lax.conv_general_dilated(
            h, w, window_strides=(1, 1), padding="SAME",
            dimension_numbers=("NCHW", "HWIO", "NCHW"))
        h = h + b.reshape(1, -1, 1, 1)
        if i < n - 1:
            h = jnp.maximum(h, 0.0)
    return jax.nn.softmax(h, axis=1)


if __name__ == "__main__":
    key = jax.random.PRNGKey(0)
    pkey, xkey = jax.random.split(key)

    params = init_params(pkey)
    x = jax.random.normal(xkey, (2, 3, 16, 16), jnp.float32)   # NCHW input

    fwd = jax.jit(parts_model_forward)
    out = jax.block_until_ready(fwd(params, x))

    assert out.shape == (2, N_LABELS, 16, 16), out.shape
    # Channel softmax sanity (Newton-refined reciprocal -> ~1e-6 off 1.0).
    sums = jnp.sum(out, axis=1)
    assert bool(jnp.all(jnp.abs(sums - 1.0) < 1e-2))
    # Numerical check against the pure-JAX f32 reference (bf16 MXU operands).
    ref = _reference_forward(params, x)
    max_err = float(jnp.max(jnp.abs(out - ref)))
    assert max_err < 2e-2, max_err

    print("KERNEL_OK")
</pallas_src>

<mosaic_0001>
module attributes {stable_mosaic.version = 11 : i64} {
  func.func @_fused_parts_kernel(%arg0: i32, %arg1: memref<8x256xf32, #tpu.memory_space<vmem>>, %arg2: memref<8x256xf32, #tpu.memory_space<vmem>>, %arg3: memref<9x8x8xbf16, #tpu.memory_space<vmem>>, %arg4: memref<8x1xf32, #tpu.memory_space<vmem>>, %arg5: memref<9x16x8xbf16, #tpu.memory_space<vmem>>, %arg6: memref<16x1xf32, #tpu.memory_space<vmem>>, %arg7: memref<9x16x16xbf16, #tpu.memory_space<vmem>>, %arg8: memref<16x1xf32, #tpu.memory_space<vmem>>, %arg9: memref<9x11x16xbf16, #tpu.memory_space<vmem>>, %arg10: memref<11x1xf32, #tpu.memory_space<vmem>>, %arg11: memref<11x256xf32, #tpu.memory_space<vmem>>) attributes {dimension_semantics = [#tpu.dimension_semantics<parallel>], iteration_bounds = array<i64: 2>, scalar_prefetch = 0 : i64, scratch_operands = 0 : i64, tpu.core_type = #tpu.core_type<tc>, window_params = [{transform_indices = @transform_0, window_bounds = array<i64: 8, 256>}, {pipeline_mode = #tpu.pipeline_mode<synchronous>, transform_indices = @transform_1, window_bounds = array<i64: 8, 256>}, {pipeline_mode = #tpu.pipeline_mode<synchronous>, transform_indices = @transform_2, window_bounds = array<i64: 9, 8, 8>}, {pipeline_mode = #tpu.pipeline_mode<synchronous>, transform_indices = @transform_3, window_bounds = array<i64: 8, 1>}, {pipeline_mode = #tpu.pipeline_mode<synchronous>, transform_indices = @transform_4, window_bounds = array<i64: 9, 16, 8>}, {pipeline_mode = #tpu.pipeline_mode<synchronous>, transform_indices = @transform_5, window_bounds = array<i64: 16, 1>}, {pipeline_mode = #tpu.pipeline_mode<synchronous>, transform_indices = @transform_6, window_bounds = array<i64: 9, 16, 16>}, {pipeline_mode = #tpu.pipeline_mode<synchronous>, transform_indices = @transform_7, window_bounds = array<i64: 16, 1>}, {pipeline_mode = #tpu.pipeline_mode<synchronous>, transform_indices = @transform_8, window_bounds = array<i64: 9, 11, 16>}, {pipeline_mode = #tpu.pipeline_mode<synchronous>, transform_indices = @transform_9, window_bounds = array<i64: 11, 1>}, {transform_indices = @transform_10, window_bounds = array<i64: 11, 256>}]} {
    %c0 = arith.constant 0 : index
    %c0_0 = arith.constant 0 : index
    %0 = vector.load %arg2[%c0, %c0_0] : memref<8x256xf32, #tpu.memory_space<vmem>>, vector<1x256xf32>
    %1 = vector.shape_cast %0 : vector<1x256xf32> to vector<1x256xf32>
    %2 = vector.broadcast %1 : vector<1x256xf32> to vector<16x256xf32>
    %c1 = arith.constant 1 : index
    %c0_1 = arith.constant 0 : index
    %3 = vector.load %arg2[%c1, %c0_1] : memref<8x256xf32, #tpu.memory_space<vmem>>, vector<1x256xf32>
    %4 = vector.shape_cast %3 : vector<1x256xf32> to vector<1x256xf32>
    %5 = vector.broadcast %4 : vector<1x256xf32> to vector<16x256xf32>
    %c2 = arith.constant 2 : index
    %c0_2 = arith.constant 0 : index
    %6 = vector.load %arg2[%c2, %c0_2] : memref<8x256xf32, #tpu.memory_space<vmem>>, vector<1x256xf32>
    %7 = vector.shape_cast %6 : vector<1x256xf32> to vector<1x256xf32>
    %8 = vector.broadcast %7 : vector<1x256xf32> to vector<16x256xf32>
    %c3 = arith.constant 3 : index
    %c0_3 = arith.constant 0 : index
    %9 = vector.load %arg2[%c3, %c0_3] : memref<8x256xf32, #tpu.memory_space<vmem>>, vector<1x256xf32>
    %10 = vector.shape_cast %9 : vector<1x256xf32> to vector<1x256xf32>
    %11 = vector.broadcast %10 : vector<1x256xf32> to vector<16x256xf32>
    %c4 = arith.constant 4 : index
    %c0_4 = arith.constant 0 : index
    %12 = vector.load %arg2[%c4, %c0_4] : memref<8x256xf32, #tpu.memory_space<vmem>>, vector<1x256xf32>
    %13 = vector.shape_cast %12 : vector<1x256xf32> to vector<1x256xf32>
    %14 = vector.broadcast %13 : vector<1x256xf32> to vector<16x256xf32>
    %c5 = arith.constant 5 : index
    %c0_5 = arith.constant 0 : index
    %15 = vector.load %arg2[%c5, %c0_5] : memref<8x256xf32, #tpu.memory_space<vmem>>, vector<1x256xf32>
    %16 = vector.shape_cast %15 : vector<1x256xf32> to vector<1x256xf32>
    %17 = vector.broadcast %16 : vector<1x256xf32> to vector<16x256xf32>
    %c6 = arith.constant 6 : index
    %c0_6 = arith.constant 0 : index
    %18 = vector.load %arg2[%c6, %c0_6] : memref<8x256xf32, #tpu.memory_space<vmem>>, vector<1x256xf32>
    %19 = vector.shape_cast %18 : vector<1x256xf32> to vector<1x256xf32>
    %20 = vector.broadcast %19 : vector<1x256xf32> to vector<16x256xf32>
    %c7 = arith.constant 7 : index
    %c0_7 = arith.constant 0 : index
    %21 = vector.load %arg2[%c7, %c0_7] : memref<8x256xf32, #tpu.memory_space<vmem>>, vector<1x256xf32>
    %22 = vector.shape_cast %21 : vector<1x256xf32> to vector<1x256xf32>
    %23 = vector.broadcast %22 : vector<1x256xf32> to vector<16x256xf32>
    %c0_8 = arith.constant 0 : index
    %c0_9 = arith.constant 0 : index
    %24 = vector.load %arg1[%c0_8, %c0_9] : memref<8x256xf32, #tpu.memory_space<vmem>>, vector<8x256xf32>
    %c17_i32 = arith.constant 17 : i32
    %25 = tpu.dynamic_rotate %24 by %c17_i32 dim 1 : vector<8x256xf32>, i32 -> vector<8x256xf32>
    %26 = vector.extract_strided_slice %2 {offsets = [0, 0], sizes = [8, 256], strides = [1, 1]} : vector<16x256xf32> to vector<8x256xf32>
    %27 = arith.mulf %25, %26 : vector<8x256xf32>
    %c0_10 = arith.constant 0 : index
    %c0_11 = arith.constant 0 : index
    %c0_12 = arith.constant 0 : index
    %28 = vector.load %arg3[%c0_10, %c0_11, %c0_12] : memref<9x8x8xbf16, #tpu.memory_space<vmem>>, vector<1x8x8xbf16>
    %29 = vector.shape_cast %28 : vector<1x8x8xbf16> to vector<8x8xbf16>
    %30 = arith.truncf %27 : vector<8x256xf32> to vector<8x256xbf16>
    %cst = arith.constant dense<0.000000e+00> : vector<8x256xf32>
    %31 = tpu.matmul %29, %30, %cst {dimension_numbers = #tpu.dot_dimension_numbers<[1], [0], [0], [1], [0, 0, 1, 1], [], []>} : vector<8x8xbf16>, vector<8x256xbf16>, vector<8x256xf32> -> vector<8x256xf32>
    %c16_i32 = arith.constant 16 : i32
    %32 = tpu.dynamic_rotate %24 by %c16_i32 dim 1 : vector<8x256xf32>, i32 -> vector<8x256xf32>
    %33 = vector.extract_strided_slice %5 {offsets = [0, 0], sizes = [8, 256], strides = [1, 1]} : vector<16x256xf32> to vector<8x256xf32>
    %34 = arith.mulf %32, %33 : vector<8x256xf32>
    %c1_13 = arith.constant 1 : index
    %c0_14 = arith.constant 0 : index
    %c0_15 = arith.constant 0 : index
    %35 = vector.load %arg3[%c1_13, %c0_14, %c0_15] : memref<9x8x8xbf16, #tpu.memory_space<vmem>>, vector<1x8x8xbf16>
    %36 = vector.shape_cast %35 : vector<1x8x8xbf16> to vector<8x8xbf16>
    %37 = arith.truncf %34 : vector<8x256xf32> to vector<8x256xbf16>
    %cst_16 = arith.constant dense<0.000000e+00> : vector<8x256xf32>
    %38 = tpu.matmul %36, %37, %cst_16 {dimension_numbers = #tpu.dot_dimension_numbers<[1], [0], [0], [1], [0, 0, 1, 1], [], []>} : vector<8x8xbf16>, vector<8x256xbf16>, vector<8x256xf32> -> vector<8x256xf32>
    %39 = arith.addf %31, %38 : vector<8x256xf32>
    %c15_i32 = arith.constant 15 : i32
    %40 = tpu.dynamic_rotate %24 by %c15_i32 dim 1 : vector<8x256xf32>, i32 -> vector<8x256xf32>
    %41 = vector.extract_strided_slice %8 {offsets = [0, 0], sizes = [8, 256], strides = [1, 1]} : vector<16x256xf32> to vector<8x256xf32>
    %42 = arith.mulf %40, %41 : vector<8x256xf32>
    %c2_17 = arith.constant 2 : index
    %c0_18 = arith.constant 0 : index
    %c0_19 = arith.constant 0 : index
    %43 = vector.load %arg3[%c2_17, %c0_18, %c0_19] : memref<9x8x8xbf16, #tpu.memory_space<vmem>>, vector<1x8x8xbf16>
    %44 = vector.shape_cast %43 : vector<1x8x8xbf16> to vector<8x8xbf16>
    %45 = arith.truncf %42 : vector<8x256xf32> to vector<8x256xbf16>
    %cst_20 = arith.constant dense<0.000000e+00> : vector<8x256xf32>
    %46 = tpu.matmul %44, %45, %cst_20 {dimension_numbers = #tpu.dot_dimension_numbers<[1], [0], [0], [1], [0, 0, 1, 1], [], []>} : vector<8x8xbf16>, vector<8x256xbf16>, vector<8x256xf32> -> vector<8x256xf32>
    %47 = arith.addf %39, %46 : vector<8x256xf32>
    %c1_i32 = arith.constant 1 : i32
    %48 = tpu.dynamic_rotate %24 by %c1_i32 dim 1 : vector<8x256xf32>, i32 -> vector<8x256xf32>
    %49 = vector.extract_strided_slice %11 {offsets = [0, 0], sizes = [8, 256], strides = [1, 1]} : vector<16x256xf32> to vector<8x256xf32>
    %50 = arith.mulf %48, %49 : vector<8x256xf32>
    %c3_21 = arith.constant 3 : index
    %c0_22 = arith.constant 0 : index
    %c0_23 = arith.constant 0 : index
    %51 = vector.load %arg3[%c3_21, %c0_22, %c0_23] : memref<9x8x8xbf16, #tpu.memory_space<vmem>>, vector<1x8x8xbf16>
    %52 = vector.shape_cast %51 : vector<1x8x8xbf16> to vector<8x8xbf16>
    %53 = arith.truncf %50 : vector<8x256xf32> to vector<8x256xbf16>
    %cst_24 = arith.constant dense<0.000000e+00> : vector<8x256xf32>
    %54 = tpu.matmul %52, %53, %cst_24 {dimension_numbers = #tpu.dot_dimension_numbers<[1], [0], [0], [1], [0, 0, 1, 1], [], []>} : vector<8x8xbf16>, vector<8x256xbf16>, vector<8x256xf32> -> vector<8x256xf32>
    %55 = arith.addf %47, %54 : vector<8x256xf32>
    %c4_25 = arith.constant 4 : index
    %c0_26 = arith.constant 0 : index
    %c0_27 = arith.constant 0 : index
    %56 = vector.load %arg3[%c4_25, %c0_26, %c0_27] : memref<9x8x8xbf16, #tpu.memory_space<vmem>>, vector<1x8x8xbf16>
    %57 = vector.shape_cast %56 : vector<1x8x8xbf16> to vector<8x8xbf16>
    %58 = arith.truncf %24 : vector<8x256xf32> to vector<8x256xbf16>
    %cst_28 = arith.constant dense<0.000000e+00> : vector<8x256xf32>
    %59 = tpu.matmul %57, %58, %cst_28 {dimension_numbers = #tpu.dot_dimension_numbers<[1], [0], [0], [1], [0, 0, 1, 1], [], []>} : vector<8x8xbf16>, vector<8x256xbf16>, vector<8x256xf32> -> vector<8x256xf32>
    %60 = arith.addf %55, %59 : vector<8x256xf32>
    %c255_i32 = arith.constant 255 : i32
    %61 = tpu.dynamic_rotate %24 by %c255_i32 dim 1 : vector<8x256xf32>, i32 -> vector<8x256xf32>
    %62 = vector.extract_strided_slice %14 {offsets = [0, 0], sizes = [8, 256], strides = [1, 1]} : vector<16x256xf32> to vector<8x256xf32>
    %63 = arith.mulf %61, %62 : vector<8x256xf32>
    %c5_29 = arith.constant 5 : index
    %c0_30 = arith.constant 0 : index
    %c0_31 = arith.constant 0 : index
    %64 = vector.load %arg3[%c5_29, %c0_30, %c0_31] : memref<9x8x8xbf16, #tpu.memory_space<vmem>>, vector<1x8x8xbf16>
    %65 = vector.shape_cast %64 : vector<1x8x8xbf16> to vector<8x8xbf16>
    %66 = arith.truncf %63 : vector<8x256xf32> to vector<8x256xbf16>
    %cst_32 = arith.constant dense<0.000000e+00> : vector<8x256xf32>
    %67 = tpu.matmul %65, %66, %cst_32 {dimension_numbers = #tpu.dot_dimension_numbers<[1], [0], [0], [1], [0, 0, 1, 1], [], []>} : vector<8x8xbf16>, vector<8x256xbf16>, vector<8x256xf32> -> vector<8x256xf32>
    %68 = arith.addf %60, %67 : vector<8x256xf32>
    %c241_i32 = arith.constant 241 : i32
    %69 = tpu.dynamic_rotate %24 by %c241_i32 dim 1 : vector<8x256xf32>, i32 -> vector<8x256xf32>
    %70 = vector.extract_strided_slice %17 {offsets = [0, 0], sizes = [8, 256], strides = [1, 1]} : vector<16x256xf32> to vector<8x256xf32>
    %71 = arith.mulf %69, %70 : vector<8x256xf32>
    %c6_33 = arith.constant 6 : index
    %c0_34 = arith.constant 0 : index
    %c0_35 = arith.constant 0 : index
    %72 = vector.load %arg3[%c6_33, %c0_34, %c0_35] : memref<9x8x8xbf16, #tpu.memory_space<vmem>>, vector<1x8x8xbf16>
    %73 = vector.shape_cast %72 : vector<1x8x8xbf16> to vector<8x8xbf16>
    %74 = arith.truncf %71 : vector<8x256xf32> to vector<8x256xbf16>
    %cst_36 = arith.constant dense<0.000000e+00> : vector<8x256xf32>
    %75 = tpu.matmul %73, %74, %cst_36 {dimension_numbers = #tpu.dot_dimension_numbers<[1], [0], [0], [1], [0, 0, 1, 1], [], []>} : vector<8x8xbf16>, vector<8x256xbf16>, vector<8x256xf32> -> vector<8x256xf32>
    %76 = arith.addf %68, %75 : vector<8x256xf32>
    %c240_i32 = arith.constant 240 : i32
    %77 = tpu.dynamic_rotate %24 by %c240_i32 dim 1 : vector<8x256xf32>, i32 -> vector<8x256xf32>
    %78 = vector.extract_strided_slice %20 {offsets = [0, 0], sizes = [8, 256], strides = [1, 1]} : vector<16x256xf32> to vector<8x256xf32>
    %79 = arith.mulf %77, %78 : vector<8x256xf32>
    %c7_37 = arith.constant 7 : index
    %c0_38 = arith.constant 0 : index
    %c0_39 = arith.constant 0 : index
    %80 = vector.load %arg3[%c7_37, %c0_38, %c0_39] : memref<9x8x8xbf16, #tpu.memory_space<vmem>>, vector<1x8x8xbf16>
    %81 = vector.shape_cast %80 : vector<1x8x8xbf16> to vector<8x8xbf16>
    %82 = arith.truncf %79 : vector<8x256xf32> to vector<8x256xbf16>
    %cst_40 = arith.constant dense<0.000000e+00> : vector<8x256xf32>
    %83 = tpu.matmul %81, %82, %cst_40 {dimension_numbers = #tpu.dot_dimension_numbers<[1], [0], [0], [1], [0, 0, 1, 1], [], []>} : vector<8x8xbf16>, vector<8x256xbf16>, vector<8x256xf32> -> vector<8x256xf32>
    %84 = arith.addf %76, %83 : vector<8x256xf32>
    %c239_i32 = arith.constant 239 : i32
    %85 = tpu.dynamic_rotate %24 by %c239_i32 dim 1 : vector<8x256xf32>, i32 -> vector<8x256xf32>
    %86 = vector.extract_strided_slice %23 {offsets = [0, 0], sizes = [8, 256], strides = [1, 1]} : vector<16x256xf32> to vector<8x256xf32>
    %87 = arith.mulf %85, %86 : vector<8x256xf32>
    %c8 = arith.constant 8 : index
    %c0_41 = arith.constant 0 : index
    %c0_42 = arith.constant 0 : index
    %88 = vector.load %arg3[%c8, %c0_41, %c0_42] : memref<9x8x8xbf16, #tpu.memory_space<vmem>>, vector<1x8x8xbf16>
    %89 = vector.shape_cast %88 : vector<1x8x8xbf16> to vector<8x8xbf16>
    %90 = arith.truncf %87 : vector<8x256xf32> to vector<8x256xbf16>
    %cst_43 = arith.constant dense<0.000000e+00> : vector<8x256xf32>
    %91 = tpu.matmul %89, %90, %cst_43 {dimension_numbers = #tpu.dot_dimension_numbers<[1], [0], [0], [1], [0, 0, 1, 1], [], []>} : vector<8x8xbf16>, vector<8x256xbf16>, vector<8x256xf32> -> vector<8x256xf32>
    %92 = arith.addf %84, %91 : vector<8x256xf32>
    %c0_44 = arith.constant 0 : index
    %c0_45 = arith.constant 0 : index
    %93 = vector.load %arg4[%c0_44, %c0_45] : memref<8x1xf32, #tpu.memory_space<vmem>>, vector<8x1xf32>
    %94 = vector.broadcast %93 : vector<8x1xf32> to vector<8x256xf32>
    %95 = arith.addf %92, %94 : vector<8x256xf32>
    %cst_46 = arith.constant 0.000000e+00 : f32
    %96 = vector.broadcast %cst_46 : f32 to vector<8x256xf32>
    %97 = arith.maximumf %95, %96 : vector<8x256xf32>
    %c17_i32_47 = arith.constant 17 : i32
    %98 = tpu.dynamic_rotate %97 by %c17_i32_47 dim 1 : vector<8x256xf32>, i32 -> vector<8x256xf32>
    %99 = vector.extract_strided_slice %2 {offsets = [0, 0], sizes = [8, 256], strides = [1, 1]} : vector<16x256xf32> to vector<8x256xf32>
    %100 = arith.mulf %98, %99 : vector<8x256xf32>
    %c0_48 = arith.constant 0 : index
    %c0_49 = arith.constant 0 : index
    %c0_50 = arith.constant 0 : index
    %101 = vector.load %arg5[%c0_48, %c0_49, %c0_50] : memref<9x16x8xbf16, #tpu.memory_space<vmem>>, vector<1x16x8xbf16>
    %102 = vector.shape_cast %101 : vector<1x16x8xbf16> to vector<16x8xbf16>
    %103 = arith.truncf %100 : vector<8x256xf32> to vector<8x256xbf16>
    %cst_51 = arith.constant dense<0.000000e+00> : vector<16x256xf32>
    %104 = tpu.matmul %102, %103, %cst_51 {dimension_numbers = #tpu.dot_dimension_numbers<[1], [0], [0], [1], [0, 0, 1, 1], [], []>} : vector<16x8xbf16>, vector<8x256xbf16>, vector<16x256xf32> -> vector<16x256xf32>
    %c16_i32_52 = arith.constant 16 : i32
    %105 = tpu.dynamic_rotate %97 by %c16_i32_52 dim 1 : vector<8x256xf32>, i32 -> vector<8x256xf32>
    %106 = vector.extract_strided_slice %5 {offsets = [0, 0], sizes = [8, 256], strides = [1, 1]} : vector<16x256xf32> to vector<8x256xf32>
    %107 = arith.mulf %105, %106 : vector<8x256xf32>
    %c1_53 = arith.constant 1 : index
    %c0_54 = arith.constant 0 : index
    %c0_55 = arith.constant 0 : index
    %108 = vector.load %arg5[%c1_53, %c0_54, %c0_55] : memref<9x16x8xbf16, #tpu.memory_space<vmem>>, vector<1x16x8xbf16>
    %109 = vector.shape_cast %108 : vector<1x16x8xbf16> to vector<16x8xbf16>
    %110 = arith.truncf %107 : vector<8x256xf32> to vector<8x256xbf16>
    %cst_56 = arith.constant dense<0.000000e+00> : vector<16x256xf32>
    %111 = tpu.matmul %109, %110, %cst_56 {dimension_numbers = #tpu.dot_dimension_numbers<[1], [0], [0], [1], [0, 0, 1, 1], [], []>} : vector<16x8xbf16>, vector<8x256xbf16>, vector<16x256xf32> -> vector<16x256xf32>
    %112 = arith.addf %104, %111 : vector<16x256xf32>
    %c15_i32_57 = arith.constant 15 : i32
    %113 = tpu.dynamic_rotate %97 by %c15_i32_57 dim 1 : vector<8x256xf32>, i32 -> vector<8x256xf32>
    %114 = vector.extract_strided_slice %8 {offsets = [0, 0], sizes = [8, 256], strides = [1, 1]} : vector<16x256xf32> to vector<8x256xf32>
    %115 = arith.mulf %113, %114 : vector<8x256xf32>
    %c2_58 = arith.constant 2 : index
    %c0_59 = arith.constant 0 : index
    %c0_60 = arith.constant 0 : index
    %116 = vector.load %arg5[%c2_58, %c0_59, %c0_60] : memref<9x16x8xbf16, #tpu.memory_space<vmem>>, vector<1x16x8xbf16>
    %117 = vector.shape_cast %116 : vector<1x16x8xbf16> to vector<16x8xbf16>
    %118 = arith.truncf %115 : vector<8x256xf32> to vector<8x256xbf16>
    %cst_61 = arith.constant dense<0.000000e+00> : vector<16x256xf32>
    %119 = tpu.matmul %117, %118, %cst_61 {dimension_numbers = #tpu.dot_dimension_numbers<[1], [0], [0], [1], [0, 0, 1, 1], [], []>} : vector<16x8xbf16>, vector<8x256xbf16>, vector<16x256xf32> -> vector<16x256xf32>
    %120 = arith.addf %112, %119 : vector<16x256xf32>
    %c1_i32_62 = arith.constant 1 : i32
    %121 = tpu.dynamic_rotate %97 by %c1_i32_62 dim 1 : vector<8x256xf32>, i32 -> vector<8x256xf32>
    %122 = vector.extract_strided_slice %11 {offsets = [0, 0], sizes = [8, 256], strides = [1, 1]} : vector<16x256xf32> to vector<8x256xf32>
    %123 = arith.mulf %121, %122 : vector<8x256xf32>
    %c3_63 = arith.constant 3 : index
    %c0_64 = arith.constant 0 : index
    %c0_65 = arith.constant 0 : index
    %124 = vector.load %arg5[%c3_63, %c0_64, %c0_65] : memref<9x16x8xbf16, #tpu.memory_space<vmem>>, vector<1x16x8xbf16>
    %125 = vector.shape_cast %124 : vector<1x16x8xbf16> to vector<16x8xbf16>
    %126 = arith.truncf %123 : vector<8x256xf32> to vector<8x256xbf16>
    %cst_66 = arith.constant dense<0.000000e+00> : vector<16x256xf32>
    %127 = tpu.matmul %125, %126, %cst_66 {dimension_numbers = #tpu.dot_dimension_numbers<[1], [0], [0], [1], [0, 0, 1, 1], [], []>} : vector<16x8xbf16>, vector<8x256xbf16>, vector<16x256xf32> -> vector<16x256xf32>
    %128 = arith.addf %120, %127 : vector<16x256xf32>
    %c4_67 = arith.constant 4 : index
    %c0_68 = arith.constant 0 : index
    %c0_69 = arith.constant 0 : index
    %129 = vector.load %arg5[%c4_67, %c0_68, %c0_69] : memref<9x16x8xbf16, #tpu.memory_space<vmem>>, vector<1x16x8xbf16>
    %130 = vector.shape_cast %129 : vector<1x16x8xbf16> to vector<16x8xbf16>
    %131 = arith.truncf %97 : vector<8x256xf32> to vector<8x256xbf16>
    %cst_70 = arith.constant dense<0.000000e+00> : vector<16x256xf32>
    %132 = tpu.matmul %130, %131, %cst_70 {dimension_numbers = #tpu.dot_dimension_numbers<[1], [0], [0], [1], [0, 0, 1, 1], [], []>} : vector<16x8xbf16>, vector<8x256xbf16>, vector<16x256xf32> -> vector<16x256xf32>
    %133 = arith.addf %128, %132 : vector<16x256xf32>
    %c255_i32_71 = arith.constant 255 : i32
    %134 = tpu.dynamic_rotate %97 by %c255_i32_71 dim 1 : vector<8x256xf32>, i32 -> vector<8x256xf32>
    %135 = vector.extract_strided_slice %14 {offsets = [0, 0], sizes = [8, 256], strides = [1, 1]} : vector<16x256xf32> to vector<8x256xf32>
    %136 = arith.mulf %134, %135 : vector<8x256xf32>
    %c5_72 = arith.constant 5 : index
    %c0_73 = arith.constant 0 : index
    %c0_74 = arith.constant 0 : index
    %137 = vector.load %arg5[%c5_72, %c0_73, %c0_74] : memref<9x16x8xbf16, #tpu.memory_space<vmem>>, vector<1x16x8xbf16>
    %138 = vector.shape_cast %137 : vector<1x16x8xbf16> to vector<16x8xbf16>
    %139 = arith.truncf %136 : vector<8x256xf32> to vector<8x256xbf16>
    %cst_75 = arith.constant dense<0.000000e+00> : vector<16x256xf32>
    %140 = tpu.matmul %138, %139, %cst_75 {dimension_numbers = #tpu.dot_dimension_numbers<[1], [0], [0], [1], [0, 0, 1, 1], [], []>} : vector<16x8xbf16>, vector<8x256xbf16>, vector<16x256xf32> -> vector<16x256xf32>
    %141 = arith.addf %133, %140 : vector<16x256xf32>
    %c241_i32_76 = arith.constant 241 : i32
    %142 = tpu.dynamic_rotate %97 by %c241_i32_76 dim 1 : vector<8x256xf32>, i32 -> vector<8x256xf32>
    %143 = vector.extract_strided_slice %17 {offsets = [0, 0], sizes = [8, 256], strides = [1, 1]} : vector<16x256xf32> to vector<8x256xf32>
    %144 = arith.mulf %142, %143 : vector<8x256xf32>
    %c6_77 = arith.constant 6 : index
    %c0_78 = arith.constant 0 : index
    %c0_79 = arith.constant 0 : index
    %145 = vector.load %arg5[%c6_77, %c0_78, %c0_79] : memref<9x16x8xbf16, #tpu.memory_space<vmem>>, vector<1x16x8xbf16>
    %146 = vector.shape_cast %145 : vector<1x16x8xbf16> to vector<16x8xbf16>
    %147 = arith.truncf %144 : vector<8x256xf32> to vector<8x256xbf16>
    %cst_80 = arith.constant dense<0.000000e+00> : vector<16x256xf32>
    %148 = tpu.matmul %146, %147, %cst_80 {dimension_numbers = #tpu.dot_dimension_numbers<[1], [0], [0], [1], [0, 0, 1, 1], [], []>} : vector<16x8xbf16>, vector<8x256xbf16>, vector<16x256xf32> -> vector<16x256xf32>
    %149 = arith.addf %141, %148 : vector<16x256xf32>
    %c240_i32_81 = arith.constant 240 : i32
    %150 = tpu.dynamic_rotate %97 by %c240_i32_81 dim 1 : vector<8x256xf32>, i32 -> vector<8x256xf32>
    %151 = vector.extract_strided_slice %20 {offsets = [0, 0], sizes = [8, 256], strides = [1, 1]} : vector<16x256xf32> to vector<8x256xf32>
    %152 = arith.mulf %150, %151 : vector<8x256xf32>
    %c7_82 = arith.constant 7 : index
    %c0_83 = arith.constant 0 : index
    %c0_84 = arith.constant 0 : index
    %153 = vector.load %arg5[%c7_82, %c0_83, %c0_84] : memref<9x16x8xbf16, #tpu.memory_space<vmem>>, vector<1x16x8xbf16>
    %154 = vector.shape_cast %153 : vector<1x16x8xbf16> to vector<16x8xbf16>
    %155 = arith.truncf %152 : vector<8x256xf32> to vector<8x256xbf16>
    %cst_85 = arith.constant dense<0.000000e+00> : vector<16x256xf32>
    %156 = tpu.matmul %154, %155, %cst_85 {dimension_numbers = #tpu.dot_dimension_numbers<[1], [0], [0], [1], [0, 0, 1, 1], [], []>} : vector<16x8xbf16>, vector<8x256xbf16>, vector<16x256xf32> -> vector<16x256xf32>
    %157 = arith.addf %149, %156 : vector<16x256xf32>
    %c239_i32_86 = arith.constant 239 : i32
    %158 = tpu.dynamic_rotate %97 by %c239_i32_86 dim 1 : vector<8x256xf32>, i32 -> vector<8x256xf32>
    %159 = vector.extract_strided_slice %23 {offsets = [0, 0], sizes = [8, 256], strides = [1, 1]} : vector<16x256xf32> to vector<8x256xf32>
    %160 = arith.mulf %158, %159 : vector<8x256xf32>
    %c8_87 = arith.constant 8 : index
    %c0_88 = arith.constant 0 : index
    %c0_89 = arith.constant 0 : index
    %161 = vector.load %arg5[%c8_87, %c0_88, %c0_89] : memref<9x16x8xbf16, #tpu.memory_space<vmem>>, vector<1x16x8xbf16>
    %162 = vector.shape_cast %161 : vector<1x16x8xbf16> to vector<16x8xbf16>
    %163 = arith.truncf %160 : vector<8x256xf32> to vector<8x256xbf16>
    %cst_90 = arith.constant dense<0.000000e+00> : vector<16x256xf32>
    %164 = tpu.matmul %162, %163, %cst_90 {dimension_numbers = #tpu.dot_dimension_numbers<[1], [0], [0], [1], [0, 0, 1, 1], [], []>} : vector<16x8xbf16>, vector<8x256xbf16>, vector<16x256xf32> -> vector<16x256xf32>
    %165 = arith.addf %157, %164 : vector<16x256xf32>
    %c0_91 = arith.constant 0 : index
    %c0_92 = arith.constant 0 : index
    %166 = vector.load %arg6[%c0_91, %c0_92] : memref<16x1xf32, #tpu.memory_space<vmem>>, vector<16x1xf32>
    %167 = vector.broadcast %166 : vector<16x1xf32> to vector<16x256xf32>
    %168 = arith.addf %165, %167 : vector<16x256xf32>
    %cst_93 = arith.constant 0.000000e+00 : f32
    %169 = vector.broadcast %cst_93 : f32 to vector<16x256xf32>
    %170 = arith.maximumf %168, %169 : vector<16x256xf32>
    %c17_i32_94 = arith.constant 17 : i32
    %171 = tpu.dynamic_rotate %170 by %c17_i32_94 dim 1 : vector<16x256xf32>, i32 -> vector<16x256xf32>
    %172 = arith.mulf %171, %2 : vector<16x256xf32>
    %c0_95 = arith.constant 0 : index
    %c0_96 = arith.constant 0 : index
    %c0_97 = arith.constant 0 : index
    %173 = vector.load %arg7[%c0_95, %c0_96, %c0_97] : memref<9x16x16xbf16, #tpu.memory_space<vmem>>, vector<1x16x16xbf16>
    %174 = vector.shape_cast %173 : vector<1x16x16xbf16> to vector<16x16xbf16>
    %175 = arith.truncf %172 : vector<16x256xf32> to vector<16x256xbf16>
    %cst_98 = arith.constant dense<0.000000e+00> : vector<16x256xf32>
    %176 = tpu.matmul %174, %175, %cst_98 {dimension_numbers = #tpu.dot_dimension_numbers<[1], [0], [0], [1], [0, 0, 1, 1], [], []>} : vector<16x16xbf16>, vector<16x256xbf16>, vector<16x256xf32> -> vector<16x256xf32>
    %c16_i32_99 = arith.constant 16 : i32
    %177 = tpu.dynamic_rotate %170 by %c16_i32_99 dim 1 : vector<16x256xf32>, i32 -> vector<16x256xf32>
    %178 = arith.mulf %177, %5 : vector<16x256xf32>
    %c1_100 = arith.constant 1 : index
    %c0_101 = arith.constant 0 : index
    %c0_102 = arith.constant 0 : index
    %179 = vector.load %arg7[%c1_100, %c0_101, %c0_102] : memref<9x16x16xbf16, #tpu.memory_space<vmem>>, vector<1x16x16xbf16>
    %180 = vector.shape_cast %179 : vector<1x16x16xbf16> to vector<16x16xbf16>
    %181 = arith.truncf %178 : vector<16x256xf32> to vector<16x256xbf16>
    %cst_103 = arith.constant dense<0.000000e+00> : vector<16x256xf32>
    %182 = tpu.matmul %180, %181, %cst_103 {dimension_numbers = #tpu.dot_dimension_numbers<[1], [0], [0], [1], [0, 0, 1, 1], [], []>} : vector<16x16xbf16>, vector<16x256xbf16>, vector<16x256xf32> -> vector<16x256xf32>
    %183 = arith.addf %176, %182 : vector<16x256xf32>
    %c15_i32_104 = arith.constant 15 : i32
    %184 = tpu.dynamic_rotate %170 by %c15_i32_104 dim 1 : vector<16x256xf32>, i32 -> vector<16x256xf32>
    %185 = arith.mulf %184, %8 : vector<16x256xf32>
    %c2_105 = arith.constant 2 : index
    %c0_106 = arith.constant 0 : index
    %c0_107 = arith.constant 0 : index
    %186 = vector.load %arg7[%c2_105, %c0_106, %c0_107] : memref<9x16x16xbf16, #tpu.memory_space<vmem>>, vector<1x16x16xbf16>
    %187 = vector.shape_cast %186 : vector<1x16x16xbf16> to vector<16x16xbf16>
    %188 = arith.truncf %185 : vector<16x256xf32> to vector<16x256xbf16>
    %cst_108 = arith.constant dense<0.000000e+00> : vector<16x256xf32>
    %189 = tpu.matmul %187, %188, %cst_108 {dimension_numbers = #tpu.dot_dimension_numbers<[1], [0], [0], [1], [0, 0, 1, 1], [], []>} : vector<16x16xbf16>, vector<16x256xbf16>, vector<16x256xf32> -> vector<16x256xf32>
    %190 = arith.addf %183, %189 : vector<16x256xf32>
    %c1_i32_109 = arith.constant 1 : i32
    %191 = tpu.dynamic_rotate %170 by %c1_i32_109 dim 1 : vector<16x256xf32>, i32 -> vector<16x256xf32>
    %192 = arith.mulf %191, %11 : vector<16x256xf32>
    %c3_110 = arith.constant 3 : index
    %c0_111 = arith.constant 0 : index
    %c0_112 = arith.constant 0 : index
    %193 = vector.load %arg7[%c3_110, %c0_111, %c0_112] : memref<9x16x16xbf16, #tpu.memory_space<vmem>>, vector<1x16x16xbf16>
    %194 = vector.shape_cast %193 : vector<1x16x16xbf16> to vector<16x16xbf16>
    %195 = arith.truncf %192 : vector<16x256xf32> to vector<16x256xbf16>
    %cst_113 = arith.constant dense<0.000000e+00> : vector<16x256xf32>
    %196 = tpu.matmul %194, %195, %cst_113 {dimension_numbers = #tpu.dot_dimension_numbers<[1], [0], [0], [1], [0, 0, 1, 1], [], []>} : vector<16x16xbf16>, vector<16x256xbf16>, vector<16x256xf32> -> vector<16x256xf32>
    %197 = arith.addf %190, %196 : vector<16x256xf32>
    %c4_114 = arith.constant 4 : index
    %c0_115 = arith.constant 0 : index
    %c0_116 = arith.constant 0 : index
    %198 = vector.load %arg7[%c4_114, %c0_115, %c0_116] : memref<9x16x16xbf16, #tpu.memory_space<vmem>>, vector<1x16x16xbf16>
    %199 = vector.shape_cast %198 : vector<1x16x16xbf16> to vector<16x16xbf16>
    %200 = arith.truncf %170 : vector<16x256xf32> to vector<16x256xbf16>
    %cst_117 = arith.constant dense<0.000000e+00> : vector<16x256xf32>
    %201 = tpu.matmul %199, %200, %cst_117 {dimension_numbers = #tpu.dot_dimension_numbers<[1], [0], [0], [1], [0, 0, 1, 1], [], []>} : vector<16x16xbf16>, vector<16x256xbf16>, vector<16x256xf32> -> vector<16x256xf32>
    %202 = arith.addf %197, %201 : vector<16x256xf32>
    %c255_i32_118 = arith.constant 255 : i32
    %203 = tpu.dynamic_rotate %170 by %c255_i32_118 dim 1 : vector<16x256xf32>, i32 -> vector<16x256xf32>
    %204 = arith.mulf %203, %14 : vector<16x256xf32>
    %c5_119 = arith.constant 5 : index
    %c0_120 = arith.constant 0 : index
    %c0_121 = arith.constant 0 : index
    %205 = vector.load %arg7[%c5_119, %c0_120, %c0_121] : memref<9x16x16xbf16, #tpu.memory_space<vmem>>, vector<1x16x16xbf16>
    %206 = vector.shape_cast %205 : vector<1x16x16xbf16> to vector<16x16xbf16>
    %207 = arith.truncf %204 : vector<16x256xf32> to vector<16x256xbf16>
    %cst_122 = arith.constant dense<0.000000e+00> : vector<16x256xf32>
    %208 = tpu.matmul %206, %207, %cst_122 {dimension_numbers = #tpu.dot_dimension_numbers<[1], [0], [0], [1], [0, 0, 1, 1], [], []>} : vector<16x16xbf16>, vector<16x256xbf16>, vector<16x256xf32> -> vector<16x256xf32>
    %209 = arith.addf %202, %208 : vector<16x256xf32>
    %c241_i32_123 = arith.constant 241 : i32
    %210 = tpu.dynamic_rotate %170 by %c241_i32_123 dim 1 : vector<16x256xf32>, i32 -> vector<16x256xf32>
    %211 = arith.mulf %210, %17 : vector<16x256xf32>
    %c6_124 = arith.constant 6 : index
    %c0_125 = arith.constant 0 : index
    %c0_126 = arith.constant 0 : index
    %212 = vector.load %arg7[%c6_124, %c0_125, %c0_126] : memref<9x16x16xbf16, #tpu.memory_space<vmem>>, vector<1x16x16xbf16>
    %213 = vector.shape_cast %212 : vector<1x16x16xbf16> to vector<16x16xbf16>
    %214 = arith.truncf %211 : vector<16x256xf32> to vector<16x256xbf16>
    %cst_127 = arith.constant dense<0.000000e+00> : vector<16x256xf32>
    %215 = tpu.matmul %213, %214, %cst_127 {dimension_numbers = #tpu.dot_dimension_numbers<[1], [0], [0], [1], [0, 0, 1, 1], [], []>} : vector<16x16xbf16>, vector<16x256xbf16>, vector<16x256xf32> -> vector<16x256xf32>
    %216 = arith.addf %209, %215 : vector<16x256xf32>
    %c240_i32_128 = arith.constant 240 : i32
    %217 = tpu.dynamic_rotate %170 by %c240_i32_128 dim 1 : vector<16x256xf32>, i32 -> vector<16x256xf32>
    %218 = arith.mulf %217, %20 : vector<16x256xf32>
    %c7_129 = arith.constant 7 : index
    %c0_130 = arith.constant 0 : index
    %c0_131 = arith.constant 0 : index
    %219 = vector.load %arg7[%c7_129, %c0_130, %c0_131] : memref<9x16x16xbf16, #tpu.memory_space<vmem>>, vector<1x16x16xbf16>
    %220 = vector.shape_cast %219 : vector<1x16x16xbf16> to vector<16x16xbf16>
    %221 = arith.truncf %218 : vector<16x256xf32> to vector<16x256xbf16>
    %cst_132 = arith.constant dense<0.000000e+00> : vector<16x256xf32>
    %222 = tpu.matmul %220, %221, %cst_132 {dimension_numbers = #tpu.dot_dimension_numbers<[1], [0], [0], [1], [0, 0, 1, 1], [], []>} : vector<16x16xbf16>, vector<16x256xbf16>, vector<16x256xf32> -> vector<16x256xf32>
    %223 = arith.addf %216, %222 : vector<16x256xf32>
    %c239_i32_133 = arith.constant 239 : i32
    %224 = tpu.dynamic_rotate %170 by %c239_i32_133 dim 1 : vector<16x256xf32>, i32 -> vector<16x256xf32>
    %225 = arith.mulf %224, %23 : vector<16x256xf32>
    %c8_134 = arith.constant 8 : index
    %c0_135 = arith.constant 0 : index
    %c0_136 = arith.constant 0 : index
    %226 = vector.load %arg7[%c8_134, %c0_135, %c0_136] : memref<9x16x16xbf16, #tpu.memory_space<vmem>>, vector<1x16x16xbf16>
    %227 = vector.shape_cast %226 : vector<1x16x16xbf16> to vector<16x16xbf16>
    %228 = arith.truncf %225 : vector<16x256xf32> to vector<16x256xbf16>
    %cst_137 = arith.constant dense<0.000000e+00> : vector<16x256xf32>
    %229 = tpu.matmul %227, %228, %cst_137 {dimension_numbers = #tpu.dot_dimension_numbers<[1], [0], [0], [1], [0, 0, 1, 1], [], []>} : vector<16x16xbf16>, vector<16x256xbf16>, vector<16x256xf32> -> vector<16x256xf32>
    %230 = arith.addf %223, %229 : vector<16x256xf32>
    %c0_138 = arith.constant 0 : index
    %c0_139 = arith.constant 0 : index
    %231 = vector.load %arg8[%c0_138, %c0_139] : memref<16x1xf32, #tpu.memory_space<vmem>>, vector<16x1xf32>
    %232 = vector.broadcast %231 : vector<16x1xf32> to vector<16x256xf32>
    %233 = arith.addf %230, %232 : vector<16x256xf32>
    %cst_140 = arith.constant 0.000000e+00 : f32
    %234 = vector.broadcast %cst_140 : f32 to vector<16x256xf32>
    %235 = arith.maximumf %233, %234 : vector<16x256xf32>
    %c17_i32_141 = arith.constant 17 : i32
    %236 = tpu.dynamic_rotate %235 by %c17_i32_141 dim 1 : vector<16x256xf32>, i32 -> vector<16x256xf32>
    %237 = arith.mulf %236, %2 : vector<16x256xf32>
    %c0_142 = arith.constant 0 : index
    %c0_143 = arith.constant 0 : index
    %c0_144 = arith.constant 0 : index
    %238 = vector.load %arg9[%c0_142, %c0_143, %c0_144] : memref<9x11x16xbf16, #tpu.memory_space<vmem>>, vector<1x11x16xbf16>
    %239 = vector.shape_cast %238 : vector<1x11x16xbf16> to vector<11x16xbf16>
    %240 = arith.truncf %237 : vector<16x256xf32> to vector<16x256xbf16>
    %cst_145 = arith.constant dense<0.000000e+00> : vector<11x256xf32>
    %241 = tpu.matmul %239, %240, %cst_145 {dimension_numbers = #tpu.dot_dimension_numbers<[1], [0], [0], [1], [0, 0, 1, 1], [], []>} : vector<11x16xbf16>, vector<16x256xbf16>, vector<11x256xf32> -> vector<11x256xf32>
    %c16_i32_146 = arith.constant 16 : i32
    %242 = tpu.dynamic_rotate %235 by %c16_i32_146 dim 1 : vector<16x256xf32>, i32 -> vector<16x256xf32>
    %243 = arith.mulf %242, %5 : vector<16x256xf32>
    %c1_147 = arith.constant 1 : index
    %c0_148 = arith.constant 0 : index
    %c0_149 = arith.constant 0 : index
    %244 = vector.load %arg9[%c1_147, %c0_148, %c0_149] : memref<9x11x16xbf16, #tpu.memory_space<vmem>>, vector<1x11x16xbf16>
    %245 = vector.shape_cast %244 : vector<1x11x16xbf16> to vector<11x16xbf16>
    %246 = arith.truncf %243 : vector<16x256xf32> to vector<16x256xbf16>
    %cst_150 = arith.constant dense<0.000000e+00> : vector<11x256xf32>
    %247 = tpu.matmul %245, %246, %cst_150 {dimension_numbers = #tpu.dot_dimension_numbers<[1], [0], [0], [1], [0, 0, 1, 1], [], []>} : vector<11x16xbf16>, vector<16x256xbf16>, vector<11x256xf32> -> vector<11x256xf32>
    %248 = arith.addf %241, %247 : vector<11x256xf32>
    %c15_i32_151 = arith.constant 15 : i32
    %249 = tpu.dynamic_rotate %235 by %c15_i32_151 dim 1 : vector<16x256xf32>, i32 -> vector<16x256xf32>
    %250 = arith.mulf %249, %8 : vector<16x256xf32>
    %c2_152 = arith.constant 2 : index
    %c0_153 = arith.constant 0 : index
    %c0_154 = arith.constant 0 : index
    %251 = vector.load %arg9[%c2_152, %c0_153, %c0_154] : memref<9x11x16xbf16, #tpu.memory_space<vmem>>, vector<1x11x16xbf16>
    %252 = vector.shape_cast %251 : vector<1x11x16xbf16> to vector<11x16xbf16>
    %253 = arith.truncf %250 : vector<16x256xf32> to vector<16x256xbf16>
    %cst_155 = arith.constant dense<0.000000e+00> : vector<11x256xf32>
    %254 = tpu.matmul %252, %253, %cst_155 {dimension_numbers = #tpu.dot_dimension_numbers<[1], [0], [0], [1], [0, 0, 1, 1], [], []>} : vector<11x16xbf16>, vector<16x256xbf16>, vector<11x256xf32> -> vector<11x256xf32>
    %255 = arith.addf %248, %254 : vector<11x256xf32>
    %c1_i32_156 = arith.constant 1 : i32
    %256 = tpu.dynamic_rotate %235 by %c1_i32_156 dim 1 : vector<16x256xf32>, i32 -> vector<16x256xf32>
    %257 = arith.mulf %256, %11 : vector<16x256xf32>
    %c3_157 = arith.constant 3 : index
    %c0_158 = arith.constant 0 : index
    %c0_159 = arith.constant 0 : index
    %258 = vector.load %arg9[%c3_157, %c0_158, %c0_159] : memref<9x11x16xbf16, #tpu.memory_space<vmem>>, vector<1x11x16xbf16>
    %259 = vector.shape_cast %258 : vector<1x11x16xbf16> to vector<11x16xbf16>
    %260 = arith.truncf %257 : vector<16x256xf32> to vector<16x256xbf16>
    %cst_160 = arith.constant dense<0.000000e+00> : vector<11x256xf32>
    %261 = tpu.matmul %259, %260, %cst_160 {dimension_numbers = #tpu.dot_dimension_numbers<[1], [0], [0], [1], [0, 0, 1, 1], [], []>} : vector<11x16xbf16>, vector<16x256xbf16>, vector<11x256xf32> -> vector<11x256xf32>
    %262 = arith.addf %255, %261 : vector<11x256xf32>
    %c4_161 = arith.constant 4 : index
    %c0_162 = arith.constant 0 : index
    %c0_163 = arith.constant 0 : index
    %263 = vector.load %arg9[%c4_161, %c0_162, %c0_163] : memref<9x11x16xbf16, #tpu.memory_space<vmem>>, vector<1x11x16xbf16>
    %264 = vector.shape_cast %263 : vector<1x11x16xbf16> to vector<11x16xbf16>
    %265 = arith.truncf %235 : vector<16x256xf32> to vector<16x256xbf16>
    %cst_164 = arith.constant dense<0.000000e+00> : vector<11x256xf32>
    %266 = tpu.matmul %264, %265, %cst_164 {dimension_numbers = #tpu.dot_dimension_numbers<[1], [0], [0], [1], [0, 0, 1, 1], [], []>} : vector<11x16xbf16>, vector<16x256xbf16>, vector<11x256xf32> -> vector<11x256xf32>
    %267 = arith.addf %262, %266 : vector<11x256xf32>
    %c255_i32_165 = arith.constant 255 : i32
    %268 = tpu.dynamic_rotate %235 by %c255_i32_165 dim 1 : vector<16x256xf32>, i32 -> vector<16x256xf32>
    %269 = arith.mulf %268, %14 : vector<16x256xf32>
    %c5_166 = arith.constant 5 : index
    %c0_167 = arith.constant 0 : index
    %c0_168 = arith.constant 0 : index
    %270 = vector.load %arg9[%c5_166, %c0_167, %c0_168] : memref<9x11x16xbf16, #tpu.memory_space<vmem>>, vector<1x11x16xbf16>
    %271 = vector.shape_cast %270 : vector<1x11x16xbf16> to vector<11x16xbf16>
    %272 = arith.truncf %269 : vector<16x256xf32> to vector<16x256xbf16>
    %cst_169 = arith.constant dense<0.000000e+00> : vector<11x256xf32>
    %273 = tpu.matmul %271, %272, %cst_169 {dimension_numbers = #tpu.dot_dimension_numbers<[1], [0], [0], [1], [0, 0, 1, 1], [], []>} : vector<11x16xbf16>, vector<16x256xbf16>, vector<11x256xf32> -> vector<11x256xf32>
    %274 = arith.addf %267, %273 : vector<11x256xf32>
    %c241_i32_170 = arith.constant 241 : i32
    %275 = tpu.dynamic_rotate %235 by %c241_i32_170 dim 1 : vector<16x256xf32>, i32 -> vector<16x256xf32>
    %276 = arith.mulf %275, %17 : vector<16x256xf32>
    %c6_171 = arith.constant 6 : index
    %c0_172 = arith.constant 0 : index
    %c0_173 = arith.constant 0 : index
    %277 = vector.load %arg9[%c6_171, %c0_172, %c0_173] : memref<9x11x16xbf16, #tpu.memory_space<vmem>>, vector<1x11x16xbf16>
    %278 = vector.shape_cast %277 : vector<1x11x16xbf16> to vector<11x16xbf16>
    %279 = arith.truncf %276 : vector<16x256xf32> to vector<16x256xbf16>
    %cst_174 = arith.constant dense<0.000000e+00> : vector<11x256xf32>
    %280 = tpu.matmul %278, %279, %cst_174 {dimension_numbers = #tpu.dot_dimension_numbers<[1], [0], [0], [1], [0, 0, 1, 1], [], []>} : vector<11x16xbf16>, vector<16x256xbf16>, vector<11x256xf32> -> vector<11x256xf32>
    %281 = arith.addf %274, %280 : vector<11x256xf32>
    %c240_i32_175 = arith.constant 240 : i32
    %282 = tpu.dynamic_rotate %235 by %c240_i32_175 dim 1 : vector<16x256xf32>, i32 -> vector<16x256xf32>
    %283 = arith.mulf %282, %20 : vector<16x256xf32>
    %c7_176 = arith.constant 7 : index
    %c0_177 = arith.constant 0 : index
    %c0_178 = arith.constant 0 : index
    %284 = vector.load %arg9[%c7_176, %c0_177, %c0_178] : memref<9x11x16xbf16, #tpu.memory_space<vmem>>, vector<1x11x16xbf16>
    %285 = vector.shape_cast %284 : vector<1x11x16xbf16> to vector<11x16xbf16>
    %286 = arith.truncf %283 : vector<16x256xf32> to vector<16x256xbf16>
    %cst_179 = arith.constant dense<0.000000e+00> : vector<11x256xf32>
    %287 = tpu.matmul %285, %286, %cst_179 {dimension_numbers = #tpu.dot_dimension_numbers<[1], [0], [0], [1], [0, 0, 1, 1], [], []>} : vector<11x16xbf16>, vector<16x256xbf16>, vector<11x256xf32> -> vector<11x256xf32>
    %288 = arith.addf %281, %287 : vector<11x256xf32>
    %c239_i32_180 = arith.constant 239 : i32
    %289 = tpu.dynamic_rotate %235 by %c239_i32_180 dim 1 : vector<16x256xf32>, i32 -> vector<16x256xf32>
    %290 = arith.mulf %289, %23 : vector<16x256xf32>
    %c8_181 = arith.constant 8 : index
    %c0_182 = arith.constant 0 : index
    %c0_183 = arith.constant 0 : index
    %291 = vector.load %arg9[%c8_181, %c0_182, %c0_183] : memref<9x11x16xbf16, #tpu.memory_space<vmem>>, vector<1x11x16xbf16>
    %292 = vector.shape_cast %291 : vector<1x11x16xbf16> to vector<11x16xbf16>
    %293 = arith.truncf %290 : vector<16x256xf32> to vector<16x256xbf16>
    %cst_184 = arith.constant dense<0.000000e+00> : vector<11x256xf32>
    %294 = tpu.matmul %292, %293, %cst_184 {dimension_numbers = #tpu.dot_dimension_numbers<[1], [0], [0], [1], [0, 0, 1, 1], [], []>} : vector<11x16xbf16>, vector<16x256xbf16>, vector<11x256xf32> -> vector<11x256xf32>
    %295 = arith.addf %288, %294 : vector<11x256xf32>
    %c0_185 = arith.constant 0 : index
    %c0_186 = arith.constant 0 : index
    %296 = vector.load %arg10[%c0_185, %c0_186] : memref<11x1xf32, #tpu.memory_space<vmem>>, vector<11x1xf32>
    %297 = vector.broadcast %296 : vector<11x1xf32> to vector<11x256xf32>
    %298 = arith.addf %295, %297 : vector<11x256xf32>
    %cst_187 = arith.constant dense<0xFF800000> : vector<256xf32>
    %299 = vector.multi_reduction <maximumf>, %298, %cst_187 [0] : vector<11x256xf32> to vector<256xf32>
    %300 = vector.shape_cast %299 : vector<256xf32> to vector<1x256xf32>
    %301 = vector.broadcast %300 : vector<1x256xf32> to vector<11x256xf32>
    %302 = arith.subf %298, %301 : vector<11x256xf32>
    %303 = math.exp %302 : vector<11x256xf32>
    %cst_188 = arith.constant dense<0.000000e+00> : vector<256xf32>
    %304 = vector.multi_reduction <add>, %303, %cst_188 [0] : vector<11x256xf32> to vector<256xf32>
    %305 = vector.shape_cast %304 : vector<256xf32> to vector<1x256xf32>
    %306 = tpu.reciprocal %305 {approx = true} : vector<1x256xf32> -> vector<1x256xf32>
    %307 = arith.mulf %305, %306 : vector<1x256xf32>
    %cst_189 = arith.constant 2.000000e+00 : f32
    %308 = vector.broadcast %cst_189 : f32 to vector<1x256xf32>
    %309 = arith.subf %308, %307 : vector<1x256xf32>
    %310 = arith.mulf %306, %309 : vector<1x256xf32>
    %311 = vector.broadcast %310 : vector<1x256xf32> to vector<11x256xf32>
    %312 = arith.mulf %303, %311 : vector<11x256xf32>
    %c0_190 = arith.constant 0 : index
    %c0_191 = arith.constant 0 : index
    %313 = vector.load %arg11[%c0_190, %c0_191] : memref<11x256xf32, #tpu.memory_space<vmem>>, vector<11x256xf32>
    tpu.vector_store %arg11[%c0_190, %c0_191], %312 {strides = array<i32>} : memref<11x256xf32, #tpu.memory_space<vmem>>, vector<11x256xf32>,
    return
  }
  func.func @transform_0(%arg0: i32) -> (i32, i32) {
    %c0_i32 = arith.constant 0 : i32
    %c0_i32_0 = arith.constant 0 : i32
    return %c0_i32, %arg0 : i32, i32
  }
  func.func @transform_1(%arg0: i32) -> (i32, i32) {
    %c0_i32 = arith.constant 0 : i32
    %c0_i32_0 = arith.constant 0 : i32
    %c0_i32_1 = arith.constant 0 : i32
    return %c0_i32, %c0_i32_0 : i32, i32
  }
  func.func @transform_2(%arg0: i32) -> (i32, i32, i32) {
    %c0_i32 = arith.constant 0 : i32
    %c0_i32_0 = arith.constant 0 : i32
    %c0_i32_1 = arith.constant 0 : i32
    %c0_i32_2 = arith.constant 0 : i32
    return %c0_i32, %c0_i32_0, %c0_i32_1 : i32, i32, i32
  }
  func.func @transform_3(%arg0: i32) -> (i32, i32) {
    %c0_i32 = arith.constant 0 : i32
    %c0_i32_0 = arith.constant 0 : i32
    %c0_i32_1 = arith.constant 0 : i32
    return %c0_i32, %c0_i32_0 : i32, i32
  }
  func.func @transform_4(%arg0: i32) -> (i32, i32, i32) {
    %c0_i32 = arith.constant 0 : i32
    %c0_i32_0 = arith.constant 0 : i32
    %c0_i32_1 = arith.constant 0 : i32
    %c0_i32_2 = arith.constant 0 : i32
    return %c0_i32, %c0_i32_0, %c0_i32_1 : i32, i32, i32
  }
  func.func @transform_5(%arg0: i32) -> (i32, i32) {
    %c0_i32 = arith.constant 0 : i32
    %c0_i32_0 = arith.constant 0 : i32
    %c0_i32_1 = arith.constant 0 : i32
    return %c0_i32, %c0_i32_0 : i32, i32
  }
  func.func @transform_6(%arg0: i32) -> (i32, i32, i32) {
    %c0_i32 = arith.constant 0 : i32
    %c0_i32_0 = arith.constant 0 : i32
    %c0_i32_1 = arith.constant 0 : i32
    %c0_i32_2 = arith.constant 0 : i32
    return %c0_i32, %c0_i32_0, %c0_i32_1 : i32, i32, i32
  }
  func.func @transform_7(%arg0: i32) -> (i32, i32) {
    %c0_i32 = arith.constant 0 : i32
    %c0_i32_0 = arith.constant 0 : i32
    %c0_i32_1 = arith.constant 0 : i32
    return %c0_i32, %c0_i32_0 : i32, i32
  }
  func.func @transform_8(%arg0: i32) -> (i32, i32, i32) {
    %c0_i32 = arith.constant 0 : i32
    %c0_i32_0 = arith.constant 0 : i32
    %c0_i32_1 = arith.constant 0 : i32
    %c0_i32_2 = arith.constant 0 : i32
    return %c0_i32, %c0_i32_0, %c0_i32_1 : i32, i32, i32
  }
  func.func @transform_9(%arg0: i32) -> (i32, i32) {
    %c0_i32 = arith.constant 0 : i32
    %c0_i32_0 = arith.constant 0 : i32
    %c0_i32_1 = arith.constant 0 : i32
    return %c0_i32, %c0_i32_0 : i32, i32
  }
  func.func @transform_10(%arg0: i32) -> (i32, i32) {
    %c0_i32 = arith.constant 0 : i32
    %c0_i32_0 = arith.constant 0 : i32
    return %c0_i32, %arg0 : i32, i32
  }
}

</mosaic_0001>

<llo_original>
// kernel: parts_model_forward.1
$region0: #{parts_model_forward.1}
  #allocation0 [shape = 'u32[]', space=smem, size = 0x4, offset = 0x4, fixed_abs, tag = 'smem constant byte address 0x4 - core index']
  #allocation1 [shape = 'u32[144,128]{1,0:T(1,128)}', space=vmem, size = 0x12000, scoped, tag = 'internal scratch']
  %s0 = inlined_call_operand.vmem [shape: f32[8,512], index: 0, kind: input, shape index: {}]
  %s1 = inlined_call_operand.vmem [shape: f32[8,256], index: 1, kind: input, shape index: {}]
  %s2 = inlined_call_operand.vmem [shape: bf16[9,8,8], index: 2, kind: input, shape index: {}]
  %s3 = inlined_call_operand.vmem [shape: f32[8,1], index: 3, kind: input, shape index: {}]
  %s4 = inlined_call_operand.vmem [shape: bf16[9,16,8], index: 4, kind: input, shape index: {}]
  %s5 = inlined_call_operand.vmem [shape: f32[16,1], index: 5, kind: input, shape index: {}]
  %s6 = inlined_call_operand.vmem [shape: bf16[9,16,16], index: 6, kind: input, shape index: {}]
  %s7 = inlined_call_operand.vmem [shape: f32[16,1], index: 7, kind: input, shape index: {}]
  %s8 = inlined_call_operand.vmem [shape: bf16[9,11,16], index: 8, kind: input, shape index: {}]
  %s9 = inlined_call_operand.vmem [shape: f32[11,1], index: 9, kind: input, shape index: {}]
  %s10 = inlined_call_operand.vmem [shape: f32[11,512], index: 10, kind: output, shape index: {}]
  %s11 = sld [smem:[#allocation0]]
  $region92: #{parts_model_forward.1} parent=0
    _
  %s13 = ssub.s32 1, %s11
  %s14 = scalar_select 0, %s13, %s11
  $region1: #{parts_model_forward.1} parent=0
    #allocation2 [shape = 'u8[32768]{0}', space=vmem, size = 0x8000, scoped, tag = 'output window, operand 0']
    loop: start=0, step=1, limit=4
    $region2: #{parts_model_forward.1} parent=1 // loop_pre_header
      _
    $region3: #{parts_model_forward.1} parent=1 // loop_header
      %s16 = sphi 0, %s20
      %p17 = scmp.ge.s32.totalorder %s16, 4
      %s26 = sphi 0, %s28
      %s29 = sphi 0, %s26
      %s30 = sphi 0, %s29
      %s46 = sphi 0, %s30
      %s50 = sphi 0, %s50
      %s52 = sphi 0, %s50
      %s53 = sphi 0, %s52
      %s67 = sphi 0, %s53
      %s71 = sphi 0, %s71
      %s73 = sphi 0, %s71
      %s74 = sphi 0, %s73
      %s88 = sphi 0, %s74
      %s92 = sphi 0, %s92
      %s94 = sphi 0, %s92
      %s95 = sphi 0, %s94
      %s109 = sphi 0, %s95
      %s113 = sphi 0, %s113
      %s115 = sphi 0, %s113
      %s116 = sphi 0, %s115
      %s130 = sphi 0, %s116
      %s134 = sphi 0, %s134
      %s136 = sphi 0, %s134
      %s137 = sphi 0, %s136
      %s151 = sphi 0, %s137
      %s155 = sphi 0, %s155
      %s157 = sphi 0, %s155
      %s158 = sphi 0, %s157
      %s172 = sphi 0, %s158
      %s176 = sphi 0, %s176
      %s178 = sphi 0, %s176
      %s179 = sphi 0, %s178
      %s193 = sphi 0, %s179
      %s197 = sphi 0, %s197
      %s199 = sphi 0, %s197
      %s200 = sphi 0, %s199
      %s214 = sphi 0, %s200
      %s218 = sphi 0, %s218
      %s220 = sphi 0, %s218
      %s221 = sphi 0, %s220
      %s235 = sphi 0, %s221
      %s241 = sphi 0, %s243
      %s244 = sphi 0, %s241
      %s245 = sphi 0, %s244
      %s261 = sphi 0, %s245
    $region4: #{parts_model_forward.1} parent=1 // loop_header_branch
      %19 = sbr.rel (%p17) target = $region8
    $region5: #{parts_model_forward.1} parent=1 // loop_body
      %s21 = ssub.s32 %s16, 1
      %s22 = ssub.s32 %s16, 2
      %s23 = sadd.s32 %s16, 1
      %s24 = ssub.s32 %s16, %s23
      %p25 = scmp.eq.s32.totalorder %s24, 0
      %s27 = sadd.s32 %s26, 1
      %s28 = scalar_select %p25, %s26, %s27
      %p31 = pneg %p25
      %p32 = scmp.eq.s32.totalorder %s16, 1
      %p33 = por %p31, %p32
      %p34 = scmp.ne.s32.totalorder %s26, %s29
      %p35 = scmp.eq.s32.totalorder %s16, 0
      %p36 = por %p34, %p35
      %p37 = scmp.ne.s32.totalorder %s26, %s29
      %p38 = scmp.eq.s32.totalorder %s21, 1
      %p39 = por %p37, %p38
      %p40 = scmp.ne.s32.totalorder %s29, %s30
      %p41 = scmp.eq.s32.totalorder %s21, 0
      %p42 = por %p40, %p41
      %p43 = scmp.ne.s32.totalorder %s29, %s30
      %p44 = scmp.eq.s32.totalorder %s22, 1
      %p45 = por %p43, %p44
      %p47 = scmp.ne.s32.totalorder %s30, %s46
      %p48 = scmp.eq.s32.totalorder %s22, 0
      %p49 = por %p47, %p48
      %s51 = sadd.s32 %s50, 1
      %p54 = scmp.eq.s32.totalorder %s16, 1
      %p55 = scmp.ne.s32.totalorder %s50, %s52
      %p56 = scmp.eq.s32.totalorder %s16, 0
      %p57 = por %p55, %p56
      %p58 = scmp.ne.s32.totalorder %s50, %s52
      %p59 = scmp.eq.s32.totalorder %s21, 1
      %p60 = por %p58, %p59
      %p61 = scmp.ne.s32.totalorder %s52, %s53
      %p62 = scmp.eq.s32.totalorder %s21, 0
      %p63 = por %p61, %p62
      %p64 = scmp.ne.s32.totalorder %s52, %s53
      %p65 = scmp.eq.s32.totalorder %s22, 1
      %p66 = por %p64, %p65
      %p68 = scmp.ne.s32.totalorder %s53, %s67
      %p69 = scmp.eq.s32.totalorder %s22, 0
      %p70 = por %p68, %p69
      %s72 = sadd.s32 %s71, 1
      %p75 = scmp.eq.s32.totalorder %s16, 1
      %p76 = scmp.ne.s32.totalorder %s71, %s73
      %p77 = scmp.eq.s32.totalorder %s16, 0
      %p78 = por %p76, %p77
      %p79 = scmp.ne.s32.totalorder %s71, %s73
      %p80 = scmp.eq.s32.totalorder %s21, 1
      %p81 = por %p79, %p80
      %p82 = scmp.ne.s32.totalorder %s73, %s74
      %p83 = scmp.eq.s32.totalorder %s21, 0
      %p84 = por %p82, %p83
      %p85 = scmp.ne.s32.totalorder %s73, %s74
      %p86 = scmp.eq.s32.totalorder %s22, 1
      %p87 = por %p85, %p86
      %p89 = scmp.ne.s32.totalorder %s74, %s88
      %p90 = scmp.eq.s32.totalorder %s22, 0
      %p91 = por %p89, %p90
      %s93 = sadd.s32 %s92, 1
      %p96 = scmp.eq.s32.totalorder %s16, 1
      %p97 = scmp.ne.s32.totalorder %s92, %s94
      %p98 = scmp.eq.s32.totalorder %s16, 0
      %p99 = por %p97, %p98
      %p100 = scmp.ne.s32.totalorder %s92, %s94
      %p101 = scmp.eq.s32.totalorder %s21, 1
      %p102 = por %p100, %p101
      %p103 = scmp.ne.s32.totalorder %s94, %s95
      %p104 = scmp.eq.s32.totalorder %s21, 0
      %p105 = por %p103, %p104
      %p106 = scmp.ne.s32.totalorder %s94, %s95
      %p107 = scmp.eq.s32.totalorder %s22, 1
      %p108 = por %p106, %p107
      %p110 = scmp.ne.s32.totalorder %s95, %s109
      %p111 = scmp.eq.s32.totalorder %s22, 0
      %p112 = por %p110, %p111
      %s114 = sadd.s32 %s113, 1
      %p117 = scmp.eq.s32.totalorder %s16, 1
      %p118 = scmp.ne.s32.totalorder %s113, %s115
      %p119 = scmp.eq.s32.totalorder %s16, 0
      %p120 = por %p118, %p119
      %p121 = scmp.ne.s32.totalorder %s113, %s115
      %p122 = scmp.eq.s32.totalorder %s21, 1
      %p123 = por %p121, %p122
      %p124 = scmp.ne.s32.totalorder %s115, %s116
      %p125 = scmp.eq.s32.totalorder %s21, 0
      %p126 = por %p124, %p125
      %p127 = scmp.ne.s32.totalorder %s115, %s116
      %p128 = scmp.eq.s32.totalorder %s22, 1
      %p129 = por %p127, %p128
      %p131 = scmp.ne.s32.totalorder %s116, %s130
      %p132 = scmp.eq.s32.totalorder %s22, 0
      %p133 = por %p131, %p132
      %s135 = sadd.s32 %s134, 1
      %p138 = scmp.eq.s32.totalorder %s16, 1
      %p139 = scmp.ne.s32.totalorder %s134, %s136
      %p140 = scmp.eq.s32.totalorder %s16, 0
      %p141 = por %p139, %p140
      %p142 = scmp.ne.s32.totalorder %s134, %s136
      %p143 = scmp.eq.s32.totalorder %s21, 1
      %p144 = por %p142, %p143
      %p145 = scmp.ne.s32.totalorder %s136, %s137
      %p146 = scmp.eq.s32.totalorder %s21, 0
      %p147 = por %p145, %p146
      %p148 = scmp.ne.s32.totalorder %s136, %s137
      %p149 = scmp.eq.s32.totalorder %s22, 1
      %p150 = por %p148, %p149
      %p152 = scmp.ne.s32.totalorder %s137, %s151
      %p153 = scmp.eq.s32.totalorder %s22, 0
      %p154 = por %p152, %p153
      %s156 = sadd.s32 %s155, 1
      %p159 = scmp.eq.s32.totalorder %s16, 1
      %p160 = scmp.ne.s32.totalorder %s155, %s157
      %p161 = scmp.eq.s32.totalorder %s16, 0
      %p162 = por %p160, %p161
      %p163 = scmp.ne.s32.totalorder %s155, %s157
      %p164 = scmp.eq.s32.totalorder %s21, 1
      %p165 = por %p163, %p164
      %p166 = scmp.ne.s32.totalorder %s157, %s158
      %p167 = scmp.eq.s32.totalorder %s21, 0
      %p168 = por %p166, %p167
      %p169 = scmp.ne.s32.totalorder %s157, %s158
      %p170 = scmp.eq.s32.totalorder %s22, 1
      %p171 = por %p169, %p170
      %p173 = scmp.ne.s32.totalorder %s158, %s172
      %p174 = scmp.eq.s32.totalorder %s22, 0
      %p175 = por %p173, %p174
      %s177 = sadd.s32 %s176, 1
      %p180 = scmp.eq.s32.totalorder %s16, 1
      %p181 = scmp.ne.s32.totalorder %s176, %s178
      %p182 = scmp.eq.s32.totalorder %s16, 0
      %p183 = por %p181, %p182
      %p184 = scmp.ne.s32.totalorder %s176, %s178
      %p185 = scmp.eq.s32.totalorder %s21, 1
      %p186 = por %p184, %p185
      %p187 = scmp.ne.s32.totalorder %s178, %s179
      %p188 = scmp.eq.s32.totalorder %s21, 0
      %p189 = por %p187, %p188
      %p190 = scmp.ne.s32.totalorder %s178, %s179
      %p191 = scmp.eq.s32.totalorder %s22, 1
      %p192 = por %p190, %p191
      %p194 = scmp.ne.s32.totalorder %s179, %s193
      %p195 = scmp.eq.s32.totalorder %s22, 0
      %p196 = por %p194, %p195
      %s198 = sadd.s32 %s197, 1
      %p201 = scmp.eq.s32.totalorder %s16, 1
      %p202 = scmp.ne.s32.totalorder %s197, %s199
      %p203 = scmp.eq.s32.totalorder %s16, 0
      %p204 = por %p202, %p203
      %p205 = scmp.ne.s32.totalorder %s197, %s199
      %p206 = scmp.eq.s32.totalorder %s21, 1
      %p207 = por %p205, %p206
      %p208 = scmp.ne.s32.totalorder %s199, %s200
      %p209 = scmp.eq.s32.totalorder %s21, 0
      %p210 = por %p208, %p209
      %p211 = scmp.ne.s32.totalorder %s199, %s200
      %p212 = scmp.eq.s32.totalorder %s22, 1
      %p213 = por %p211, %p212
      %p215 = scmp.ne.s32.totalorder %s200, %s214
      %p216 = scmp.eq.s32.totalorder %s22, 0
      %p217 = por %p215, %p216
      %s219 = sadd.s32 %s218, 1
      %p222 = scmp.eq.s32.totalorder %s16, 1
      %p223 = scmp.ne.s32.totalorder %s218, %s220
      %p224 = scmp.eq.s32.totalorder %s16, 0
      %p225 = por %p223, %p224
      %p226 = scmp.ne.s32.totalorder %s218, %s220
      %p227 = scmp.eq.s32.totalorder %s21, 1
      %p228 = por %p226, %p227
      %p229 = scmp.ne.s32.totalorder %s220, %s221
      %p230 = scmp.eq.s32.totalorder %s21, 0
      %p231 = por %p229, %p230
      %p232 = scmp.ne.s32.totalorder %s220, %s221
      %p233 = scmp.eq.s32.totalorder %s22, 1
      %p234 = por %p232, %p233
      %p236 = scmp.ne.s32.totalorder %s221, %s235
      %p237 = scmp.eq.s32.totalorder %s22, 0
      %p238 = por %p236, %p237
      %s239 = ssub.s32 %s16, %s23
      %p240 = scmp.eq.s32.totalorder %s239, 0
      %s242 = sadd.s32 %s241, 1
      %s243 = scalar_select %p240, %s241, %s242
      %p246 = pneg %p240
      %p247 = scmp.eq.s32.totalorder %s16, 1
      %p248 = por %p246, %p247
      %p249 = scmp.ne.s32.totalorder %s241, %s244
      %p250 = scmp.eq.s32.totalorder %s16, 0
      %p251 = por %p249, %p250
      %p252 = scmp.ne.s32.totalorder %s241, %s244
      %p253 = scmp.eq.s32.totalorder %s21, 1
      %p254 = por %p252, %p253
      %p255 = scmp.ne.s32.totalorder %s244, %s245
      %p256 = scmp.eq.s32.totalorder %s21, 0
      %p257 = por %p255, %p256
      %p258 = scmp.ne.s32.totalorder %s244, %s245
      %p259 = scmp.eq.s32.totalorder %s22, 1
      %p260 = por %p258, %p259
      %p262 = scmp.ne.s32.totalorder %s245, %s261
      %p263 = scmp.eq.s32.totalorder %s22, 0
      %p264 = por %p262, %p263
      %p265 = scmp.le.s32.totalorder 1, %s16
      %p266 = scmp.lt.s32.totalorder %s16, 3
      %p267 = pnand %p265, %p266
      %p268 = pneg %p267
      // Predicated region
      $region9: #{parts_model_forward.1} parent=5 // pred_check
        _
      $region10: #{parts_model_forward.1} parent=5 // pred_check_branch
        %270 = sbr.rel (%p267) target = $region12
      $region11: #{parts_model_forward.1} parent=5 // pred_region
        %s271 = ssub.s32 %s16, 1
        // Predicated region
        $region13: #{parts_model_forward.1} parent=11 // pred_check
          %p272 = pneg %p63
        $region14: #{parts_model_forward.1} parent=11 // pred_check_branch
          %274 = sbr.rel (%p272) target = $region16
        $region15: #{parts_model_forward.1} parent=11 // pred_region
          _
        $region16: #{parts_model_forward.1} parent=11 // pred_fallthru
          _
        // Predicated region
        $region17: #{parts_model_forward.1} parent=11 // pred_check
          %p275 = pneg %p84
        $region18: #{parts_model_forward.1} parent=11 // pred_check_branch
          %277 = sbr.rel (%p275) target = $region20
        $region19: #{parts_model_forward.1} parent=11 // pred_region
          _
        $region20: #{parts_model_forward.1} parent=11 // pred_fallthru
          _
        // Predicated region
        $region21: #{parts_model_forward.1} parent=11 // pred_check
          %p278 = pneg %p105
        $region22: #{parts_model_forward.1} parent=11 // pred_check_branch
          %280 = sbr.rel (%p278) target = $region24
        $region23: #{parts_model_forward.1} parent=11 // pred_region
          _
        $region24: #{parts_model_forward.1} parent=11 // pred_fallthru
          _
        // Predicated region
        $region25: #{parts_model_forward.1} parent=11 // pred_check
          %p281 = pneg %p126
        $region26: #{parts_model_forward.1} parent=11 // pred_check_branch
          %283 = sbr.rel (%p281) target = $region28
        $region27: #{parts_model_forward.1} parent=11 // pred_region
          _
        $region28: #{parts_model_forward.1} parent=11 // pred_fallthru
          _
        // Predicated region
        $region29: #{parts_model_forward.1} parent=11 // pred_check
          %p284 = pneg %p147
        $region30: #{parts_model_forward.1} parent=11 // pred_check_branch
          %286 = sbr.rel (%p284) target = $region32
        $region31: #{parts_model_forward.1} parent=11 // pred_region
          _
        $region32: #{parts_model_forward.1} parent=11 // pred_fallthru
          _
        // Predicated region
        $region33: #{parts_model_forward.1} parent=11 // pred_check
          %p287 = pneg %p168
        $region34: #{parts_model_forward.1} parent=11 // pred_check_branch
          %289 = sbr.rel (%p287) target = $region36
        $region35: #{parts_model_forward.1} parent=11 // pred_region
          _
        $region36: #{parts_model_forward.1} parent=11 // pred_fallthru
          _
        // Predicated region
        $region37: #{parts_model_forward.1} parent=11 // pred_check
          %p290 = pneg %p189
        $region38: #{parts_model_forward.1} parent=11 // pred_check_branch
          %292 = sbr.rel (%p290) target = $region40
        $region39: #{parts_model_forward.1} parent=11 // pred_region
          _
        $region40: #{parts_model_forward.1} parent=11 // pred_fallthru
          _
        // Predicated region
        $region41: #{parts_model_forward.1} parent=11 // pred_check
          %p293 = pneg %p210
        $region42: #{parts_model_forward.1} parent=11 // pred_check_branch
          %295 = sbr.rel (%p293) target = $region44
        $region43: #{parts_model_forward.1} parent=11 // pred_region
          _
        $region44: #{parts_model_forward.1} parent=11 // pred_fallthru
          _
        // Predicated region
        $region45: #{parts_model_forward.1} parent=11 // pred_check
          %p296 = pneg %p231
        $region46: #{parts_model_forward.1} parent=11 // pred_check_branch
          %298 = sbr.rel (%p296) target = $region48
        $region47: #{parts_model_forward.1} parent=11 // pred_region
          _
        $region48: #{parts_model_forward.1} parent=11 // pred_fallthru
          _
      $region12: #{parts_model_forward.1} parent=5 // pred_fallthru
        _
      %p299 = scmp.lt.s32.totalorder %s16, 2
      // Predicated region
      $region49: #{parts_model_forward.1} parent=5 // pred_check
        %p300 = pneg %p299
      $region50: #{parts_model_forward.1} parent=5 // pred_check_branch
        %302 = sbr.rel (%p300) target = $region52
      $region51: #{parts_model_forward.1} parent=5 // pred_region
        // Predicated region
        $region53: #{parts_model_forward.1} parent=51 // pred_check
          %p303 = pneg %p36
        $region54: #{parts_model_forward.1} parent=51 // pred_check_branch
          %305 = sbr.rel (%p303) target = $region56
        $region55: #{parts_model_forward.1} parent=51 // pred_region
          %s306 = smul.u32 2, %s16
          %p307 = scmp.lt.s32.totalorder %s306, 3
          %s308 = scalar_select %p307, %s306, 3
          %s309 = smul.addr %s308, 8
          %s310 = scalar_lea.vmem %s0, %s309
          %s311 = smul.u32 2, %s16
        $region56: #{parts_model_forward.1} parent=51 // pred_fallthru
          _
      $region52: #{parts_model_forward.1} parent=5 // pred_fallthru
        _
      %p312 = scmp.le.s32.totalorder 1, %s16
      %p313 = scmp.lt.s32.totalorder %s16, 3
      %p314 = pnand %p312, %p313
      %p315 = pneg %p314
      // Predicated region
      $region57: #{parts_model_forward.1} parent=5 // pred_check
        _
      $region58: #{parts_model_forward.1} parent=5 // pred_check_branch
        %317 = sbr.rel (%p314) target = $region60
      $region59: #{parts_model_forward.1} parent=5 // pred_region
        %s318 = ssub.s32 %s16, 1
        %s319 = smul.u32 2, %s21
        %p320 = scmp.lt.s32.totalorder %s319, 3
        %s321 = scalar_select %p320, %s319, 3
        %s322 = smul.addr %s321, 8
        %s323 = scalar_lea.vmem %s0, %s322
        %p324 = pneg %p42
        %p325 = pneg %p39
        %p326 = pneg %p63
        %p327 = pneg %p60
        %p328 = pneg %p84
        %p329 = pneg %p81
        %p330 = pneg %p105
        %p331 = pneg %p102
        %p332 = pneg %p126
        %p333 = pneg %p123
        %p334 = pneg %p147
        %p335 = pneg %p144
        %p336 = pneg %p168
        %p337 = pneg %p165
        %p338 = pneg %p189
        %p339 = pneg %p186
        %p340 = pneg %p210
        %p341 = pneg %p207
        %p342 = pneg %p231
        %p343 = pneg %p228
        %p344 = pneg %p257
        %p345 = pneg %p254
        %s346 = sand.u32 %s244, 1
        %s347 = sand.u32 %s244, 1
        %s348 = smul.addr %s347, 32
        %s349 = scalar_lea.vmem [#allocation2], %s348
        %s350 = smul.u32 2, %s21
        %p351 = scmp.lt.s32.totalorder %s350, 3
        %s352 = scalar_select %p351, %s350, 3
        %s353 = smul.addr %s352, 8
        %s354 = scalar_lea.vmem %s0, %s353
        %s355 = smul.u32 2, %s21
        %s356 = smul.u32 2, %s21
        %v358 = vld [vmem:[%s1] ss:$8 sm:$0x3]
        %v360 = vlaneseq
        %v361 = vshrl.u32 %v360, 7
        %v362 = vsub.s32 0, %v361
        %v363 = vrot.slane %v358, %v362
        %v364 = vlaneseq
        %v365 = vshrl.u32 %v364, 7
        %v366 = vsub.s32 1, %v365
        %v367 = vrot.slane %v358, %v366
        %s370 = scalar_lea.vmem %s1, 1
        %v371 = vld [vmem:[%s370] ss:$8 sm:$0x3]
        %v373 = vlaneseq
        %v374 = vshrl.u32 %v373, 7
        %v375 = vsub.s32 0, %v374
        %v376 = vrot.slane %v371, %v375
        %v377 = vlaneseq
        %v378 = vshrl.u32 %v377, 7
        %v379 = vsub.s32 1, %v378
        %v380 = vrot.slane %v371, %v379
        %s383 = scalar_lea.vmem %s1, 2
        %v384 = vld [vmem:[%s383] ss:$8 sm:$0x3]
        %v386 = vlaneseq
        %v387 = vshrl.u32 %v386, 7
        %v388 = vsub.s32 0, %v387
        %v389 = vrot.slane %v384, %v388
        %v390 = vlaneseq
        %v391 = vshrl.u32 %v390, 7
        %v392 = vsub.s32 1, %v391
        %v393 = vrot.slane %v384, %v392
        %s396 = scalar_lea.vmem %s1, 3
        %v397 = vld [vmem:[%s396] ss:$8 sm:$0x3]
        %v399 = vlaneseq
        %v400 = vshrl.u32 %v399, 7
        %v401 = vsub.s32 0, %v400
        %v402 = vrot.slane %v397, %v401
        %v403 = vlaneseq
        %v404 = vshrl.u32 %v403, 7
        %v405 = vsub.s32 1, %v404
        %v406 = vrot.slane %v397, %v405
        %s409 = scalar_lea.vmem %s1, 4
        %v410 = vld [vmem:[%s409] ss:$8 sm:$0x3]
        %v412 = vlaneseq
        %v413 = vshrl.u32 %v412, 7
        %v414 = vsub.s32 0, %v413
        %v415 = vrot.slane %v410, %v414
        %v416 = vlaneseq
        %v417 = vshrl.u32 %v416, 7
        %v418 = vsub.s32 1, %v417
        %v419 = vrot.slane %v410, %v418
        %s422 = scalar_lea.vmem %s1, 5
        %v423 = vld [vmem:[%s422] ss:$8 sm:$0x3]
        %v425 = vlaneseq
        %v426 = vshrl.u32 %v425, 7
        %v427 = vsub.s32 0, %v426
        %v428 = vrot.slane %v423, %v427
        %v429 = vlaneseq
        %v430 = vshrl.u32 %v429, 7
        %v431 = vsub.s32 1, %v430
        %v432 = vrot.slane %v423, %v431
        %s435 = scalar_lea.vmem %s1, 6
        %v436 = vld [vmem:[%s435] ss:$8 sm:$0x3]
        %v438 = vlaneseq
        %v439 = vshrl.u32 %v438, 7
        %v440 = vsub.s32 0, %v439
        %v441 = vrot.slane %v436, %v440
        %v442 = vlaneseq
        %v443 = vshrl.u32 %v442, 7
        %v444 = vsub.s32 1, %v443
        %v445 = vrot.slane %v436, %v444
        %s448 = scalar_lea.vmem %s1, 7
        %v449 = vld [vmem:[%s448] ss:$8 sm:$0x3]
        %v451 = vlaneseq
        %v452 = vshrl.u32 %v451, 7
        %v453 = vsub.s32 0, %v452
        %v454 = vrot.slane %v449, %v453
        %v455 = vlaneseq
        %v456 = vshrl.u32 %v455, 7
        %v457 = vsub.s32 1, %v456
        %v458 = vrot.slane %v449, %v457
        %v461 = vld [vmem:[%s354] sm:$0xff]
        %v462 = vld [vmem:[%s354 + $0x8] sm:$0xff]
        %463 = vrot.lane.b32.xlu0 %v461, 17
        %v464 = vpop.permute.xlu0 %463
        %465 = vrot.lane.b32.xlu0 %v462, 17
        %v466 = vpop.permute.xlu0 %465
        %v467 = vlaneseq
        %v468 = vand.u32 %v467, 127
        %vm469 = vcmp.lt.s32.totalorder %v468, 17
        %v470 = vsel %vm469, %v464, %v466
        %v471 = vsel %vm469, %v466, %v464
        %v472 = vmul.f32 %v471, %v363
        %v473 = vmul.f32 %v470, %v367
        %v474 = vld [vmem:[%s2] sm:$0xf]
        %v475 = vpack.c.bf16 %v472, %v472
        %v476 = vpack.c.bf16 %v473, %v473
        %477 = vrot.lane.b32.xlu0 %v461, 16
        %v478 = vpop.permute.xlu0 %477
        %479 = vrot.lane.b32.xlu0 %v462, 16
        %v480 = vpop.permute.xlu0 %479
        %vm481 = vcmp.lt.s32.totalorder %v468, 16
        %v482 = vsel %vm481, %v478, %v480
        %v483 = vsel %vm481, %v480, %v478
        %v484 = vmul.f32 %v483, %v376
        %v485 = vmul.f32 %v482, %v380
        %s486 = scalar_lea.vmem %s2, 4
        %v487 = vld [vmem:[%s486] sm:$0xf]
        %v488 = vpack.c.bf16 %v484, %v484
        %v489 = vpack.c.bf16 %v485, %v485
        %vm490 = vcmask 64512
        %v492 = vsel %vm490, %v487, 0
        %vm494 = vcmask 1043456
        %v496 = vsel %vm494, %v488, 0
        %v499 = vsel %vm494, %v489, 0
        %501 = vmatprep.subr.bf16.mxu0 %v499
        %502 = vmatpush1.bf16.msra.mxu0 %v496
        %503 = vmatprep.subr.bf16.mxu0 0
        %504 = vmatpush1.bf16.msra.mxu0 0
        %505 = vmatprep.subr.bf16.mxu0 0
        %506 = vmatpush1.bf16.msra.mxu0 0
        %507 = vmatprep.subr.bf16.mxu0 0
        %508 = vmatpush1.bf16.msra.mxu0 0
        %509 = vmatprep.subr.bf16.mxu0 0
        %510 = vmatpush1.bf16.msra.mxu0 0
        %511 = vmatprep.subr.bf16.mxu0 0
        %512 = vmatpush1.bf16.msra.mxu0 0
        %513 = vmatprep.subr.bf16.mxu0 0
        %514 = vmatpush1.bf16.msra.mxu0 0
        %515 = vmatprep.subr.bf16.mxu0 0
        %516 = vmatpush1.bf16.msra.mxu0 0
        %517 = vmatprep.subr.bf16.mxu0 0
        %518 = vmatpush1.bf16.msra.mxu0 0
        %519 = vmatprep.subr.bf16.mxu0 0
        %520 = vmatpush1.bf16.msra.mxu0 0
        %521 = vmatprep.subr.bf16.mxu0 0
        %522 = vmatpush1.bf16.msra.mxu0 0
        %523 = vmatprep.subr.bf16.mxu0 0
        %524 = vmatpush1.bf16.msra.mxu0 0
        %525 = vmatprep.subr.bf16.mxu0 0
        %526 = vmatpush1.bf16.msra.mxu0 0
        %527 = vmatprep.subr.bf16.mxu0 0
        %528 = vmatpush1.bf16.msra.mxu0 0
        %529 = vmatprep.subr.bf16.mxu0 0
        %530 = vmatpush1.bf16.msra.mxu0 0
        %531 = vmatprep.subr.bf16.mxu0 0
        %532 = vmatpush1.bf16.msra.mxu0 0
        %533 = vmatprep.mubr.bf16.mxu0 0
        %534 = vmatmul.mubr.bf16.gmra.mrb[0].mxu0 %v492
        %v535 = vpop.f32.mrb[0].mxu0
        %v536 = vadd.f32 0.0, %v535
        %v537 = vpop.f32.mrb[0].mxu0
        %v538 = vadd.f32 0.0, %v537
        %v539 = vpop.f32.mrb[0].mxu0
        %v540 = vpop.f32.mrb[0].mxu0
        %541 = vdwg.mxu0
        %v543 = vsel %vm490, %v474, 0
        %v546 = vsel %vm494, %v475, 0
        %v549 = vsel %vm494, %v476, 0
        %551 = vmatprep.subr.bf16.mxu0 %v549
        %552 = vmatpush1.bf16.msra.mxu0 %v546
        %553 = vmatprep.subr.bf16.mxu0 0
        %554 = vmatpush1.bf16.msra.mxu0 0
        %555 = vmatprep.subr.bf16.mxu0 0
        %556 = vmatpush1.bf16.msra.mxu0 0
        %557 = vmatprep.subr.bf16.mxu0 0
        %558 = vmatpush1.bf16.msra.mxu0 0
        %559 = vmatprep.subr.bf16.mxu0 0
        %560 = vmatpush1.bf16.msra.mxu0 0
        %561 = vmatprep.subr.bf16.mxu0 0
        %562 = vmatpush1.bf16.msra.mxu0 0
        %563 = vmatprep.subr.bf16.mxu0 0
        %564 = vmatpush1.bf16.msra.mxu0 0
        %565 = vmatprep.subr.bf16.mxu0 0
        %566 = vmatpush1.bf16.msra.mxu0 0
        %567 = vmatprep.subr.bf16.mxu0 0
        %568 = vmatpush1.bf16.msra.mxu0 0
        %569 = vmatprep.subr.bf16.mxu0 0
        %570 = vmatpush1.bf16.msra.mxu0 0
        %571 = vmatprep.subr.bf16.mxu0 0
        %572 = vmatpush1.bf16.msra.mxu0 0
        %573 = vmatprep.subr.bf16.mxu0 0
        %574 = vmatpush1.bf16.msra.mxu0 0
        %575 = vmatprep.subr.bf16.mxu0 0
        %576 = vmatpush1.bf16.msra.mxu0 0
        %577 = vmatprep.subr.bf16.mxu0 0
        %578 = vmatpush1.bf16.msra.mxu0 0
        %579 = vmatprep.subr.bf16.mxu0 0
        %580 = vmatpush1.bf16.msra.mxu0 0
        %581 = vmatprep.subr.bf16.mxu0 0
        %582 = vmatpush1.bf16.msra.mxu0 0
        %583 = vmatprep.mubr.bf16.mxu0 0
        %584 = vmatmul.mubr.bf16.gmra.mrb[0].mxu0 %v543
        %v585 = vpop.f32.mrb[0].mxu0
        %v586 = vadd.f32 %v536, %v585
        %v587 = vpop.f32.mrb[0].mxu0
        %v588 = vadd.f32 %v538, %v587
        %v589 = vpop.f32.mrb[0].mxu0
        %v590 = vpop.f32.mrb[0].mxu0
        %591 = vdwg.mxu0
        %592 = vrot.lane.b32.xlu0 %v461, 15
        %v593 = vpop.permute.xlu0 %592
        %594 = vrot.lane.b32.xlu0 %v462, 15
        %v595 = vpop.permute.xlu0 %594
        %vm596 = vcmp.lt.s32.totalorder %v468, 15
        %v597 = vsel %vm596, %v593, %v595
        %v598 = vsel %vm596, %v595, %v593
        %v599 = vmul.f32 %v598, %v389
        %v600 = vmul.f32 %v597, %v393
        %s601 = scalar_lea.vmem %s2, 8
        %v602 = vld [vmem:[%s601] sm:$0xf]
        %v603 = vpack.c.bf16 %v599, %v599
        %v604 = vpack.c.bf16 %v600, %v600
        %v606 = vsel %vm490, %v602, 0
        %v609 = vsel %vm494, %v603, 0
        %v612 = vsel %vm494, %v604, 0
        %614 = vmatprep.subr.bf16.mxu0 %v612
        %615 = vmatpush1.bf16.msra.mxu0 %v609
        %616 = vmatprep.subr.bf16.mxu0 0
        %617 = vmatpush1.bf16.msra.mxu0 0
        %618 = vmatprep.subr.bf16.mxu0 0
        %619 = vmatpush1.bf16.msra.mxu0 0
        %620 = vmatprep.subr.bf16.mxu0 0
        %621 = vmatpush1.bf16.msra.mxu0 0
        %622 = vmatprep.subr.bf16.mxu0 0
        %623 = vmatpush1.bf16.msra.mxu0 0
        %624 = vmatprep.subr.bf16.mxu0 0
        %625 = vmatpush1.bf16.msra.mxu0 0
        %626 = vmatprep.subr.bf16.mxu0 0
        %627 = vmatpush1.bf16.msra.mxu0 0
        %628 = vmatprep.subr.bf16.mxu0 0
        %629 = vmatpush1.bf16.msra.mxu0 0
        %630 = vmatprep.subr.bf16.mxu0 0
        %631 = vmatpush1.bf16.msra.mxu0 0
        %632 = vmatprep.subr.bf16.mxu0 0
        %633 = vmatpush1.bf16.msra.mxu0 0
        %634 = vmatprep.subr.bf16.mxu0 0
        %635 = vmatpush1.bf16.msra.mxu0 0
        %636 = vmatprep.subr.bf16.mxu0 0
        %637 = vmatpush1.bf16.msra.mxu0 0
        %638 = vmatprep.subr.bf16.mxu0 0
        %639 = vmatpush1.bf16.msra.mxu0 0
        %640 = vmatprep.subr.bf16.mxu0 0
        %641 = vmatpush1.bf16.msra.mxu0 0
        %642 = vmatprep.subr.bf16.mxu0 0
        %643 = vmatpush1.bf16.msra.mxu0 0
        %644 = vmatprep.subr.bf16.mxu0 0
        %645 = vmatpush1.bf16.msra.mxu0 0
        %646 = vmatprep.mubr.bf16.mxu0 0
        %647 = vmatmul.mubr.bf16.gmra.mrb[0].mxu0 %v606
        %v648 = vpop.f32.mrb[0].mxu0
        %v649 = vadd.f32 0.0, %v648
        %v650 = vpop.f32.mrb[0].mxu0
        %v651 = vadd.f32 0.0, %v650
        %v652 = vpop.f32.mrb[0].mxu0
        %v653 = vpop.f32.mrb[0].mxu0
        %654 = vdwg.mxu0
        %v655 = vadd.f32 %v586, %v649
        %v656 = vadd.f32 %v588, %v651
        %657 = vrot.lane.b32.xlu0 %v461, 1
        %v658 = vpop.permute.xlu0 %657
        %659 = vrot.lane.b32.xlu0 %v462, 1
        %v660 = vpop.permute.xlu0 %659
        %vm661 = vcmp.lt.s32.totalorder %v468, 1
        %v662 = vsel %vm661, %v658, %v660
        %v663 = vsel %vm661, %v660, %v658
        %v664 = vmul.f32 %v663, %v402
        %v665 = vmul.f32 %v662, %v406
        %s666 = scalar_lea.vmem %s2, 12
        %v667 = vld [vmem:[%s666] sm:$0xf]
        %v668 = vpack.c.bf16 %v664, %v664
        %v669 = vpack.c.bf16 %v665, %v665
        %v671 = vsel %vm490, %v667, 0
        %v674 = vsel %vm494, %v668, 0
        %v677 = vsel %vm494, %v669, 0
        %679 = vmatprep.subr.bf16.mxu0 %v677
        %680 = vmatpush1.bf16.msra.mxu0 %v674
        %681 = vmatprep.subr.bf16.mxu0 0
        %682 = vmatpush1.bf16.msra.mxu0 0
        %683 = vmatprep.subr.bf16.mxu0 0
        %684 = vmatpush1.bf16.msra.mxu0 0
        %685 = vmatprep.subr.bf16.mxu0 0
        %686 = vmatpush1.bf16.msra.mxu0 0
        %687 = vmatprep.subr.bf16.mxu0 0
        %688 = vmatpush1.bf16.msra.mxu0 0
        %689 = vmatprep.subr.bf16.mxu0 0
        %690 = vmatpush1.bf16.msra.mxu0 0
        %691 = vmatprep.subr.bf16.mxu0 0
        %692 = vmatpush1.bf16.msra.mxu0 0
        %693 = vmatprep.subr.bf16.mxu0 0
        %694 = vmatpush1.bf16.msra.mxu0 0
        %695 = vmatprep.subr.bf16.mxu0 0
        %696 = vmatpush1.bf16.msra.mxu0 0
        %697 = vmatprep.subr.bf16.mxu0 0
        %698 = vmatpush1.bf16.msra.mxu0 0
        %699 = vmatprep.subr.bf16.mxu0 0
        %700 = vmatpush1.bf16.msra.mxu0 0
        %701 = vmatprep.subr.bf16.mxu0 0
        %702 = vmatpush1.bf16.msra.mxu0 0
        %703 = vmatprep.subr.bf16.mxu0 0
        %704 = vmatpush1.bf16.msra.mxu0 0
        %705 = vmatprep.subr.bf16.mxu0 0
        %706 = vmatpush1.bf16.msra.mxu0 0
        %707 = vmatprep.subr.bf16.mxu0 0
        %708 = vmatpush1.bf16.msra.mxu0 0
        %709 = vmatprep.subr.bf16.mxu0 0
        %710 = vmatpush1.bf16.msra.mxu0 0
        %711 = vmatprep.mubr.bf16.mxu0 0
        %712 = vmatmul.mubr.bf16.gmra.mrb[0].mxu0 %v671
        %v713 = vpop.f32.mrb[0].mxu0
        %v714 = vadd.f32 0.0, %v713
        %v715 = vpop.f32.mrb[0].mxu0
        %v716 = vadd.f32 0.0, %v715
        %v717 = vpop.f32.mrb[0].mxu0
        %v718 = vpop.f32.mrb[0].mxu0
        %719 = vdwg.mxu0
        %v720 = vadd.f32 %v655, %v714
        %v721 = vadd.f32 %v656, %v716
        %s722 = scalar_lea.vmem %s2, 16
        %v723 = vld [vmem:[%s722] sm:$0xf]
        %v724 = vpack.c.bf16 %v461, %v461
        %v725 = vpack.c.bf16 %v462, %v462
        %v727 = vsel %vm490, %v723, 0
        %v730 = vsel %vm494, %v724, 0
        %v733 = vsel %vm494, %v725, 0
        %735 = vmatprep.subr.bf16.mxu0 %v733
        %736 = vmatpush1.bf16.msra.mxu0 %v730
        %737 = vmatprep.subr.bf16.mxu0 0
        %738 = vmatpush1.bf16.msra.mxu0 0
        %739 = vmatprep.subr.bf16.mxu0 0
        %740 = vmatpush1.bf16.msra.mxu0 0
        %741 = vmatprep.subr.bf16.mxu0 0
        %742 = vmatpush1.bf16.msra.mxu0 0
        %743 = vmatprep.subr.bf16.mxu0 0
        %744 = vmatpush1.bf16.msra.mxu0 0
        %745 = vmatprep.subr.bf16.mxu0 0
        %746 = vmatpush1.bf16.msra.mxu0 0
        %747 = vmatprep.subr.bf16.mxu0 0
        %748 = vmatpush1.bf16.msra.mxu0 0
        %749 = vmatprep.subr.bf16.mxu0 0
        %750 = vmatpush1.bf16.msra.mxu0 0
        %751 = vmatprep.subr.bf16.mxu0 0
        %752 = vmatpush1.bf16.msra.mxu0 0
        %753 = vmatprep.subr.bf16.mxu0 0
        %754 = vmatpush1.bf16.msra.mxu0 0
        %755 = vmatprep.subr.bf16.mxu0 0
        %756 = vmatpush1.bf16.msra.mxu0 0
        %757 = vmatprep.subr.bf16.mxu0 0
        %758 = vmatpush1.bf16.msra.mxu0 0
        %759 = vmatprep.subr.bf16.mxu0 0
        %760 = vmatpush1.bf16.msra.mxu0 0
        %761 = vmatprep.subr.bf16.mxu0 0
        %762 = vmatpush1.bf16.msra.mxu0 0
        %763 = vmatprep.subr.bf16.mxu0 0
        %764 = vmatpush1.bf16.msra.mxu0 0
        %765 = vmatprep.subr.bf16.mxu0 0
        %766 = vmatpush1.bf16.msra.mxu0 0
        %767 = vmatprep.mubr.bf16.mxu0 0
        %768 = vmatmul.mubr.bf16.gmra.mrb[0].mxu0 %v727
        %v769 = vpop.f32.mrb[0].mxu0
        %v770 = vadd.f32 0.0, %v769
        %v771 = vpop.f32.mrb[0].mxu0
        %v772 = vadd.f32 0.0, %v771
        %v773 = vpop.f32.mrb[0].mxu0
        %v774 = vpop.f32.mrb[0].mxu0
        %775 = vdwg.mxu0
        %v776 = vadd.f32 %v720, %v770
        %v777 = vadd.f32 %v721, %v772
        %778 = vrot.lane.b32.xlu0 %v461, 127
        %v779 = vpop.permute.xlu0 %778
        %780 = vrot.lane.b32.xlu0 %v462, 127
        %v781 = vpop.permute.xlu0 %780
        %vm782 = vcmp.lt.s32.totalorder %v468, 127
        %v783 = vsel %vm782, %v779, %v781
        %v784 = vsel %vm782, %v781, %v779
        %v785 = vmul.f32 %v783, %v415
        %v786 = vmul.f32 %v784, %v419
        %s787 = scalar_lea.vmem %s2, 20
        %v788 = vld [vmem:[%s787] sm:$0xf]
        %v789 = vpack.c.bf16 %v785, %v785
        %v790 = vpack.c.bf16 %v786, %v786
        %v792 = vsel %vm490, %v788, 0
        %v795 = vsel %vm494, %v789, 0
        %v798 = vsel %vm494, %v790, 0
        %800 = vmatprep.subr.bf16.mxu0 %v798
        %801 = vmatpush1.bf16.msra.mxu0 %v795
        %802 = vmatprep.subr.bf16.mxu0 0
        %803 = vmatpush1.bf16.msra.mxu0 0
        %804 = vmatprep.subr.bf16.mxu0 0
        %805 = vmatpush1.bf16.msra.mxu0 0
        %806 = vmatprep.subr.bf16.mxu0 0
        %807 = vmatpush1.bf16.msra.mxu0 0
        %808 = vmatprep.subr.bf16.mxu0 0
        %809 = vmatpush1.bf16.msra.mxu0 0
        %810 = vmatprep.subr.bf16.mxu0 0
        %811 = vmatpush1.bf16.msra.mxu0 0
        %812 = vmatprep.subr.bf16.mxu0 0
        %813 = vmatpush1.bf16.msra.mxu0 0
        %814 = vmatprep.subr.bf16.mxu0 0
        %815 = vmatpush1.bf16.msra.mxu0 0
        %816 = vmatprep.subr.bf16.mxu0 0
        %817 = vmatpush1.bf16.msra.mxu0 0
        %818 = vmatprep.subr.bf16.mxu0 0
        %819 = vmatpush1.bf16.msra.mxu0 0
        %820 = vmatprep.subr.bf16.mxu0 0
        %821 = vmatpush1.bf16.msra.mxu0 0
        %822 = vmatprep.subr.bf16.mxu0 0
        %823 = vmatpush1.bf16.msra.mxu0 0
        %824 = vmatprep.subr.bf16.mxu0 0
        %825 = vmatpush1.bf16.msra.mxu0 0
        %826 = vmatprep.subr.bf16.mxu0 0
        %827 = vmatpush1.bf16.msra.mxu0 0
        %828 = vmatprep.subr.bf16.mxu0 0
        %829 = vmatpush1.bf16.msra.mxu0 0
        %830 = vmatprep.subr.bf16.mxu0 0
        %831 = vmatpush1.bf16.msra.mxu0 0
        %832 = vmatprep.mubr.bf16.mxu0 0
        %833 = vmatmul.mubr.bf16.gmra.mrb[0].mxu0 %v792
        %v834 = vpop.f32.mrb[0].mxu0
        %v835 = vadd.f32 0.0, %v834
        %v836 = vpop.f32.mrb[0].mxu0
        %v837 = vadd.f32 0.0, %v836
        %v838 = vpop.f32.mrb[0].mxu0
        %v839 = vpop.f32.mrb[0].mxu0
        %840 = vdwg.mxu0
        %v841 = vadd.f32 %v776, %v835
        %v842 = vadd.f32 %v777, %v837
        %843 = vrot.lane.b32.xlu0 %v461, 113
        %v844 = vpop.permute.xlu0 %843
        %845 = vrot.lane.b32.xlu0 %v462, 113
        %v846 = vpop.permute.xlu0 %845
        %vm847 = vcmp.lt.s32.totalorder %v468, 113
        %v848 = vsel %vm847, %v844, %v846
        %v849 = vsel %vm847, %v846, %v844
        %v850 = vmul.f32 %v848, %v428
        %v851 = vmul.f32 %v849, %v432
        %s852 = scalar_lea.vmem %s2, 24
        %v853 = vld [vmem:[%s852] sm:$0xf]
        %v854 = vpack.c.bf16 %v850, %v850
        %v855 = vpack.c.bf16 %v851, %v851
        %v857 = vsel %vm490, %v853, 0
        %v860 = vsel %vm494, %v854, 0
        %v863 = vsel %vm494, %v855, 0
        %865 = vmatprep.subr.bf16.mxu0 %v863
        %866 = vmatpush1.bf16.msra.mxu0 %v860
        %867 = vmatprep.subr.bf16.mxu0 0
        %868 = vmatpush1.bf16.msra.mxu0 0
        %869 = vmatprep.subr.bf16.mxu0 0
        %870 = vmatpush1.bf16.msra.mxu0 0
        %871 = vmatprep.subr.bf16.mxu0 0
        %872 = vmatpush1.bf16.msra.mxu0 0
        %873 = vmatprep.subr.bf16.mxu0 0
        %874 = vmatpush1.bf16.msra.mxu0 0
        %875 = vmatprep.subr.bf16.mxu0 0
        %876 = vmatpush1.bf16.msra.mxu0 0
        %877 = vmatprep.subr.bf16.mxu0 0
        %878 = vmatpush1.bf16.msra.mxu0 0
        %879 = vmatprep.subr.bf16.mxu0 0
        %880 = vmatpush1.bf16.msra.mxu0 0
        %881 = vmatprep.subr.bf16.mxu0 0
        %882 = vmatpush1.bf16.msra.mxu0 0
        %883 = vmatprep.subr.bf16.mxu0 0
        %884 = vmatpush1.bf16.msra.mxu0 0
        %885 = vmatprep.subr.bf16.mxu0 0
        %886 = vmatpush1.bf16.msra.mxu0 0
        %887 = vmatprep.subr.bf16.mxu0 0
        %888 = vmatpush1.bf16.msra.mxu0 0
        %889 = vmatprep.subr.bf16.mxu0 0
        %890 = vmatpush1.bf16.msra.mxu0 0
        %891 = vmatprep.subr.bf16.mxu0 0
        %892 = vmatpush1.bf16.msra.mxu0 0
        %893 = vmatprep.subr.bf16.mxu0 0
        %894 = vmatpush1.bf16.msra.mxu0 0
        %895 = vmatprep.subr.bf16.mxu0 0
        %896 = vmatpush1.bf16.msra.mxu0 0
        %897 = vmatprep.mubr.bf16.mxu0 0
        %898 = vmatmul.mubr.bf16.gmra.mrb[0].mxu0 %v857
        %v899 = vpop.f32.mrb[0].mxu0
        %v900 = vadd.f32 0.0, %v899
        %v901 = vpop.f32.mrb[0].mxu0
        %v902 = vadd.f32 0.0, %v901
        %v903 = vpop.f32.mrb[0].mxu0
        %v904 = vpop.f32.mrb[0].mxu0
        %905 = vdwg.mxu0
        %v906 = vadd.f32 %v841, %v900
        %v907 = vadd.f32 %v842, %v902
        %908 = vrot.lane.b32.xlu0 %v461, 112
        %v909 = vpop.permute.xlu0 %908
        %910 = vrot.lane.b32.xlu0 %v462, 112
        %v911 = vpop.permute.xlu0 %910
        %vm912 = vcmp.lt.s32.totalorder %v468, 112
        %v913 = vsel %vm912, %v909, %v911
        %v914 = vsel %vm912, %v911, %v909
        %v915 = vmul.f32 %v913, %v441
        %v916 = vmul.f32 %v914, %v445
        %s917 = scalar_lea.vmem %s2, 28
        %v918 = vld [vmem:[%s917] sm:$0xf]
        %v919 = vpack.c.bf16 %v915, %v915
        %v920 = vpack.c.bf16 %v916, %v916
        %v922 = vsel %vm490, %v918, 0
        %v925 = vsel %vm494, %v919, 0
        %v928 = vsel %vm494, %v920, 0
        %930 = vmatprep.subr.bf16.mxu0 %v928
        %931 = vmatpush1.bf16.msra.mxu0 %v925
        %932 = vmatprep.subr.bf16.mxu0 0
        %933 = vmatpush1.bf16.msra.mxu0 0
        %934 = vmatprep.subr.bf16.mxu0 0
        %935 = vmatpush1.bf16.msra.mxu0 0
        %936 = vmatprep.subr.bf16.mxu0 0
        %937 = vmatpush1.bf16.msra.mxu0 0
        %938 = vmatprep.subr.bf16.mxu0 0
        %939 = vmatpush1.bf16.msra.mxu0 0
        %940 = vmatprep.subr.bf16.mxu0 0
        %941 = vmatpush1.bf16.msra.mxu0 0
        %942 = vmatprep.subr.bf16.mxu0 0
        %943 = vmatpush1.bf16.msra.mxu0 0
        %944 = vmatprep.subr.bf16.mxu0 0
        %945 = vmatpush1.bf16.msra.mxu0 0
        %946 = vmatprep.subr.bf16.mxu0 0
        %947 = vmatpush1.bf16.msra.mxu0 0
        %948 = vmatprep.subr.bf16.mxu0 0
        %949 = vmatpush1.bf16.msra.mxu0 0
        %950 = vmatprep.subr.bf16.mxu0 0
        %951 = vmatpush1.bf16.msra.mxu0 0
        %952 = vmatprep.subr.bf16.mxu0 0
        %953 = vmatpush1.bf16.msra.mxu0 0
        %954 = vmatprep.subr.bf16.mxu0 0
        %955 = vmatpush1.bf16.msra.mxu0 0
        %956 = vmatprep.subr.bf16.mxu0 0
        %957 = vmatpush1.bf16.msra.mxu0 0
        %958 = vmatprep.subr.bf16.mxu0 0
        %959 = vmatpush1.bf16.msra.mxu0 0
        %960 = vmatprep.subr.bf16.mxu0 0
        %961 = vmatpush1.bf16.msra.mxu0 0
        %962 = vmatprep.mubr.bf16.mxu0 0
        %963 = vmatmul.mubr.bf16.gmra.mrb[0].mxu0 %v922
        %v964 = vpop.f32.mrb[0].mxu0
        %v965 = vadd.f32 0.0, %v964
        %v966 = vpop.f32.mrb[0].mxu0
        %v967 = vadd.f32 0.0, %v966
        %v968 = vpop.f32.mrb[0].mxu0
        %v969 = vpop.f32.mrb[0].mxu0
        %970 = vdwg.mxu0
        %v971 = vadd.f32 %v906, %v965
        %v972 = vadd.f32 %v907, %v967
        %973 = vrot.lane.b32.xlu0 %v461, 111
        %v974 = vpop.permute.xlu0 %973
        %975 = vrot.lane.b32.xlu0 %v462, 111
        %v976 = vpop.permute.xlu0 %975
        %vm977 = vcmp.lt.s32.totalorder %v468, 111
        %v978 = vsel %vm977, %v974, %v976
        %v979 = vsel %vm977, %v976, %v974
        %v980 = vmul.f32 %v978, %v454
        %v981 = vmul.f32 %v979, %v458
        %s982 = scalar_lea.vmem %s2, 32
        %v983 = vld [vmem:[%s982] sm:$0xf]
        %v984 = vpack.c.bf16 %v980, %v980
        %v985 = vpack.c.bf16 %v981, %v981
        %v987 = vsel %vm490, %v983, 0
        %v990 = vsel %vm494, %v984, 0
        %v993 = vsel %vm494, %v985, 0
        %995 = vmatprep.subr.bf16.mxu0 %v993
        %996 = vmatpush1.bf16.msra.mxu0 %v990
        %997 = vmatprep.subr.bf16.mxu0 0
        %998 = vmatpush1.bf16.msra.mxu0 0
        %999 = vmatprep.subr.bf16.mxu0 0
        %1000 = vmatpush1.bf16.msra.mxu0 0
        %1001 = vmatprep.subr.bf16.mxu0 0
        %1002 = vmatpush1.bf16.msra.mxu0 0
        %1003 = vmatprep.subr.bf16.mxu0 0
        %1004 = vmatpush1.bf16.msra.mxu0 0
        %1005 = vmatprep.subr.bf16.mxu0 0
        %1006 = vmatpush1.bf16.msra.mxu0 0
        %1007 = vmatprep.subr.bf16.mxu0 0
        %1008 = vmatpush1.bf16.msra.mxu0 0
        %1009 = vmatprep.subr.bf16.mxu0 0
        %1010 = vmatpush1.bf16.msra.mxu0 0
        %1011 = vmatprep.subr.bf16.mxu0 0
        %1012 = vmatpush1.bf16.msra.mxu0 0
        %1013 = vmatprep.subr.bf16.mxu0 0
        %1014 = vmatpush1.bf16.msra.mxu0 0
        %1015 = vmatprep.subr.bf16.mxu0 0
        %1016 = vmatpush1.bf16.msra.mxu0 0
        %1017 = vmatprep.subr.bf16.mxu0 0
        %1018 = vmatpush1.bf16.msra.mxu0 0
        %1019 = vmatprep.subr.bf16.mxu0 0
        %1020 = vmatpush1.bf16.msra.mxu0 0
        %1021 = vmatprep.subr.bf16.mxu0 0
        %1022 = vmatpush1.bf16.msra.mxu0 0
        %1023 = vmatprep.subr.bf16.mxu0 0
        %1024 = vmatpush1.bf16.msra.mxu0 0
        %1025 = vmatprep.subr.bf16.mxu0 0
        %1026 = vmatpush1.bf16.msra.mxu0 0
        %1027 = vmatprep.mubr.bf16.mxu0 0
        %1028 = vmatmul.mubr.bf16.gmra.mrb[0].mxu0 %v987
        %v1029 = vpop.f32.mrb[0].mxu0
        %v1030 = vadd.f32 0.0, %v1029
        %v1031 = vpop.f32.mrb[0].mxu0
        %v1032 = vadd.f32 0.0, %v1031
        %v1033 = vpop.f32.mrb[0].mxu0
        %v1034 = vpop.f32.mrb[0].mxu0
        %1035 = vdwg.mxu0
        %v1036 = vadd.f32 %v971, %v1030
        %v1037 = vadd.f32 %v972, %v1032
        %v1038 = vld [vmem:[%s3] sm:$0xff]
        %1040 = vset.pattern.permute.xlu0 0
        %1041 = vperm.xlu0 %1040, %v1038
        %v1042 = vpop.permute.xlu0 %1041
        %v1044 = vadd.f32 %v1036, %v1042
        %v1045 = vadd.f32 %v1037, %v1042
        %v1046 = vmax.f32 %v1044, 0.0
        %v1047 = vmax.f32 %v1045, 0.0
        %1048 = vrot.lane.b32.xlu0 %v1046, 17
        %v1049 = vpop.permute.xlu0 %1048
        %1050 = vrot.lane.b32.xlu0 %v1047, 17
        %v1051 = vpop.permute.xlu0 %1050
        %v1052 = vsel %vm469, %v1049, %v1051
        %v1053 = vsel %vm469, %v1051, %v1049
        %v1054 = vmul.f32 %v1053, %v363
        %v1055 = vmul.f32 %v1052, %v367
        %v1056 = vld [vmem:[%s4] sm:$0xf]
        %v1057 = vld [vmem:[%s4 + $0x4] sm:$0xf]
        %v1058 = vpack.c.bf16 %v1054, %v1054
        %v1059 = vpack.c.bf16 %v1055, %v1055
        %1060 = vrot.lane.b32.xlu0 %v1046, 16
        %v1061 = vpop.permute.xlu0 %1060
        %1062 = vrot.lane.b32.xlu0 %v1047, 16
        %v1063 = vpop.permute.xlu0 %1062
        %v1064 = vsel %vm481, %v1061, %v1063
        %v1065 = vsel %vm481, %v1063, %v1061
        %v1066 = vmul.f32 %v1065, %v376
        %v1067 = vmul.f32 %v1064, %v380
        %s1068 = scalar_lea.vmem %s4, 8
        %v1069 = vld [vmem:[%s1068] sm:$0xf]
        %v1070 = vld [vmem:[%s1068 + $0x4] sm:$0xf]
        %v1071 = vpack.c.bf16 %v1066, %v1066
        %v1072 = vpack.c.bf16 %v1067, %v1067
        %v1075 = vunpack.c.l.b16 %v1069
        %v1076 = vunpack.c.l.b16 %v1070
        %v1077 = vpack.c.b16 %v1076, %v1075
        %v1079 = vsel %vm490, %v1077, 0
        %v1082 = vsel %vm494, %v1071, 0
        %v1085 = vsel %vm494, %v1072, 0
        %1087 = vmatprep.subr.bf16.mxu0 %v1085
        %1088 = vmatpush1.bf16.msra.mxu0 %v1082
        %1089 = vmatprep.subr.bf16.mxu0 0
        %1090 = vmatpush1.bf16.msra.mxu0 0
        %1091 = vmatprep.subr.bf16.mxu0 0
        %1092 = vmatpush1.bf16.msra.mxu0 0
        %1093 = vmatprep.subr.bf16.mxu0 0
        %1094 = vmatpush1.bf16.msra.mxu0 0
        %1095 = vmatprep.subr.bf16.mxu0 0
        %1096 = vmatpush1.bf16.msra.mxu0 0
        %1097 = vmatprep.subr.bf16.mxu0 0
        %1098 = vmatpush1.bf16.msra.mxu0 0
        %1099 = vmatprep.subr.bf16.mxu0 0
        %1100 = vmatpush1.bf16.msra.mxu0 0
        %1101 = vmatprep.subr.bf16.mxu0 0
        %1102 = vmatpush1.bf16.msra.mxu0 0
        %1103 = vmatprep.subr.bf16.mxu0 0
        %1104 = vmatpush1.bf16.msra.mxu0 0
        %1105 = vmatprep.subr.bf16.mxu0 0
        %1106 = vmatpush1.bf16.msra.mxu0 0
        %1107 = vmatprep.subr.bf16.mxu0 0
        %1108 = vmatpush1.bf16.msra.mxu0 0
        %1109 = vmatprep.subr.bf16.mxu0 0
        %1110 = vmatpush1.bf16.msra.mxu0 0
        %1111 = vmatprep.subr.bf16.mxu0 0
        %1112 = vmatpush1.bf16.msra.mxu0 0
        %1113 = vmatprep.subr.bf16.mxu0 0
        %1114 = vmatpush1.bf16.msra.mxu0 0
        %1115 = vmatprep.subr.bf16.mxu0 0
        %1116 = vmatpush1.bf16.msra.mxu0 0
        %1117 = vmatprep.subr.bf16.mxu0 0
        %1118 = vmatpush1.bf16.msra.mxu0 0
        %1119 = vmatprep.mubr.bf16.mxu0 0
        %1120 = vmatmul.mubr.bf16.gmra.mrb[0].mxu0 %v1079
        %v1121 = vpop.f32.mrb[0].mxu0
        %v1122 = vadd.f32 0.0, %v1121
        %v1123 = vpop.f32.mrb[0].mxu0
        %v1124 = vadd.f32 0.0, %v1123
        %v1125 = vpop.f32.mrb[0].mxu0
        %v1126 = vadd.f32 0.0, %v1125
        %v1127 = vpop.f32.mrb[0].mxu0
        %v1128 = vadd.f32 0.0, %v1127
        %1129 = vdwg.mxu0
        %v1132 = vunpack.c.l.b16 %v1056
        %v1133 = vunpack.c.l.b16 %v1057
        %v1134 = vpack.c.b16 %v1133, %v1132
        %v1136 = vsel %vm490, %v1134, 0
        %v1139 = vsel %vm494, %v1058, 0
        %v1142 = vsel %vm494, %v1059, 0
        %1144 = vmatprep.subr.bf16.mxu0 %v1142
        %1145 = vmatpush1.bf16.msra.mxu0 %v1139
        %1146 = vmatprep.subr.bf16.mxu0 0
        %1147 = vmatpush1.bf16.msra.mxu0 0
        %1148 = vmatprep.subr.bf16.mxu0 0
        %1149 = vmatpush1.bf16.msra.mxu0 0
        %1150 = vmatprep.subr.bf16.mxu0 0
        %1151 = vmatpush1.bf16.msra.mxu0 0
        %1152 = vmatprep.subr.bf16.mxu0 0
        %1153 = vmatpush1.bf16.msra.mxu0 0
        %1154 = vmatprep.subr.bf16.mxu0 0
        %1155 = vmatpush1.bf16.msra.mxu0 0
        %1156 = vmatprep.subr.bf16.mxu0 0
        %1157 = vmatpush1.bf16.msra.mxu0 0
        %1158 = vmatprep.subr.bf16.mxu0 0
        %1159 = vmatpush1.bf16.msra.mxu0 0
        %1160 = vmatprep.subr.bf16.mxu0 0
        %1161 = vmatpush1.bf16.msra.mxu0 0
        %1162 = vmatprep.subr.bf16.mxu0 0
        %1163 = vmatpush1.bf16.msra.mxu0 0
        %1164 = vmatprep.subr.bf16.mxu0 0
        %1165 = vmatpush1.bf16.msra.mxu0 0
        %1166 = vmatprep.subr.bf16.mxu0 0
        %1167 = vmatpush1.bf16.msra.mxu0 0
        %1168 = vmatprep.subr.bf16.mxu0 0
        %1169 = vmatpush1.bf16.msra.mxu0 0
        %1170 = vmatprep.subr.bf16.mxu0 0
        %1171 = vmatpush1.bf16.msra.mxu0 0
        %1172 = vmatprep.subr.bf16.mxu0 0
        %1173 = vmatpush1.bf16.msra.mxu0 0
        %1174 = vmatprep.subr.bf16.mxu0 0
        %1175 = vmatpush1.bf16.msra.mxu0 0
        %1176 = vmatprep.mubr.bf16.mxu0 0
        %1177 = vmatmul.mubr.bf16.gmra.mrb[0].mxu0 %v1136
        %v1178 = vpop.f32.mrb[0].mxu0
        %v1179 = vadd.f32 %v1122, %v1178
        %v1180 = vpop.f32.mrb[0].mxu0
        %v1181 = vadd.f32 %v1124, %v1180
        %v1182 = vpop.f32.mrb[0].mxu0
        %v1183 = vadd.f32 %v1126, %v1182
        %v1184 = vpop.f32.mrb[0].mxu0
        %v1185 = vadd.f32 %v1128, %v1184
        %1186 = vdwg.mxu0
        %1187 = vrot.lane.b32.xlu0 %v1046, 15
        %v1188 = vpop.permute.xlu0 %1187
        %1189 = vrot.lane.b32.xlu0 %v1047, 15
        %v1190 = vpop.permute.xlu0 %1189
        %v1191 = vsel %vm596, %v1188, %v1190
        %v1192 = vsel %vm596, %v1190, %v1188
        %v1193 = vmul.f32 %v1192, %v389
        %v1194 = vmul.f32 %v1191, %v393
        %s1195 = scalar_lea.vmem %s4, 16
        %v1196 = vld [vmem:[%s1195] sm:$0xf]
        %v1197 = vld [vmem:[%s1195 + $0x4] sm:$0xf]
        %v1198 = vpack.c.bf16 %v1193, %v1193
        %v1199 = vpack.c.bf16 %v1194, %v1194
        %v1202 = vunpack.c.l.b16 %v1196
        %v1203 = vunpack.c.l.b16 %v1197
        %v1204 = vpack.c.b16 %v1203, %v1202
        %v1206 = vsel %vm490, %v1204, 0
        %v1209 = vsel %vm494, %v1198, 0
        %v1212 = vsel %vm494, %v1199, 0
        %1214 = vmatprep.subr.bf16.mxu0 %v1212
        %1215 = vmatpush1.bf16.msra.mxu0 %v1209
        %1216 = vmatprep.subr.bf16.mxu0 0
        %1217 = vmatpush1.bf16.msra.mxu0 0
        %1218 = vmatprep.subr.bf16.mxu0 0
        %1219 = vmatpush1.bf16.msra.mxu0 0
        %1220 = vmatprep.subr.bf16.mxu0 0
        %1221 = vmatpush1.bf16.msra.mxu0 0
        %1222 = vmatprep.subr.bf16.mxu0 0
        %1223 = vmatpush1.bf16.msra.mxu0 0
        %1224 = vmatprep.subr.bf16.mxu0 0
        %1225 = vmatpush1.bf16.msra.mxu0 0
        %1226 = vmatprep.subr.bf16.mxu0 0
        %1227 = vmatpush1.bf16.msra.mxu0 0
        %1228 = vmatprep.subr.bf16.mxu0 0
        %1229 = vmatpush1.bf16.msra.mxu0 0
        %1230 = vmatprep.subr.bf16.mxu0 0
        %1231 = vmatpush1.bf16.msra.mxu0 0
        %1232 = vmatprep.subr.bf16.mxu0 0
        %1233 = vmatpush1.bf16.msra.mxu0 0
        %1234 = vmatprep.subr.bf16.mxu0 0
        %1235 = vmatpush1.bf16.msra.mxu0 0
        %1236 = vmatprep.subr.bf16.mxu0 0
        %1237 = vmatpush1.bf16.msra.mxu0 0
        %1238 = vmatprep.subr.bf16.mxu0 0
        %1239 = vmatpush1.bf16.msra.mxu0 0
        %1240 = vmatprep.subr.bf16.mxu0 0
        %1241 = vmatpush1.bf16.msra.mxu0 0
        %1242 = vmatprep.subr.bf16.mxu0 0
        %1243 = vmatpush1.bf16.msra.mxu0 0
        %1244 = vmatprep.subr.bf16.mxu0 0
        %1245 = vmatpush1.bf16.msra.mxu0 0
        %1246 = vmatprep.mubr.bf16.mxu0 0
        %1247 = vmatmul.mubr.bf16.gmra.mrb[0].mxu0 %v1206
        %v1248 = vpop.f32.mrb[0].mxu0
        %v1249 = vadd.f32 0.0, %v1248
        %v1250 = vpop.f32.mrb[0].mxu0
        %v1251 = vadd.f32 0.0, %v1250
        %v1252 = vpop.f32.mrb[0].mxu0
        %v1253 = vadd.f32 0.0, %v1252
        %v1254 = vpop.f32.mrb[0].mxu0
        %v1255 = vadd.f32 0.0, %v1254
        %1256 = vdwg.mxu0
        %v1257 = vadd.f32 %v1179, %v1249
        %v1258 = vadd.f32 %v1181, %v1251
        %v1259 = vadd.f32 %v1183, %v1253
        %v1260 = vadd.f32 %v1185, %v1255
        %1261 = vrot.lane.b32.xlu0 %v1046, 1
        %v1262 = vpop.permute.xlu0 %1261
        %1263 = vrot.lane.b32.xlu0 %v1047, 1
        %v1264 = vpop.permute.xlu0 %1263
        %v1265 = vsel %vm661, %v1262, %v1264
        %v1266 = vsel %vm661, %v1264, %v1262
        %v1267 = vmul.f32 %v1266, %v402
        %v1268 = vmul.f32 %v1265, %v406
        %s1269 = scalar_lea.vmem %s4, 24
        %v1270 = vld [vmem:[%s1269] sm:$0xf]
        %v1271 = vld [vmem:[%s1269 + $0x4] sm:$0xf]
        %v1272 = vpack.c.bf16 %v1267, %v1267
        %v1273 = vpack.c.bf16 %v1268, %v1268
        %v1276 = vunpack.c.l.b16 %v1270
        %v1277 = vunpack.c.l.b16 %v1271
        %v1278 = vpack.c.b16 %v1277, %v1276
        %v1280 = vsel %vm490, %v1278, 0
        %v1283 = vsel %vm494, %v1272, 0
        %v1286 = vsel %vm494, %v1273, 0
        %1288 = vmatprep.subr.bf16.mxu0 %v1286
        %1289 = vmatpush1.bf16.msra.mxu0 %v1283
        %1290 = vmatprep.subr.bf16.mxu0 0
        %1291 = vmatpush1.bf16.msra.mxu0 0
        %1292 = vmatprep.subr.bf16.mxu0 0
        %1293 = vmatpush1.bf16.msra.mxu0 0
        %1294 = vmatprep.subr.bf16.mxu0 0
        %1295 = vmatpush1.bf16.msra.mxu0 0
        %1296 = vmatprep.subr.bf16.mxu0 0
        %1297 = vmatpush1.bf16.msra.mxu0 0
        %1298 = vmatprep.subr.bf16.mxu0 0
        %1299 = vmatpush1.bf16.msra.mxu0 0
        %1300 = vmatprep.subr.bf16.mxu0 0
        %1301 = vmatpush1.bf16.msra.mxu0 0
        %1302 = vmatprep.subr.bf16.mxu0 0
        %1303 = vmatpush1.bf16.msra.mxu0 0
        %1304 = vmatprep.subr.bf16.mxu0 0
        %1305 = vmatpush1.bf16.msra.mxu0 0
        %1306 = vmatprep.subr.bf16.mxu0 0
        %1307 = vmatpush1.bf16.msra.mxu0 0
        %1308 = vmatprep.subr.bf16.mxu0 0
        %1309 = vmatpush1.bf16.msra.mxu0 0
        %1310 = vmatprep.subr.bf16.mxu0 0
        %1311 = vmatpush1.bf16.msra.mxu0 0
        %1312 = vmatprep.subr.bf16.mxu0 0
        %1313 = vmatpush1.bf16.msra.mxu0 0
        %1314 = vmatprep.subr.bf16.mxu0 0
        %1315 = vmatpush1.bf16.msra.mxu0 0
        %1316 = vmatprep.subr.bf16.mxu0 0
        %1317 = vmatpush1.bf16.msra.mxu0 0
        %1318 = vmatprep.subr.bf16.mxu0 0
        %1319 = vmatpush1.bf16.msra.mxu0 0
        %1320 = vmatprep.mubr.bf16.mxu0 0
        %1321 = vmatmul.mubr.bf16.gmra.mrb[0].mxu0 %v1280
        %v1322 = vpop.f32.mrb[0].mxu0
        %v1323 = vadd.f32 0.0, %v1322
        %v1324 = vpop.f32.mrb[0].mxu0
        %v1325 = vadd.f32 0.0, %v1324
        %v1326 = vpop.f32.mrb[0].mxu0
        %v1327 = vadd.f32 0.0, %v1326
        %v1328 = vpop.f32.mrb[0].mxu0
        %v1329 = vadd.f32 0.0, %v1328
        %1330 = vdwg.mxu0
        %v1331 = vadd.f32 %v1257, %v1323
        %v1332 = vadd.f32 %v1258, %v1325
        %v1333 = vadd.f32 %v1259, %v1327
        %v1334 = vadd.f32 %v1260, %v1329
        %s1335 = scalar_lea.vmem %s4, 32
        %v1336 = vld [vmem:[%s1335] sm:$0xf]
        %v1337 = vld [vmem:[%s1335 + $0x4] sm:$0xf]
        %v1338 = vpack.c.bf16 %v1046, %v1046
        %v1339 = vpack.c.bf16 %v1047, %v1047
        %v1342 = vunpack.c.l.b16 %v1336
        %v1343 = vunpack.c.l.b16 %v1337
        %v1344 = vpack.c.b16 %v1343, %v1342
        %v1346 = vsel %vm490, %v1344, 0
        %v1349 = vsel %vm494, %v1338, 0
        %v1352 = vsel %vm494, %v1339, 0
        %1354 = vmatprep.subr.bf16.mxu0 %v1352
        %1355 = vmatpush1.bf16.msra.mxu0 %v1349
        %1356 = vmatprep.subr.bf16.mxu0 0
        %1357 = vmatpush1.bf16.msra.mxu0 0
        %1358 = vmatprep.subr.bf16.mxu0 0
        %1359 = vmatpush1.bf16.msra.mxu0 0
        %1360 = vmatprep.subr.bf16.mxu0 0
        %1361 = vmatpush1.bf16.msra.mxu0 0
        %1362 = vmatprep.subr.bf16.mxu0 0
        %1363 = vmatpush1.bf16.msra.mxu0 0
        %1364 = vmatprep.subr.bf16.mxu0 0
        %1365 = vmatpush1.bf16.msra.mxu0 0
        %1366 = vmatprep.subr.bf16.mxu0 0
        %1367 = vmatpush1.bf16.msra.mxu0 0
        %1368 = vmatprep.subr.bf16.mxu0 0
        %1369 = vmatpush1.bf16.msra.mxu0 0
        %1370 = vmatprep.subr.bf16.mxu0 0
        %1371 = vmatpush1.bf16.msra.mxu0 0
        %1372 = vmatprep.subr.bf16.mxu0 0
        %1373 = vmatpush1.bf16.msra.mxu0 0
        %1374 = vmatprep.subr.bf16.mxu0 0
        %1375 = vmatpush1.bf16.msra.mxu0 0
        %1376 = vmatprep.subr.bf16.mxu0 0
        %1377 = vmatpush1.bf16.msra.mxu0 0
        %1378 = vmatprep.subr.bf16.mxu0 0
        %1379 = vmatpush1.bf16.msra.mxu0 0
        %1380 = vmatprep.subr.bf16.mxu0 0
        %1381 = vmatpush1.bf16.msra.mxu0 0
        %1382 = vmatprep.subr.bf16.mxu0 0
        %1383 = vmatpush1.bf16.msra.mxu0 0
        %1384 = vmatprep.subr.bf16.mxu0 0
        %1385 = vmatpush1.bf16.msra.mxu0 0
        %1386 = vmatprep.mubr.bf16.mxu0 0
        %1387 = vmatmul.mubr.bf16.gmra.mrb[0].mxu0 %v1346
        %v1388 = vpop.f32.mrb[0].mxu0
        %v1389 = vadd.f32 0.0, %v1388
        %v1390 = vpop.f32.mrb[0].mxu0
        %v1391 = vadd.f32 0.0, %v1390
        %v1392 = vpop.f32.mrb[0].mxu0
        %v1393 = vadd.f32 0.0, %v1392
        %v1394 = vpop.f32.mrb[0].mxu0
        %v1395 = vadd.f32 0.0, %v1394
        %1396 = vdwg.mxu0
        %v1397 = vadd.f32 %v1331, %v1389
        %v1398 = vadd.f32 %v1332, %v1391
        %v1399 = vadd.f32 %v1333, %v1393
        %v1400 = vadd.f32 %v1334, %v1395
        %1401 = vrot.lane.b32.xlu0 %v1046, 127
        %v1402 = vpop.permute.xlu0 %1401
        %1403 = vrot.lane.b32.xlu0 %v1047, 127
        %v1404 = vpop.permute.xlu0 %1403
        %v1405 = vsel %vm782, %v1402, %v1404
        %v1406 = vsel %vm782, %v1404, %v1402
        %v1407 = vmul.f32 %v1405, %v415
        %v1408 = vmul.f32 %v1406, %v419
        %s1409 = scalar_lea.vmem %s4, 40
        %v1410 = vld [vmem:[%s1409] sm:$0xf]
        %v1411 = vld [vmem:[%s1409 + $0x4] sm:$0xf]
        %v1412 = vpack.c.bf16 %v1407, %v1407
        %v1413 = vpack.c.bf16 %v1408, %v1408
        %v1416 = vunpack.c.l.b16 %v1410
        %v1417 = vunpack.c.l.b16 %v1411
        %v1418 = vpack.c.b16 %v1417, %v1416
        %v1420 = vsel %vm490, %v1418, 0
        %v1423 = vsel %vm494, %v1412, 0
        %v1426 = vsel %vm494, %v1413, 0
        %1428 = vmatprep.subr.bf16.mxu0 %v1426
        %1429 = vmatpush1.bf16.msra.mxu0 %v1423
        %1430 = vmatprep.subr.bf16.mxu0 0
        %1431 = vmatpush1.bf16.msra.mxu0 0
        %1432 = vmatprep.subr.bf16.mxu0 0
        %1433 = vmatpush1.bf16.msra.mxu0 0
        %1434 = vmatprep.subr.bf16.mxu0 0
        %1435 = vmatpush1.bf16.msra.mxu0 0
        %1436 = vmatprep.subr.bf16.mxu0 0
        %1437 = vmatpush1.bf16.msra.mxu0 0
        %1438 = vmatprep.subr.bf16.mxu0 0
        %1439 = vmatpush1.bf16.msra.mxu0 0
        %1440 = vmatprep.subr.bf16.mxu0 0
        %1441 = vmatpush1.bf16.msra.mxu0 0
        %1442 = vmatprep.subr.bf16.mxu0 0
        %1443 = vmatpush1.bf16.msra.mxu0 0
        %1444 = vmatprep.subr.bf16.mxu0 0
        %1445 = vmatpush1.bf16.msra.mxu0 0
        %1446 = vmatprep.subr.bf16.mxu0 0
        %1447 = vmatpush1.bf16.msra.mxu0 0
        %1448 = vmatprep.subr.bf16.mxu0 0
        %1449 = vmatpush1.bf16.msra.mxu0 0
        %1450 = vmatprep.subr.bf16.mxu0 0
        %1451 = vmatpush1.bf16.msra.mxu0 0
        %1452 = vmatprep.subr.bf16.mxu0 0
        %1453 = vmatpush1.bf16.msra.mxu0 0
        %1454 = vmatprep.subr.bf16.mxu0 0
        %1455 = vmatpush1.bf16.msra.mxu0 0
        %1456 = vmatprep.subr.bf16.mxu0 0
        %1457 = vmatpush1.bf16.msra.mxu0 0
        %1458 = vmatprep.subr.bf16.mxu0 0
        %1459 = vmatpush1.bf16.msra.mxu0 0
        %1460 = vmatprep.mubr.bf16.mxu0 0
        %1461 = vmatmul.mubr.bf16.gmra.mrb[0].mxu0 %v1420
        %v1462 = vpop.f32.mrb[0].mxu0
        %v1463 = vadd.f32 0.0, %v1462
        %v1464 = vpop.f32.mrb[0].mxu0
        %v1465 = vadd.f32 0.0, %v1464
        %v1466 = vpop.f32.mrb[0].mxu0
        %v1467 = vadd.f32 0.0, %v1466
        %v1468 = vpop.f32.mrb[0].mxu0
        %v1469 = vadd.f32 0.0, %v1468
        %1470 = vdwg.mxu0
        %v1471 = vadd.f32 %v1397, %v1463
        %v1472 = vadd.f32 %v1398, %v1465
        %v1473 = vadd.f32 %v1399, %v1467
        %v1474 = vadd.f32 %v1400, %v1469
        %1475 = vrot.lane.b32.xlu0 %v1046, 113
        %v1476 = vpop.permute.xlu0 %1475
        %1477 = vrot.lane.b32.xlu0 %v1047, 113
        %v1478 = vpop.permute.xlu0 %1477
        %v1479 = vsel %vm847, %v1476, %v1478
        %v1480 = vsel %vm847, %v1478, %v1476
        %v1481 = vmul.f32 %v1479, %v428
        %v1482 = vmul.f32 %v1480, %v432
        %s1483 = scalar_lea.vmem %s4, 48
        %v1484 = vld [vmem:[%s1483] sm:$0xf]
        %v1485 = vld [vmem:[%s1483 + $0x4] sm:$0xf]
        %v1486 = vpack.c.bf16 %v1481, %v1481
        %v1487 = vpack.c.bf16 %v1482, %v1482
        %v1490 = vunpack.c.l.b16 %v1484
        %v1491 = vunpack.c.l.b16 %v1485
        %v1492 = vpack.c.b16 %v1491, %v1490
        %v1494 = vsel %vm490, %v1492, 0
        %v1497 = vsel %vm494, %v1486, 0
        %v1500 = vsel %vm494, %v1487, 0
        %1502 = vmatprep.subr.bf16.mxu0 %v1500
        %1503 = vmatpush1.bf16.msra.mxu0 %v1497
        %1504 = vmatprep.subr.bf16.mxu0 0
        %1505 = vmatpush1.bf16.msra.mxu0 0
        %1506 = vmatprep.subr.bf16.mxu0 0
        %1507 = vmatpush1.bf16.msra.mxu0 0
        %1508 = vmatprep.subr.bf16.mxu0 0
        %1509 = vmatpush1.bf16.msra.mxu0 0
        %1510 = vmatprep.subr.bf16.mxu0 0
        %1511 = vmatpush1.bf16.msra.mxu0 0
        %1512 = vmatprep.subr.bf16.mxu0 0
        %1513 = vmatpush1.bf16.msra.mxu0 0
        %1514 = vmatprep.subr.bf16.mxu0 0
        %1515 = vmatpush1.bf16.msra.mxu0 0
        %1516 = vmatprep.subr.bf16.mxu0 0
        %1517 = vmatpush1.bf16.msra.mxu0 0
        %1518 = vmatprep.subr.bf16.mxu0 0
        %1519 = vmatpush1.bf16.msra.mxu0 0
        %1520 = vmatprep.subr.bf16.mxu0 0
        %1521 = vmatpush1.bf16.msra.mxu0 0
        %1522 = vmatprep.subr.bf16.mxu0 0
        %1523 = vmatpush1.bf16.msra.mxu0 0
        %1524 = vmatprep.subr.bf16.mxu0 0
        %1525 = vmatpush1.bf16.msra.mxu0 0
        %1526 = vmatprep.subr.bf16.mxu0 0
        %1527 = vmatpush1.bf16.msra.mxu0 0
        %1528 = vmatprep.subr.bf16.mxu0 0
        %1529 = vmatpush1.bf16.msra.mxu0 0
        %1530 = vmatprep.subr.bf16.mxu0 0
        %1531 = vmatpush1.bf16.msra.mxu0 0
        %1532 = vmatprep.subr.bf16.mxu0 0
        %1533 = vmatpush1.bf16.msra.mxu0 0
        %1534 = vmatprep.mubr.bf16.mxu0 0
        %1535 = vmatmul.mubr.bf16.gmra.mrb[0].mxu0 %v1494
        %v1536 = vpop.f32.mrb[0].mxu0
        %v1537 = vadd.f32 0.0, %v1536
        %v1538 = vpop.f32.mrb[0].mxu0
        %v1539 = vadd.f32 0.0, %v1538
        %v1540 = vpop.f32.mrb[0].mxu0
        %v1541 = vadd.f32 0.0, %v1540
        %v1542 = vpop.f32.mrb[0].mxu0
        %v1543 = vadd.f32 0.0, %v1542
        %1544 = vdwg.mxu0
        %v1545 = vadd.f32 %v1471, %v1537
        %v1546 = vadd.f32 %v1472, %v1539
        %v1547 = vadd.f32 %v1473, %v1541
        %v1548 = vadd.f32 %v1474, %v1543
        %1549 = vrot.lane.b32.xlu0 %v1046, 112
        %v1550 = vpop.permute.xlu0 %1549
        %1551 = vrot.lane.b32.xlu0 %v1047, 112
        %v1552 = vpop.permute.xlu0 %1551
        %v1553 = vsel %vm912, %v1550, %v1552
        %v1554 = vsel %vm912, %v1552, %v1550
        %v1555 = vmul.f32 %v1553, %v441
        %v1556 = vmul.f32 %v1554, %v445
        %s1557 = scalar_lea.vmem %s4, 56
        %v1558 = vld [vmem:[%s1557] sm:$0xf]
        %v1559 = vld [vmem:[%s1557 + $0x4] sm:$0xf]
        %v1560 = vpack.c.bf16 %v1555, %v1555
        %v1561 = vpack.c.bf16 %v1556, %v1556
        %v1564 = vunpack.c.l.b16 %v1558
        %v1565 = vunpack.c.l.b16 %v1559
        %v1566 = vpack.c.b16 %v1565, %v1564
        %v1568 = vsel %vm490, %v1566, 0
        %v1571 = vsel %vm494, %v1560, 0
        %v1574 = vsel %vm494, %v1561, 0
        %1576 = vmatprep.subr.bf16.mxu0 %v1574
        %1577 = vmatpush1.bf16.msra.mxu0 %v1571
        %1578 = vmatprep.subr.bf16.mxu0 0
        %1579 = vmatpush1.bf16.msra.mxu0 0
        %1580 = vmatprep.subr.bf16.mxu0 0
        %1581 = vmatpush1.bf16.msra.mxu0 0
        %1582 = vmatprep.subr.bf16.mxu0 0
        %1583 = vmatpush1.bf16.msra.mxu0 0
        %1584 = vmatprep.subr.bf16.mxu0 0
        %1585 = vmatpush1.bf16.msra.mxu0 0
        %1586 = vmatprep.subr.bf16.mxu0 0
        %1587 = vmatpush1.bf16.msra.mxu0 0
        %1588 = vmatprep.subr.bf16.mxu0 0
        %1589 = vmatpush1.bf16.msra.mxu0 0
        %1590 = vmatprep.subr.bf16.mxu0 0
        %1591 = vmatpush1.bf16.msra.mxu0 0
        %1592 = vmatprep.subr.bf16.mxu0 0
        %1593 = vmatpush1.bf16.msra.mxu0 0
        %1594 = vmatprep.subr.bf16.mxu0 0
        %1595 = vmatpush1.bf16.msra.mxu0 0
        %1596 = vmatprep.subr.bf16.mxu0 0
        %1597 = vmatpush1.bf16.msra.mxu0 0
        %1598 = vmatprep.subr.bf16.mxu0 0
        %1599 = vmatpush1.bf16.msra.mxu0 0
        %1600 = vmatprep.subr.bf16.mxu0 0
        %1601 = vmatpush1.bf16.msra.mxu0 0
        %1602 = vmatprep.subr.bf16.mxu0 0
        %1603 = vmatpush1.bf16.msra.mxu0 0
        %1604 = vmatprep.subr.bf16.mxu0 0
        %1605 = vmatpush1.bf16.msra.mxu0 0
        %1606 = vmatprep.subr.bf16.mxu0 0
        %1607 = vmatpush1.bf16.msra.mxu0 0
        %1608 = vmatprep.mubr.bf16.mxu0 0
        %1609 = vmatmul.mubr.bf16.gmra.mrb[0].mxu0 %v1568
        %v1610 = vpop.f32.mrb[0].mxu0
        %v1611 = vadd.f32 0.0, %v1610
        %v1612 = vpop.f32.mrb[0].mxu0
        %v1613 = vadd.f32 0.0, %v1612
        %v1614 = vpop.f32.mrb[0].mxu0
        %v1615 = vadd.f32 0.0, %v1614
        %v1616 = vpop.f32.mrb[0].mxu0
        %v1617 = vadd.f32 0.0, %v1616
        %1618 = vdwg.mxu0
        %v1619 = vadd.f32 %v1545, %v1611
        %v1620 = vadd.f32 %v1546, %v1613
        %v1621 = vadd.f32 %v1547, %v1615
        %v1622 = vadd.f32 %v1548, %v1617
        %1623 = vrot.lane.b32.xlu0 %v1046, 111
        %v1624 = vpop.permute.xlu0 %1623
        %1625 = vrot.lane.b32.xlu0 %v1047, 111
        %v1626 = vpop.permute.xlu0 %1625
        %v1627 = vsel %vm977, %v1624, %v1626
        %v1628 = vsel %vm977, %v1626, %v1624
        %v1629 = vmul.f32 %v1627, %v454
        %v1630 = vmul.f32 %v1628, %v458
        %s1631 = scalar_lea.vmem %s4, 64
        %v1632 = vld [vmem:[%s1631] sm:$0xf]
        %v1633 = vld [vmem:[%s1631 + $0x4] sm:$0xf]
        %v1634 = vpack.c.bf16 %v1629, %v1629
        %v1635 = vpack.c.bf16 %v1630, %v1630
        %v1638 = vunpack.c.l.b16 %v1632
        %v1639 = vunpack.c.l.b16 %v1633
        %v1640 = vpack.c.b16 %v1639, %v1638
        %v1642 = vsel %vm490, %v1640, 0
        %v1645 = vsel %vm494, %v1634, 0
        %v1648 = vsel %vm494, %v1635, 0
        %1650 = vmatprep.subr.bf16.mxu0 %v1648
        %1651 = vmatpush1.bf16.msra.mxu0 %v1645
        %1652 = vmatprep.subr.bf16.mxu0 0
        %1653 = vmatpush1.bf16.msra.mxu0 0
        %1654 = vmatprep.subr.bf16.mxu0 0
        %1655 = vmatpush1.bf16.msra.mxu0 0
        %1656 = vmatprep.subr.bf16.mxu0 0
        %1657 = vmatpush1.bf16.msra.mxu0 0
        %1658 = vmatprep.subr.bf16.mxu0 0
        %1659 = vmatpush1.bf16.msra.mxu0 0
        %1660 = vmatprep.subr.bf16.mxu0 0
        %1661 = vmatpush1.bf16.msra.mxu0 0
        %1662 = vmatprep.subr.bf16.mxu0 0
        %1663 = vmatpush1.bf16.msra.mxu0 0
        %1664 = vmatprep.subr.bf16.mxu0 0
        %1665 = vmatpush1.bf16.msra.mxu0 0
        %1666 = vmatprep.subr.bf16.mxu0 0
        %1667 = vmatpush1.bf16.msra.mxu0 0
        %1668 = vmatprep.subr.bf16.mxu0 0
        %1669 = vmatpush1.bf16.msra.mxu0 0
        %1670 = vmatprep.subr.bf16.mxu0 0
        %1671 = vmatpush1.bf16.msra.mxu0 0
        %1672 = vmatprep.subr.bf16.mxu0 0
        %1673 = vmatpush1.bf16.msra.mxu0 0
        %1674 = vmatprep.subr.bf16.mxu0 0
        %1675 = vmatpush1.bf16.msra.mxu0 0
        %1676 = vmatprep.subr.bf16.mxu0 0
        %1677 = vmatpush1.bf16.msra.mxu0 0
        %1678 = vmatprep.subr.bf16.mxu0 0
        %1679 = vmatpush1.bf16.msra.mxu0 0
        %1680 = vmatprep.subr.bf16.mxu0 0
        %1681 = vmatpush1.bf16.msra.mxu0 0
        %1682 = vmatprep.mubr.bf16.mxu0 0
        %1683 = vmatmul.mubr.bf16.gmra.mrb[0].mxu0 %v1642
        %v1684 = vpop.f32.mrb[0].mxu0
        %v1685 = vadd.f32 0.0, %v1684
        %v1686 = vpop.f32.mrb[0].mxu0
        %v1687 = vadd.f32 0.0, %v1686
        %v1688 = vpop.f32.mrb[0].mxu0
        %v1689 = vadd.f32 0.0, %v1688
        %v1690 = vpop.f32.mrb[0].mxu0
        %v1691 = vadd.f32 0.0, %v1690
        %1692 = vdwg.mxu0
        %v1693 = vadd.f32 %v1619, %v1685
        %v1694 = vadd.f32 %v1620, %v1687
        %v1695 = vadd.f32 %v1621, %v1689
        %v1696 = vadd.f32 %v1622, %v1691
        %v1697 = vld [vmem:[%s5] sm:$0xff]
        %v1698 = vld [vmem:[%s5 + $0x8] sm:$0xff]
        %1700 = vset.pattern.permute.xlu0 0
        %1701 = vperm.xlu0 %1700, %v1697
        %v1702 = vpop.permute.xlu0 %1701
        %1705 = vset.pattern.permute.xlu0 0
        %1706 = vperm.xlu0 %1705, %v1698
        %v1707 = vpop.permute.xlu0 %1706
        %v1709 = vadd.f32 %v1693, %v1702
        %v1710 = vadd.f32 %v1694, %v1702
        %v1711 = vadd.f32 %v1695, %v1707
        %v1712 = vadd.f32 %v1696, %v1707
        %v1713 = vmax.f32 %v1709, 0.0
        %v1714 = vmax.f32 %v1710, 0.0
        %v1715 = vmax.f32 %v1711, 0.0
        %v1716 = vmax.f32 %v1712, 0.0
        %1717 = vrot.lane.b32.xlu0 %v1713, 17
        %v1718 = vpop.permute.xlu0 %1717
        %1719 = vrot.lane.b32.xlu0 %v1715, 17
        %v1720 = vpop.permute.xlu0 %1719
        %1721 = vrot.lane.b32.xlu0 %v1714, 17
        %v1722 = vpop.permute.xlu0 %1721
        %1723 = vrot.lane.b32.xlu0 %v1716, 17
        %v1724 = vpop.permute.xlu0 %1723
        %v1725 = vsel %vm469, %v1718, %v1722
        %v1726 = vsel %vm469, %v1720, %v1724
        %v1727 = vsel %vm469, %v1722, %v1718
        %v1728 = vsel %vm469, %v1724, %v1720
        %v1729 = vmul.f32 %v1727, %v363
        %v1730 = vmul.f32 %v1725, %v367
        %v1731 = vmul.f32 %v1728, %v363
        %v1732 = vmul.f32 %v1726, %v367
        %v1733 = vld [vmem:[%s6] sm:$0xf]
        %v1734 = vld [vmem:[%s6 + $0x4] sm:$0xf]
        %v1735 = vpack.c.bf16 %v1731, %v1729
        %v1736 = vpack.c.bf16 %v1732, %v1730
        %1737 = vrot.lane.b32.xlu0 %v1713, 16
        %v1738 = vpop.permute.xlu0 %1737
        %1739 = vrot.lane.b32.xlu0 %v1715, 16
        %v1740 = vpop.permute.xlu0 %1739
        %1741 = vrot.lane.b32.xlu0 %v1714, 16
        %v1742 = vpop.permute.xlu0 %1741
        %1743 = vrot.lane.b32.xlu0 %v1716, 16
        %v1744 = vpop.permute.xlu0 %1743
        %v1745 = vsel %vm481, %v1738, %v1742
        %v1746 = vsel %vm481, %v1740, %v1744
        %v1747 = vsel %vm481, %v1742, %v1738
        %v1748 = vsel %vm481, %v1744, %v1740
        %v1749 = vmul.f32 %v1747, %v376
        %v1750 = vmul.f32 %v1745, %v380
        %v1751 = vmul.f32 %v1748, %v376
        %v1752 = vmul.f32 %v1746, %v380
        %s1753 = scalar_lea.vmem %s6, 8
        %v1754 = vld [vmem:[%s1753] sm:$0xf]
        %v1755 = vld [vmem:[%s1753 + $0x4] sm:$0xf]
        %v1756 = vpack.c.bf16 %v1751, %v1749
        %v1757 = vpack.c.bf16 %v1752, %v1750
        %v1760 = vunpack.c.l.b16 %v1754
        %v1761 = vunpack.c.l.b16 %v1755
        %v1762 = vpack.c.b16 %v1761, %v1760
        %vm1763 = vcmask 130048
        %v1765 = vsel %vm1763, %v1762, 0
        %1767 = vmatprep.subr.bf16.mxu0 %v1757
        %1768 = vmatpush1.bf16.msra.mxu0 %v1756
        %1769 = vmatprep.subr.bf16.mxu0 0
        %1770 = vmatpush1.bf16.msra.mxu0 0
        %1771 = vmatprep.subr.bf16.mxu0 0
        %1772 = vmatpush1.bf16.msra.mxu0 0
        %1773 = vmatprep.subr.bf16.mxu0 0
        %1774 = vmatpush1.bf16.msra.mxu0 0
        %1775 = vmatprep.subr.bf16.mxu0 0
        %1776 = vmatpush1.bf16.msra.mxu0 0
        %1777 = vmatprep.subr.bf16.mxu0 0
        %1778 = vmatpush1.bf16.msra.mxu0 0
        %1779 = vmatprep.subr.bf16.mxu0 0
        %1780 = vmatpush1.bf16.msra.mxu0 0
        %1781 = vmatprep.subr.bf16.mxu0 0
        %1782 = vmatpush1.bf16.msra.mxu0 0
        %1783 = vmatprep.subr.bf16.mxu0 0
        %1784 = vmatpush1.bf16.msra.mxu0 0
        %1785 = vmatprep.subr.bf16.mxu0 0
        %1786 = vmatpush1.bf16.msra.mxu0 0
        %1787 = vmatprep.subr.bf16.mxu0 0
        %1788 = vmatpush1.bf16.msra.mxu0 0
        %1789 = vmatprep.subr.bf16.mxu0 0
        %1790 = vmatpush1.bf16.msra.mxu0 0
        %1791 = vmatprep.subr.bf16.mxu0 0
        %1792 = vmatpush1.bf16.msra.mxu0 0
        %1793 = vmatprep.subr.bf16.mxu0 0
        %1794 = vmatpush1.bf16.msra.mxu0 0
        %1795 = vmatprep.subr.bf16.mxu0 0
        %1796 = vmatpush1.bf16.msra.mxu0 0
        %1797 = vmatprep.subr.bf16.mxu0 0
        %1798 = vmatpush1.bf16.msra.mxu0 0
        %1799 = vmatprep.mubr.bf16.mxu0 0
        %1800 = vmatmul.mubr.bf16.gmra.mrb[0].mxu0 %v1765
        %v1801 = vpop.f32.mrb[0].mxu0
        %v1802 = vadd.f32 0.0, %v1801
        %v1803 = vpop.f32.mrb[0].mxu0
        %v1804 = vadd.f32 0.0, %v1803
        %v1805 = vpop.f32.mrb[0].mxu0
        %v1806 = vadd.f32 0.0, %v1805
        %v1807 = vpop.f32.mrb[0].mxu0
        %v1808 = vadd.f32 0.0, %v1807
        %1809 = vdwg.mxu0
        %v1812 = vunpack.c.l.b16 %v1733
        %v1813 = vunpack.c.l.b16 %v1734
        %v1814 = vpack.c.b16 %v1813, %v1812
        %v1816 = vsel %vm1763, %v1814, 0
        %1818 = vmatprep.subr.bf16.mxu0 %v1736
        %1819 = vmatpush1.bf16.msra.mxu0 %v1735
        %1820 = vmatprep.subr.bf16.mxu0 0
        %1821 = vmatpush1.bf16.msra.mxu0 0
        %1822 = vmatprep.subr.bf16.mxu0 0
        %1823 = vmatpush1.bf16.msra.mxu0 0
        %1824 = vmatprep.subr.bf16.mxu0 0
        %1825 = vmatpush1.bf16.msra.mxu0 0
        %1826 = vmatprep.subr.bf16.mxu0 0
        %1827 = vmatpush1.bf16.msra.mxu0 0
        %1828 = vmatprep.subr.bf16.mxu0 0
        %1829 = vmatpush1.bf16.msra.mxu0 0
        %1830 = vmatprep.subr.bf16.mxu0 0
        %1831 = vmatpush1.bf16.msra.mxu0 0
        %1832 = vmatprep.subr.bf16.mxu0 0
        %1833 = vmatpush1.bf16.msra.mxu0 0
        %1834 = vmatprep.subr.bf16.mxu0 0
        %1835 = vmatpush1.bf16.msra.mxu0 0
        %1836 = vmatprep.subr.bf16.mxu0 0
        %1837 = vmatpush1.bf16.msra.mxu0 0
        %1838 = vmatprep.subr.bf16.mxu0 0
        %1839 = vmatpush1.bf16.msra.mxu0 0
        %1840 = vmatprep.subr.bf16.mxu0 0
        %1841 = vmatpush1.bf16.msra.mxu0 0
        %1842 = vmatprep.subr.bf16.mxu0 0
        %1843 = vmatpush1.bf16.msra.mxu0 0
        %1844 = vmatprep.subr.bf16.mxu0 0
        %1845 = vmatpush1.bf16.msra.mxu0 0
        %1846 = vmatprep.subr.bf16.mxu0 0
        %1847 = vmatpush1.bf16.msra.mxu0 0
        %1848 = vmatprep.subr.bf16.mxu0 0
        %1849 = vmatpush1.bf16.msra.mxu0 0
        %1850 = vmatprep.mubr.bf16.mxu0 0
        %1851 = vmatmul.mubr.bf16.gmra.mrb[0].mxu0 %v1816
        %v1852 = vpop.f32.mrb[0].mxu0
        %v1853 = vadd.f32 %v1802, %v1852
        %v1854 = vpop.f32.mrb[0].mxu0
        %v1855 = vadd.f32 %v1804, %v1854
        %v1856 = vpop.f32.mrb[0].mxu0
        %v1857 = vadd.f32 %v1806, %v1856
        %v1858 = vpop.f32.mrb[0].mxu0
        %v1859 = vadd.f32 %v1808, %v1858
        %1860 = vdwg.mxu0
        %1861 = vrot.lane.b32.xlu0 %v1713, 15
        %v1862 = vpop.permute.xlu0 %1861
        %1863 = vrot.lane.b32.xlu0 %v1715, 15
        %v1864 = vpop.permute.xlu0 %1863
        %1865 = vrot.lane.b32.xlu0 %v1714, 15
        %v1866 = vpop.permute.xlu0 %1865
        %1867 = vrot.lane.b32.xlu0 %v1716, 15
        %v1868 = vpop.permute.xlu0 %1867
        %v1869 = vsel %vm596, %v1862, %v1866
        %v1870 = vsel %vm596, %v1864, %v1868
        %v1871 = vsel %vm596, %v1866, %v1862
        %v1872 = vsel %vm596, %v1868, %v1864
        %v1873 = vmul.f32 %v1871, %v389
        %v1874 = vmul.f32 %v1869, %v393
        %v1875 = vmul.f32 %v1872, %v389
        %v1876 = vmul.f32 %v1870, %v393
        %s1877 = scalar_lea.vmem %s6, 16
        %v1878 = vld [vmem:[%s1877] sm:$0xf]
        %v1879 = vld [vmem:[%s1877 + $0x4] sm:$0xf]
        %v1880 = vpack.c.bf16 %v1875, %v1873
        %v1881 = vpack.c.bf16 %v1876, %v1874
        %v1884 = vunpack.c.l.b16 %v1878
        %v1885 = vunpack.c.l.b16 %v1879
        %v1886 = vpack.c.b16 %v1885, %v1884
        %v1888 = vsel %vm1763, %v1886, 0
        %1890 = vmatprep.subr.bf16.mxu0 %v1881
        %1891 = vmatpush1.bf16.msra.mxu0 %v1880
        %1892 = vmatprep.subr.bf16.mxu0 0
        %1893 = vmatpush1.bf16.msra.mxu0 0
        %1894 = vmatprep.subr.bf16.mxu0 0
        %1895 = vmatpush1.bf16.msra.mxu0 0
        %1896 = vmatprep.subr.bf16.mxu0 0
        %1897 = vmatpush1.bf16.msra.mxu0 0
        %1898 = vmatprep.subr.bf16.mxu0 0
        %1899 = vmatpush1.bf16.msra.mxu0 0
        %1900 = vmatprep.subr.bf16.mxu0 0
        %1901 = vmatpush1.bf16.msra.mxu0 0
        %1902 = vmatprep.subr.bf16.mxu0 0
        %1903 = vmatpush1.bf16.msra.mxu0 0
        %1904 = vmatprep.subr.bf16.mxu0 0
        %1905 = vmatpush1.bf16.msra.mxu0 0
        %1906 = vmatprep.subr.bf16.mxu0 0
        %1907 = vmatpush1.bf16.msra.mxu0 0
        %1908 = vmatprep.subr.bf16.mxu0 0
        %1909 = vmatpush1.bf16.msra.mxu0 0
        %1910 = vmatprep.subr.bf16.mxu0 0
        %1911 = vmatpush1.bf16.msra.mxu0 0
        %1912 = vmatprep.subr.bf16.mxu0 0
        %1913 = vmatpush1.bf16.msra.mxu0 0
        %1914 = vmatprep.subr.bf16.mxu0 0
        %1915 = vmatpush1.bf16.msra.mxu0 0
        %1916 = vmatprep.subr.bf16.mxu0 0
        %1917 = vmatpush1.bf16.msra.mxu0 0
        %1918 = vmatprep.subr.bf16.mxu0 0
        %1919 = vmatpush1.bf16.msra.mxu0 0
        %1920 = vmatprep.subr.bf16.mxu0 0
        %1921 = vmatpush1.bf16.msra.mxu0 0
        %1922 = vmatprep.mubr.bf16.mxu0 0
        %1923 = vmatmul.mubr.bf16.gmra.mrb[0].mxu0 %v1888
        %v1924 = vpop.f32.mrb[0].mxu0
        %v1925 = vadd.f32 0.0, %v1924
        %v1926 = vpop.f32.mrb[0].mxu0
        %v1927 = vadd.f32 0.0, %v1926
        %v1928 = vpop.f32.mrb[0].mxu0
        %v1929 = vadd.f32 0.0, %v1928
        %v1930 = vpop.f32.mrb[0].mxu0
        %v1931 = vadd.f32 0.0, %v1930
        %1932 = vdwg.mxu0
        %v1933 = vadd.f32 %v1853, %v1925
        %v1934 = vadd.f32 %v1855, %v1927
        %v1935 = vadd.f32 %v1857, %v1929
        %v1936 = vadd.f32 %v1859, %v1931
        %1937 = vrot.lane.b32.xlu0 %v1713, 1
        %v1938 = vpop.permute.xlu0 %1937
        %1939 = vrot.lane.b32.xlu0 %v1715, 1
        %v1940 = vpop.permute.xlu0 %1939
        %1941 = vrot.lane.b32.xlu0 %v1714, 1
        %v1942 = vpop.permute.xlu0 %1941
        %1943 = vrot.lane.b32.xlu0 %v1716, 1
        %v1944 = vpop.permute.xlu0 %1943
        %v1945 = vsel %vm661, %v1938, %v1942
        %v1946 = vsel %vm661, %v1940, %v1944
        %v1947 = vsel %vm661, %v1942, %v1938
        %v1948 = vsel %vm661, %v1944, %v1940
        %v1949 = vmul.f32 %v1947, %v402
        %v1950 = vmul.f32 %v1945, %v406
        %v1951 = vmul.f32 %v1948, %v402
        %v1952 = vmul.f32 %v1946, %v406
        %s1953 = scalar_lea.vmem %s6, 24
        %v1954 = vld [vmem:[%s1953] sm:$0xf]
        %v1955 = vld [vmem:[%s1953 + $0x4] sm:$0xf]
        %v1956 = vpack.c.bf16 %v1951, %v1949
        %v1957 = vpack.c.bf16 %v1952, %v1950
        %v1960 = vunpack.c.l.b16 %v1954
        %v1961 = vunpack.c.l.b16 %v1955
        %v1962 = vpack.c.b16 %v1961, %v1960
        %v1964 = vsel %vm1763, %v1962, 0
        %1966 = vmatprep.subr.bf16.mxu0 %v1957
        %1967 = vmatpush1.bf16.msra.mxu0 %v1956
        %1968 = vmatprep.subr.bf16.mxu0 0
        %1969 = vmatpush1.bf16.msra.mxu0 0
        %1970 = vmatprep.subr.bf16.mxu0 0
        %1971 = vmatpush1.bf16.msra.mxu0 0
        %1972 = vmatprep.subr.bf16.mxu0 0
        %1973 = vmatpush1.bf16.msra.mxu0 0
        %1974 = vmatprep.subr.bf16.mxu0 0
        %1975 = vmatpush1.bf16.msra.mxu0 0
        %1976 = vmatprep.subr.bf16.mxu0 0
        %1977 = vmatpush1.bf16.msra.mxu0 0
        %1978 = vmatprep.subr.bf16.mxu0 0
        %1979 = vmatpush1.bf16.msra.mxu0 0
        %1980 = vmatprep.subr.bf16.mxu0 0
        %1981 = vmatpush1.bf16.msra.mxu0 0
        %1982 = vmatprep.subr.bf16.mxu0 0
        %1983 = vmatpush1.bf16.msra.mxu0 0
        %1984 = vmatprep.subr.bf16.mxu0 0
        %1985 = vmatpush1.bf16.msra.mxu0 0
        %1986 = vmatprep.subr.bf16.mxu0 0
        %1987 = vmatpush1.bf16.msra.mxu0 0
        %1988 = vmatprep.subr.bf16.mxu0 0
        %1989 = vmatpush1.bf16.msra.mxu0 0
        %1990 = vmatprep.subr.bf16.mxu0 0
        %1991 = vmatpush1.bf16.msra.mxu0 0
        %1992 = vmatprep.subr.bf16.mxu0 0
        %1993 = vmatpush1.bf16.msra.mxu0 0
        %1994 = vmatprep.subr.bf16.mxu0 0
        %1995 = vmatpush1.bf16.msra.mxu0 0
        %1996 = vmatprep.subr.bf16.mxu0 0
        %1997 = vmatpush1.bf16.msra.mxu0 0
        %1998 = vmatprep.mubr.bf16.mxu0 0
        %1999 = vmatmul.mubr.bf16.gmra.mrb[0].mxu0 %v1964
        %v2000 = vpop.f32.mrb[0].mxu0
        %v2001 = vadd.f32 0.0, %v2000
        %v2002 = vpop.f32.mrb[0].mxu0
        %v2003 = vadd.f32 0.0, %v2002
        %v2004 = vpop.f32.mrb[0].mxu0
        %v2005 = vadd.f32 0.0, %v2004
        %v2006 = vpop.f32.mrb[0].mxu0
        %v2007 = vadd.f32 0.0, %v2006
        %2008 = vdwg.mxu0
        %v2009 = vadd.f32 %v1933, %v2001
        %v2010 = vadd.f32 %v1934, %v2003
        %v2011 = vadd.f32 %v1935, %v2005
        %v2012 = vadd.f32 %v1936, %v2007
        %s2013 = scalar_lea.vmem %s6, 32
        %v2014 = vld [vmem:[%s2013] sm:$0xf]
        %v2015 = vld [vmem:[%s2013 + $0x4] sm:$0xf]
        %v2016 = vpack.c.bf16 %v1715, %v1713
        %v2017 = vpack.c.bf16 %v1716, %v1714
        %v2020 = vunpack.c.l.b16 %v2014
        %v2021 = vunpack.c.l.b16 %v2015
        %v2022 = vpack.c.b16 %v2021, %v2020
        %v2024 = vsel %vm1763, %v2022, 0
        %2026 = vmatprep.subr.bf16.mxu0 %v2017
        %2027 = vmatpush1.bf16.msra.mxu0 %v2016
        %2028 = vmatprep.subr.bf16.mxu0 0
        %2029 = vmatpush1.bf16.msra.mxu0 0
        %2030 = vmatprep.subr.bf16.mxu0 0
        %2031 = vmatpush1.bf16.msra.mxu0 0
        %2032 = vmatprep.subr.bf16.mxu0 0
        %2033 = vmatpush1.bf16.msra.mxu0 0
        %2034 = vmatprep.subr.bf16.mxu0 0
        %2035 = vmatpush1.bf16.msra.mxu0 0
        %2036 = vmatprep.subr.bf16.mxu0 0
        %2037 = vmatpush1.bf16.msra.mxu0 0
        %2038 = vmatprep.subr.bf16.mxu0 0
        %2039 = vmatpush1.bf16.msra.mxu0 0
        %2040 = vmatprep.subr.bf16.mxu0 0
        %2041 = vmatpush1.bf16.msra.mxu0 0
        %2042 = vmatprep.subr.bf16.mxu0 0
        %2043 = vmatpush1.bf16.msra.mxu0 0
        %2044 = vmatprep.subr.bf16.mxu0 0
        %2045 = vmatpush1.bf16.msra.mxu0 0
        %2046 = vmatprep.subr.bf16.mxu0 0
        %2047 = vmatpush1.bf16.msra.mxu0 0
        %2048 = vmatprep.subr.bf16.mxu0 0
        %2049 = vmatpush1.bf16.msra.mxu0 0
        %2050 = vmatprep.subr.bf16.mxu0 0
        %2051 = vmatpush1.bf16.msra.mxu0 0
        %2052 = vmatprep.subr.bf16.mxu0 0
        %2053 = vmatpush1.bf16.msra.mxu0 0
        %2054 = vmatprep.subr.bf16.mxu0 0
        %2055 = vmatpush1.bf16.msra.mxu0 0
        %2056 = vmatprep.subr.bf16.mxu0 0
        %2057 = vmatpush1.bf16.msra.mxu0 0
        %2058 = vmatprep.mubr.bf16.mxu0 0
        %2059 = vmatmul.mubr.bf16.gmra.mrb[0].mxu0 %v2024
        %v2060 = vpop.f32.mrb[0].mxu0
        %v2061 = vadd.f32 0.0, %v2060
        %v2062 = vpop.f32.mrb[0].mxu0
        %v2063 = vadd.f32 0.0, %v2062
        %v2064 = vpop.f32.mrb[0].mxu0
        %v2065 = vadd.f32 0.0, %v2064
        %v2066 = vpop.f32.mrb[0].mxu0
        %v2067 = vadd.f32 0.0, %v2066
        %2068 = vdwg.mxu0
        %v2069 = vadd.f32 %v2009, %v2061
        %v2070 = vadd.f32 %v2010, %v2063
        %v2071 = vadd.f32 %v2011, %v2065
        %v2072 = vadd.f32 %v2012, %v2067
        %2073 = vrot.lane.b32.xlu0 %v1713, 127
        %v2074 = vpop.permute.xlu0 %2073
        %2075 = vrot.lane.b32.xlu0 %v1715, 127
        %v2076 = vpop.permute.xlu0 %2075
        %2077 = vrot.lane.b32.xlu0 %v1714, 127
        %v2078 = vpop.permute.xlu0 %2077
        %2079 = vrot.lane.b32.xlu0 %v1716, 127
        %v2080 = vpop.permute.xlu0 %2079
        %v2081 = vsel %vm782, %v2074, %v2078
        %v2082 = vsel %vm782, %v2076, %v2080
        %v2083 = vsel %vm782, %v2078, %v2074
        %v2084 = vsel %vm782, %v2080, %v2076
        %v2085 = vmul.f32 %v2081, %v415
        %v2086 = vmul.f32 %v2083, %v419
        %v2087 = vmul.f32 %v2082, %v415
        %v2088 = vmul.f32 %v2084, %v419
        %s2089 = scalar_lea.vmem %s6, 40
        %v2090 = vld [vmem:[%s2089] sm:$0xf]
        %v2091 = vld [vmem:[%s2089 + $0x4] sm:$0xf]
        %v2092 = vpack.c.bf16 %v2087, %v2085
        %v2093 = vpack.c.bf16 %v2088, %v2086
        %v2096 = vunpack.c.l.b16 %v2090
        %v2097 = vunpack.c.l.b16 %v2091
        %v2098 = vpack.c.b16 %v2097, %v2096
        %v2100 = vsel %vm1763, %v2098, 0
        %2102 = vmatprep.subr.bf16.mxu0 %v2093
        %2103 = vmatpush1.bf16.msra.mxu0 %v2092
        %2104 = vmatprep.subr.bf16.mxu0 0
        %2105 = vmatpush1.bf16.msra.mxu0 0
        %2106 = vmatprep.subr.bf16.mxu0 0
        %2107 = vmatpush1.bf16.msra.mxu0 0
        %2108 = vmatprep.subr.bf16.mxu0 0
        %2109 = vmatpush1.bf16.msra.mxu0 0
        %2110 = vmatprep.subr.bf16.mxu0 0
        %2111 = vmatpush1.bf16.msra.mxu0 0
        %2112 = vmatprep.subr.bf16.mxu0 0
        %2113 = vmatpush1.bf16.msra.mxu0 0
        %2114 = vmatprep.subr.bf16.mxu0 0
        %2115 = vmatpush1.bf16.msra.mxu0 0
        %2116 = vmatprep.subr.bf16.mxu0 0
        %2117 = vmatpush1.bf16.msra.mxu0 0
        %2118 = vmatprep.subr.bf16.mxu0 0
        %2119 = vmatpush1.bf16.msra.mxu0 0
        %2120 = vmatprep.subr.bf16.mxu0 0
        %2121 = vmatpush1.bf16.msra.mxu0 0
        %2122 = vmatprep.subr.bf16.mxu0 0
        %2123 = vmatpush1.bf16.msra.mxu0 0
        %2124 = vmatprep.subr.bf16.mxu0 0
        %2125 = vmatpush1.bf16.msra.mxu0 0
        %2126 = vmatprep.subr.bf16.mxu0 0
        %2127 = vmatpush1.bf16.msra.mxu0 0
        %2128 = vmatprep.subr.bf16.mxu0 0
        %2129 = vmatpush1.bf16.msra.mxu0 0
        %2130 = vmatprep.subr.bf16.mxu0 0
        %2131 = vmatpush1.bf16.msra.mxu0 0
        %2132 = vmatprep.subr.bf16.mxu0 0
        %2133 = vmatpush1.bf16.msra.mxu0 0
        %2134 = vmatprep.mubr.bf16.mxu0 0
        %2135 = vmatmul.mubr.bf16.gmra.mrb[0].mxu0 %v2100
        %v2136 = vpop.f32.mrb[0].mxu0
        %v2137 = vadd.f32 0.0, %v2136
        %v2138 = vpop.f32.mrb[0].mxu0
        %v2139 = vadd.f32 0.0, %v2138
        %v2140 = vpop.f32.mrb[0].mxu0
        %v2141 = vadd.f32 0.0, %v2140
        %v2142 = vpop.f32.mrb[0].mxu0
        %v2143 = vadd.f32 0.0, %v2142
        %2144 = vdwg.mxu0
        %v2145 = vadd.f32 %v2069, %v2137
        %v2146 = vadd.f32 %v2070, %v2139
        %v2147 = vadd.f32 %v2071, %v2141
        %v2148 = vadd.f32 %v2072, %v2143
        %2149 = vrot.lane.b32.xlu0 %v1713, 113
        %v2150 = vpop.permute.xlu0 %2149
        %2151 = vrot.lane.b32.xlu0 %v1715, 113
        %v2152 = vpop.permute.xlu0 %2151
        %2153 = vrot.lane.b32.xlu0 %v1714, 113
        %v2154 = vpop.permute.xlu0 %2153
        %2155 = vrot.lane.b32.xlu0 %v1716, 113
        %v2156 = vpop.permute.xlu0 %2155
        %v2157 = vsel %vm847, %v2150, %v2154
        %v2158 = vsel %vm847, %v2152, %v2156
        %v2159 = vsel %vm847, %v2154, %v2150
        %v2160 = vsel %vm847, %v2156, %v2152
        %v2161 = vmul.f32 %v2157, %v428
        %v2162 = vmul.f32 %v2159, %v432
        %v2163 = vmul.f32 %v2158, %v428
        %v2164 = vmul.f32 %v2160, %v432
        %s2165 = scalar_lea.vmem %s6, 48
        %v2166 = vld [vmem:[%s2165] sm:$0xf]
        %v2167 = vld [vmem:[%s2165 + $0x4] sm:$0xf]
        %v2168 = vpack.c.bf16 %v2163, %v2161
        %v2169 = vpack.c.bf16 %v2164, %v2162
        %v2172 = vunpack.c.l.b16 %v2166
        %v2173 = vunpack.c.l.b16 %v2167
        %v2174 = vpack.c.b16 %v2173, %v2172
        %v2176 = vsel %vm1763, %v2174, 0
        %2178 = vmatprep.subr.bf16.mxu0 %v2169
        %2179 = vmatpush1.bf16.msra.mxu0 %v2168
        %2180 = vmatprep.subr.bf16.mxu0 0
        %2181 = vmatpush1.bf16.msra.mxu0 0
        %2182 = vmatprep.subr.bf16.mxu0 0
        %2183 = vmatpush1.bf16.msra.mxu0 0
        %2184 = vmatprep.subr.bf16.mxu0 0
        %2185 = vmatpush1.bf16.msra.mxu0 0
        %2186 = vmatprep.subr.bf16.mxu0 0
        %2187 = vmatpush1.bf16.msra.mxu0 0
        %2188 = vmatprep.subr.bf16.mxu0 0
        %2189 = vmatpush1.bf16.msra.mxu0 0
        %2190 = vmatprep.subr.bf16.mxu0 0
        %2191 = vmatpush1.bf16.msra.mxu0 0
        %2192 = vmatprep.subr.bf16.mxu0 0
        %2193 = vmatpush1.bf16.msra.mxu0 0
        %2194 = vmatprep.subr.bf16.mxu0 0
        %2195 = vmatpush1.bf16.msra.mxu0 0
        %2196 = vmatprep.subr.bf16.mxu0 0
        %2197 = vmatpush1.bf16.msra.mxu0 0
        %2198 = vmatprep.subr.bf16.mxu0 0
        %2199 = vmatpush1.bf16.msra.mxu0 0
        %2200 = vmatprep.subr.bf16.mxu0 0
        %2201 = vmatpush1.bf16.msra.mxu0 0
        %2202 = vmatprep.subr.bf16.mxu0 0
        %2203 = vmatpush1.bf16.msra.mxu0 0
        %2204 = vmatprep.subr.bf16.mxu0 0
        %2205 = vmatpush1.bf16.msra.mxu0 0
        %2206 = vmatprep.subr.bf16.mxu0 0
        %2207 = vmatpush1.bf16.msra.mxu0 0
        %2208 = vmatprep.subr.bf16.mxu0 0
        %2209 = vmatpush1.bf16.msra.mxu0 0
        %2210 = vmatprep.mubr.bf16.mxu0 0
        %2211 = vmatmul.mubr.bf16.gmra.mrb[0].mxu0 %v2176
        %v2212 = vpop.f32.mrb[0].mxu0
        %v2213 = vadd.f32 0.0, %v2212
        %v2214 = vpop.f32.mrb[0].mxu0
        %v2215 = vadd.f32 0.0, %v2214
        %v2216 = vpop.f32.mrb[0].mxu0
        %v2217 = vadd.f32 0.0, %v2216
        %v2218 = vpop.f32.mrb[0].mxu0
        %v2219 = vadd.f32 0.0, %v2218
        %2220 = vdwg.mxu0
        %v2221 = vadd.f32 %v2145, %v2213
        %v2222 = vadd.f32 %v2146, %v2215
        %v2223 = vadd.f32 %v2147, %v2217
        %v2224 = vadd.f32 %v2148, %v2219
        %2225 = vrot.lane.b32.xlu0 %v1713, 112
        %v2226 = vpop.permute.xlu0 %2225
        %2227 = vrot.lane.b32.xlu0 %v1715, 112
        %v2228 = vpop.permute.xlu0 %2227
        %2229 = vrot.lane.b32.xlu0 %v1714, 112
        %v2230 = vpop.permute.xlu0 %2229
        %2231 = vrot.lane.b32.xlu0 %v1716, 112
        %v2232 = vpop.permute.xlu0 %2231
        %v2233 = vsel %vm912, %v2226, %v2230
        %v2234 = vsel %vm912, %v2228, %v2232
        %v2235 = vsel %vm912, %v2230, %v2226
        %v2236 = vsel %vm912, %v2232, %v2228
        %v2237 = vmul.f32 %v2233, %v441
        %v2238 = vmul.f32 %v2235, %v445
        %v2239 = vmul.f32 %v2234, %v441
        %v2240 = vmul.f32 %v2236, %v445
        %s2241 = scalar_lea.vmem %s6, 56
        %v2242 = vld [vmem:[%s2241] sm:$0xf]
        %v2243 = vld [vmem:[%s2241 + $0x4] sm:$0xf]
        %v2244 = vpack.c.bf16 %v2239, %v2237
        %v2245 = vpack.c.bf16 %v2240, %v2238
        %v2248 = vunpack.c.l.b16 %v2242
        %v2249 = vunpack.c.l.b16 %v2243
        %v2250 = vpack.c.b16 %v2249, %v2248
        %v2252 = vsel %vm1763, %v2250, 0
        %2254 = vmatprep.subr.bf16.mxu0 %v2245
        %2255 = vmatpush1.bf16.msra.mxu0 %v2244
        %2256 = vmatprep.subr.bf16.mxu0 0
        %2257 = vmatpush1.bf16.msra.mxu0 0
        %2258 = vmatprep.subr.bf16.mxu0 0
        %2259 = vmatpush1.bf16.msra.mxu0 0
        %2260 = vmatprep.subr.bf16.mxu0 0
        %2261 = vmatpush1.bf16.msra.mxu0 0
        %2262 = vmatprep.subr.bf16.mxu0 0
        %2263 = vmatpush1.bf16.msra.mxu0 0
        %2264 = vmatprep.subr.bf16.mxu0 0
        %2265 = vmatpush1.bf16.msra.mxu0 0
        %2266 = vmatprep.subr.bf16.mxu0 0
        %2267 = vmatpush1.bf16.msra.mxu0 0
        %2268 = vmatprep.subr.bf16.mxu0 0
        %2269 = vmatpush1.bf16.msra.mxu0 0
        %2270 = vmatprep.subr.bf16.mxu0 0
        %2271 = vmatpush1.bf16.msra.mxu0 0
        %2272 = vmatprep.subr.bf16.mxu0 0
        %2273 = vmatpush1.bf16.msra.mxu0 0
        %2274 = vmatprep.subr.bf16.mxu0 0
        %2275 = vmatpush1.bf16.msra.mxu0 0
        %2276 = vmatprep.subr.bf16.mxu0 0
        %2277 = vmatpush1.bf16.msra.mxu0 0
        %2278 = vmatprep.subr.bf16.mxu0 0
        %2279 = vmatpush1.bf16.msra.mxu0 0
        %2280 = vmatprep.subr.bf16.mxu0 0
        %2281 = vmatpush1.bf16.msra.mxu0 0
        %2282 = vmatprep.subr.bf16.mxu0 0
        %2283 = vmatpush1.bf16.msra.mxu0 0
        %2284 = vmatprep.subr.bf16.mxu0 0
        %2285 = vmatpush1.bf16.msra.mxu0 0
        %2286 = vmatprep.mubr.bf16.mxu0 0
        %2287 = vmatmul.mubr.bf16.gmra.mrb[0].mxu0 %v2252
        %v2288 = vpop.f32.mrb[0].mxu0
        %v2289 = vadd.f32 0.0, %v2288
        %v2290 = vpop.f32.mrb[0].mxu0
        %v2291 = vadd.f32 0.0, %v2290
        %v2292 = vpop.f32.mrb[0].mxu0
        %v2293 = vadd.f32 0.0, %v2292
        %v2294 = vpop.f32.mrb[0].mxu0
        %v2295 = vadd.f32 0.0, %v2294
        %2296 = vdwg.mxu0
        %v2297 = vadd.f32 %v2221, %v2289
        %v2298 = vadd.f32 %v2222, %v2291
        %v2299 = vadd.f32 %v2223, %v2293
        %v2300 = vadd.f32 %v2224, %v2295
        %2301 = vrot.lane.b32.xlu0 %v1713, 111
        %v2302 = vpop.permute.xlu0 %2301
        %2303 = vrot.lane.b32.xlu0 %v1715, 111
        %v2304 = vpop.permute.xlu0 %2303
        %2305 = vrot.lane.b32.xlu0 %v1714, 111
        %v2306 = vpop.permute.xlu0 %2305
        %2307 = vrot.lane.b32.xlu0 %v1716, 111
        %v2308 = vpop.permute.xlu0 %2307
        %v2309 = vsel %vm977, %v2302, %v2306
        %v2310 = vsel %vm977, %v2304, %v2308
        %v2311 = vsel %vm977, %v2306, %v2302
        %v2312 = vsel %vm977, %v2308, %v2304
        %v2313 = vmul.f32 %v2309, %v454
        %v2314 = vmul.f32 %v2311, %v458
        %v2315 = vmul.f32 %v2310, %v454
        %v2316 = vmul.f32 %v2312, %v458
        %s2317 = scalar_lea.vmem %s6, 64
        %v2318 = vld [vmem:[%s2317] sm:$0xf]
        %v2319 = vld [vmem:[%s2317 + $0x4] sm:$0xf]
        %v2320 = vpack.c.bf16 %v2315, %v2313
        %v2321 = vpack.c.bf16 %v2316, %v2314
        %v2324 = vunpack.c.l.b16 %v2318
        %v2325 = vunpack.c.l.b16 %v2319
        %v2326 = vpack.c.b16 %v2325, %v2324
        %v2328 = vsel %vm1763, %v2326, 0
        %2330 = vmatprep.subr.bf16.mxu0 %v2321
        %2331 = vmatpush1.bf16.msra.mxu0 %v2320
        %2332 = vmatprep.subr.bf16.mxu0 0
        %2333 = vmatpush1.bf16.msra.mxu0 0
        %2334 = vmatprep.subr.bf16.mxu0 0
        %2335 = vmatpush1.bf16.msra.mxu0 0
        %2336 = vmatprep.subr.bf16.mxu0 0
        %2337 = vmatpush1.bf16.msra.mxu0 0
        %2338 = vmatprep.subr.bf16.mxu0 0
        %2339 = vmatpush1.bf16.msra.mxu0 0
        %2340 = vmatprep.subr.bf16.mxu0 0
        %2341 = vmatpush1.bf16.msra.mxu0 0
        %2342 = vmatprep.subr.bf16.mxu0 0
        %2343 = vmatpush1.bf16.msra.mxu0 0
        %2344 = vmatprep.subr.bf16.mxu0 0
        %2345 = vmatpush1.bf16.msra.mxu0 0
        %2346 = vmatprep.subr.bf16.mxu0 0
        %2347 = vmatpush1.bf16.msra.mxu0 0
        %2348 = vmatprep.subr.bf16.mxu0 0
        %2349 = vmatpush1.bf16.msra.mxu0 0
        %2350 = vmatprep.subr.bf16.mxu0 0
        %2351 = vmatpush1.bf16.msra.mxu0 0
        %2352 = vmatprep.subr.bf16.mxu0 0
        %2353 = vmatpush1.bf16.msra.mxu0 0
        %2354 = vmatprep.subr.bf16.mxu0 0
        %2355 = vmatpush1.bf16.msra.mxu0 0
        %2356 = vmatprep.subr.bf16.mxu0 0
        %2357 = vmatpush1.bf16.msra.mxu0 0
        %2358 = vmatprep.subr.bf16.mxu0 0
        %2359 = vmatpush1.bf16.msra.mxu0 0
        %2360 = vmatprep.subr.bf16.mxu0 0
        %2361 = vmatpush1.bf16.msra.mxu0 0
        %2362 = vmatprep.mubr.bf16.mxu0 0
        %2363 = vmatmul.mubr.bf16.gmra.mrb[0].mxu0 %v2328
        %v2364 = vpop.f32.mrb[0].mxu0
        %v2365 = vadd.f32 0.0, %v2364
        %v2366 = vpop.f32.mrb[0].mxu0
        %v2367 = vadd.f32 0.0, %v2366
        %v2368 = vpop.f32.mrb[0].mxu0
        %v2369 = vadd.f32 0.0, %v2368
        %v2370 = vpop.f32.mrb[0].mxu0
        %v2371 = vadd.f32 0.0, %v2370
        %2372 = vdwg.mxu0
        %v2373 = vadd.f32 %v2297, %v2365
        %v2374 = vadd.f32 %v2298, %v2367
        %v2375 = vadd.f32 %v2299, %v2369
        %v2376 = vadd.f32 %v2300, %v2371
        %v2377 = vld [vmem:[%s7] sm:$0xff]
        %v2378 = vld [vmem:[%s7 + $0x8] sm:$0xff]
        %2380 = vset.pattern.permute.xlu0 0
        %2381 = vperm.xlu0 %2380, %v2377
        %v2382 = vpop.permute.xlu0 %2381
        %2385 = vset.pattern.permute.xlu0 0
        %2386 = vperm.xlu0 %2385, %v2378
        %v2387 = vpop.permute.xlu0 %2386
        %v2389 = vadd.f32 %v2373, %v2382
        %v2390 = vadd.f32 %v2374, %v2382
        %v2391 = vadd.f32 %v2375, %v2387
        %v2392 = vadd.f32 %v2376, %v2387
        %v2393 = vmax.f32 %v2389, 0.0
        %v2394 = vmax.f32 %v2390, 0.0
        %v2395 = vmax.f32 %v2391, 0.0
        %v2396 = vmax.f32 %v2392, 0.0
        %2397 = vrot.lane.b32.xlu0 %v2393, 17
        %v2398 = vpop.permute.xlu0 %2397
        %2399 = vrot.lane.b32.xlu0 %v2395, 17
        %v2400 = vpop.permute.xlu0 %2399
        %2401 = vrot.lane.b32.xlu0 %v2394, 17
        %v2402 = vpop.permute.xlu0 %2401
        %2403 = vrot.lane.b32.xlu0 %v2396, 17
        %v2404 = vpop.permute.xlu0 %2403
        %v2405 = vsel %vm469, %v2398, %v2402
        %v2406 = vsel %vm469, %v2400, %v2404
        %v2407 = vsel %vm469, %v2402, %v2398
        %v2408 = vsel %vm469, %v2404, %v2400
        %v2409 = vmul.f32 %v2407, %v363
        %v2410 = vmul.f32 %v2405, %v367
        %v2411 = vmul.f32 %v2408, %v363
        %v2412 = vmul.f32 %v2406, %v367
        %v2413 = vld [vmem:[%s8] sm:$0xf]
        %v2414 = vld [vmem:[%s8 + $0x4] sm:$0x3]
        %v2415 = vpack.c.bf16 %v2411, %v2409
        %v2416 = vpack.c.bf16 %v2412, %v2410
        %2417 = vrot.lane.b32.xlu0 %v2393, 16
        %v2418 = vpop.permute.xlu0 %2417
        %2419 = vrot.lane.b32.xlu0 %v2395, 16
        %v2420 = vpop.permute.xlu0 %2419
        %2421 = vrot.lane.b32.xlu0 %v2394, 16
        %v2422 = vpop.permute.xlu0 %2421
        %2423 = vrot.lane.b32.xlu0 %v2396, 16
        %v2424 = vpop.permute.xlu0 %2423
        %v2425 = vsel %vm481, %v2418, %v2422
        %v2426 = vsel %vm481, %v2420, %v2424
        %v2427 = vsel %vm481, %v2422, %v2418
        %v2428 = vsel %vm481, %v2424, %v2420
        %v2429 = vmul.f32 %v2427, %v376
        %v2430 = vmul.f32 %v2425, %v380
        %v2431 = vmul.f32 %v2428, %v376
        %v2432 = vmul.f32 %v2426, %v380
        %s2433 = scalar_lea.vmem %s8, 8
        %v2434 = vld [vmem:[%s2433] sm:$0xf]
        %v2435 = vld [vmem:[%s2433 + $0x4] sm:$0x3]
        %v2436 = vpack.c.bf16 %v2431, %v2429
        %v2437 = vpack.c.bf16 %v2432, %v2430
        %v2440 = vunpack.c.l.b16 %v2434
        %v2441 = vunpack.c.l.b16 %v2435
        %v2442 = vpack.c.b16 %v2441, %v2440
        %v2444 = vsel %vm1763, %v2442, 0
        %2446 = vmatprep.subr.bf16.mxu0 %v2437
        %2447 = vmatpush1.bf16.msra.mxu0 %v2436
        %2448 = vmatprep.subr.bf16.mxu0 0
        %2449 = vmatpush1.bf16.msra.mxu0 0
        %2450 = vmatprep.subr.bf16.mxu0 0
        %2451 = vmatpush1.bf16.msra.mxu0 0
        %2452 = vmatprep.subr.bf16.mxu0 0
        %2453 = vmatpush1.bf16.msra.mxu0 0
        %2454 = vmatprep.subr.bf16.mxu0 0
        %2455 = vmatpush1.bf16.msra.mxu0 0
        %2456 = vmatprep.subr.bf16.mxu0 0
        %2457 = vmatpush1.bf16.msra.mxu0 0
        %2458 = vmatprep.subr.bf16.mxu0 0
        %2459 = vmatpush1.bf16.msra.mxu0 0
        %2460 = vmatprep.subr.bf16.mxu0 0
        %2461 = vmatpush1.bf16.msra.mxu0 0
        %2462 = vmatprep.subr.bf16.mxu0 0
        %2463 = vmatpush1.bf16.msra.mxu0 0
        %2464 = vmatprep.subr.bf16.mxu0 0
        %2465 = vmatpush1.bf16.msra.mxu0 0
        %2466 = vmatprep.subr.bf16.mxu0 0
        %2467 = vmatpush1.bf16.msra.mxu0 0
        %2468 = vmatprep.subr.bf16.mxu0 0
        %2469 = vmatpush1.bf16.msra.mxu0 0
        %2470 = vmatprep.subr.bf16.mxu0 0
        %2471 = vmatpush1.bf16.msra.mxu0 0
        %2472 = vmatprep.subr.bf16.mxu0 0
        %2473 = vmatpush1.bf16.msra.mxu0 0
        %2474 = vmatprep.subr.bf16.mxu0 0
        %2475 = vmatpush1.bf16.msra.mxu0 0
        %2476 = vmatprep.subr.bf16.mxu0 0
        %2477 = vmatpush1.bf16.msra.mxu0 0
        %2478 = vmatprep.mubr.bf16.mxu0 0
        %2479 = vmatmul.mubr.bf16.gmra.mrb[0].mxu0 %v2444
        %v2480 = vpop.f32.mrb[0].mxu0
        %v2481 = vadd.f32 0.0, %v2480
        %v2482 = vpop.f32.mrb[0].mxu0
        %v2483 = vadd.f32 0.0, %v2482
        %v2484 = vpop.f32.mrb[0].mxu0
        %v2485 = vadd.f32 0.0, %v2484
        %v2486 = vpop.f32.mrb[0].mxu0
        %v2487 = vadd.f32 0.0, %v2486
        %2488 = vdwg.mxu0
        %v2491 = vunpack.c.l.b16 %v2413
        %v2492 = vunpack.c.l.b16 %v2414
        %v2493 = vpack.c.b16 %v2492, %v2491
        %v2495 = vsel %vm1763, %v2493, 0
        %2497 = vmatprep.subr.bf16.mxu0 %v2416
        %2498 = vmatpush1.bf16.msra.mxu0 %v2415
        %2499 = vmatprep.subr.bf16.mxu0 0
        %2500 = vmatpush1.bf16.msra.mxu0 0
        %2501 = vmatprep.subr.bf16.mxu0 0
        %2502 = vmatpush1.bf16.msra.mxu0 0
        %2503 = vmatprep.subr.bf16.mxu0 0
        %2504 = vmatpush1.bf16.msra.mxu0 0
        %2505 = vmatprep.subr.bf16.mxu0 0
        %2506 = vmatpush1.bf16.msra.mxu0 0
        %2507 = vmatprep.subr.bf16.mxu0 0
        %2508 = vmatpush1.bf16.msra.mxu0 0
        %2509 = vmatprep.subr.bf16.mxu0 0
        %2510 = vmatpush1.bf16.msra.mxu0 0
        %2511 = vmatprep.subr.bf16.mxu0 0
        %2512 = vmatpush1.bf16.msra.mxu0 0
        %2513 = vmatprep.subr.bf16.mxu0 0
        %2514 = vmatpush1.bf16.msra.mxu0 0
        %2515 = vmatprep.subr.bf16.mxu0 0
        %2516 = vmatpush1.bf16.msra.mxu0 0
        %2517 = vmatprep.subr.bf16.mxu0 0
        %2518 = vmatpush1.bf16.msra.mxu0 0
        %2519 = vmatprep.subr.bf16.mxu0 0
        %2520 = vmatpush1.bf16.msra.mxu0 0
        %2521 = vmatprep.subr.bf16.mxu0 0
        %2522 = vmatpush1.bf16.msra.mxu0 0
        %2523 = vmatprep.subr.bf16.mxu0 0
        %2524 = vmatpush1.bf16.msra.mxu0 0
        %2525 = vmatprep.subr.bf16.mxu0 0
        %2526 = vmatpush1.bf16.msra.mxu0 0
        %2527 = vmatprep.subr.bf16.mxu0 0
        %2528 = vmatpush1.bf16.msra.mxu0 0
        %2529 = vmatprep.mubr.bf16.mxu0 0
        %2530 = vmatmul.mubr.bf16.gmra.mrb[0].mxu0 %v2495
        %v2531 = vpop.f32.mrb[0].mxu0
        %v2532 = vadd.f32 %v2481, %v2531
        %v2533 = vpop.f32.mrb[0].mxu0
        %v2534 = vadd.f32 %v2483, %v2533
        %v2535 = vpop.f32.mrb[0].mxu0
        %v2536 = vadd.f32 %v2485, %v2535
        %v2537 = vpop.f32.mrb[0].mxu0
        %v2538 = vadd.f32 %v2487, %v2537
        %2539 = vdwg.mxu0
        %2540 = vrot.lane.b32.xlu0 %v2393, 15
        %v2541 = vpop.permute.xlu0 %2540
        %2542 = vrot.lane.b32.xlu0 %v2395, 15
        %v2543 = vpop.permute.xlu0 %2542
        %2544 = vrot.lane.b32.xlu0 %v2394, 15
        %v2545 = vpop.permute.xlu0 %2544
        %2546 = vrot.lane.b32.xlu0 %v2396, 15
        %v2547 = vpop.permute.xlu0 %2546
        %v2548 = vsel %vm596, %v2541, %v2545
        %v2549 = vsel %vm596, %v2543, %v2547
        %v2550 = vsel %vm596, %v2545, %v2541
        %v2551 = vsel %vm596, %v2547, %v2543
        %v2552 = vmul.f32 %v2550, %v389
        %v2553 = vmul.f32 %v2548, %v393
        %v2554 = vmul.f32 %v2551, %v389
        %v2555 = vmul.f32 %v2549, %v393
        %s2556 = scalar_lea.vmem %s8, 16
        %v2557 = vld [vmem:[%s2556] sm:$0xf]
        %v2558 = vld [vmem:[%s2556 + $0x4] sm:$0x3]
        %v2559 = vpack.c.bf16 %v2554, %v2552
        %v2560 = vpack.c.bf16 %v2555, %v2553
        %v2563 = vunpack.c.l.b16 %v2557
        %v2564 = vunpack.c.l.b16 %v2558
        %v2565 = vpack.c.b16 %v2564, %v2563
        %v2567 = vsel %vm1763, %v2565, 0
        %2569 = vmatprep.subr.bf16.mxu0 %v2560
        %2570 = vmatpush1.bf16.msra.mxu0 %v2559
        %2571 = vmatprep.subr.bf16.mxu0 0
        %2572 = vmatpush1.bf16.msra.mxu0 0
        %2573 = vmatprep.subr.bf16.mxu0 0
        %2574 = vmatpush1.bf16.msra.mxu0 0
        %2575 = vmatprep.subr.bf16.mxu0 0
        %2576 = vmatpush1.bf16.msra.mxu0 0
        %2577 = vmatprep.subr.bf16.mxu0 0
        %2578 = vmatpush1.bf16.msra.mxu0 0
        %2579 = vmatprep.subr.bf16.mxu0 0
        %2580 = vmatpush1.bf16.msra.mxu0 0
        %2581 = vmatprep.subr.bf16.mxu0 0
        %2582 = vmatpush1.bf16.msra.mxu0 0
        %2583 = vmatprep.subr.bf16.mxu0 0
        %2584 = vmatpush1.bf16.msra.mxu0 0
        %2585 = vmatprep.subr.bf16.mxu0 0
        %2586 = vmatpush1.bf16.msra.mxu0 0
        %2587 = vmatprep.subr.bf16.mxu0 0
        %2588 = vmatpush1.bf16.msra.mxu0 0
        %2589 = vmatprep.subr.bf16.mxu0 0
        %2590 = vmatpush1.bf16.msra.mxu0 0
        %2591 = vmatprep.subr.bf16.mxu0 0
        %2592 = vmatpush1.bf16.msra.mxu0 0
        %2593 = vmatprep.subr.bf16.mxu0 0
        %2594 = vmatpush1.bf16.msra.mxu0 0
        %2595 = vmatprep.subr.bf16.mxu0 0
        %2596 = vmatpush1.bf16.msra.mxu0 0
        %2597 = vmatprep.subr.bf16.mxu0 0
        %2598 = vmatpush1.bf16.msra.mxu0 0
        %2599 = vmatprep.subr.bf16.mxu0 0
        %2600 = vmatpush1.bf16.msra.mxu0 0
        %2601 = vmatprep.mubr.bf16.mxu0 0
        %2602 = vmatmul.mubr.bf16.gmra.mrb[0].mxu0 %v2567
        %v2603 = vpop.f32.mrb[0].mxu0
        %v2604 = vadd.f32 0.0, %v2603
        %v2605 = vpop.f32.mrb[0].mxu0
        %v2606 = vadd.f32 0.0, %v2605
        %v2607 = vpop.f32.mrb[0].mxu0
        %v2608 = vadd.f32 0.0, %v2607
        %v2609 = vpop.f32.mrb[0].mxu0
        %v2610 = vadd.f32 0.0, %v2609
        %2611 = vdwg.mxu0
        %v2612 = vadd.f32 %v2532, %v2604
        %v2613 = vadd.f32 %v2534, %v2606
        %v2614 = vadd.f32 %v2536, %v2608
        %v2615 = vadd.f32 %v2538, %v2610
        %2616 = vrot.lane.b32.xlu0 %v2393, 1
        %v2617 = vpop.permute.xlu0 %2616
        %2618 = vrot.lane.b32.xlu0 %v2395, 1
        %v2619 = vpop.permute.xlu0 %2618
        %2620 = vrot.lane.b32.xlu0 %v2394, 1
        %v2621 = vpop.permute.xlu0 %2620
        %2622 = vrot.lane.b32.xlu0 %v2396, 1
        %v2623 = vpop.permute.xlu0 %2622
        %v2624 = vsel %vm661, %v2617, %v2621
        %v2625 = vsel %vm661, %v2619, %v2623
        %v2626 = vsel %vm661, %v2621, %v2617
        %v2627 = vsel %vm661, %v2623, %v2619
        %v2628 = vmul.f32 %v2626, %v402
        %v2629 = vmul.f32 %v2624, %v406
        %v2630 = vmul.f32 %v2627, %v402
        %v2631 = vmul.f32 %v2625, %v406
        %s2632 = scalar_lea.vmem %s8, 24
        %v2633 = vld [vmem:[%s2632] sm:$0xf]
        %v2634 = vld [vmem:[%s2632 + $0x4] sm:$0x3]
        %v2635 = vpack.c.bf16 %v2630, %v2628
        %v2636 = vpack.c.bf16 %v2631, %v2629
        %v2639 = vunpack.c.l.b16 %v2633
        %v2640 = vunpack.c.l.b16 %v2634
        %v2641 = vpack.c.b16 %v2640, %v2639
        %v2643 = vsel %vm1763, %v2641, 0
        %2645 = vmatprep.subr.bf16.mxu0 %v2636
        %2646 = vmatpush1.bf16.msra.mxu0 %v2635
        %2647 = vmatprep.subr.bf16.mxu0 0
        %2648 = vmatpush1.bf16.msra.mxu0 0
        %2649 = vmatprep.subr.bf16.mxu0 0
        %2650 = vmatpush1.bf16.msra.mxu0 0
        %2651 = vmatprep.subr.bf16.mxu0 0
        %2652 = vmatpush1.bf16.msra.mxu0 0
        %2653 = vmatprep.subr.bf16.mxu0 0
        %2654 = vmatpush1.bf16.msra.mxu0 0
        %2655 = vmatprep.subr.bf16.mxu0 0
        %2656 = vmatpush1.bf16.msra.mxu0 0
        %2657 = vmatprep.subr.bf16.mxu0 0
        %2658 = vmatpush1.bf16.msra.mxu0 0
        %2659 = vmatprep.subr.bf16.mxu0 0
        %2660 = vmatpush1.bf16.msra.mxu0 0
        %2661 = vmatprep.subr.bf16.mxu0 0
        %2662 = vmatpush1.bf16.msra.mxu0 0
        %2663 = vmatprep.subr.bf16.mxu0 0
        %2664 = vmatpush1.bf16.msra.mxu0 0
        %2665 = vmatprep.subr.bf16.mxu0 0
        %2666 = vmatpush1.bf16.msra.mxu0 0
        %2667 = vmatprep.subr.bf16.mxu0 0
        %2668 = vmatpush1.bf16.msra.mxu0 0
        %2669 = vmatprep.subr.bf16.mxu0 0
        %2670 = vmatpush1.bf16.msra.mxu0 0
        %2671 = vmatprep.subr.bf16.mxu0 0
        %2672 = vmatpush1.bf16.msra.mxu0 0
        %2673 = vmatprep.subr.bf16.mxu0 0
        %2674 = vmatpush1.bf16.msra.mxu0 0
        %2675 = vmatprep.subr.bf16.mxu0 0
        %2676 = vmatpush1.bf16.msra.mxu0 0
        %2677 = vmatprep.mubr.bf16.mxu0 0
        %2678 = vmatmul.mubr.bf16.gmra.mrb[0].mxu0 %v2643
        %v2679 = vpop.f32.mrb[0].mxu0
        %v2680 = vadd.f32 0.0, %v2679
        %v2681 = vpop.f32.mrb[0].mxu0
        %v2682 = vadd.f32 0.0, %v2681
        %v2683 = vpop.f32.mrb[0].mxu0
        %v2684 = vadd.f32 0.0, %v2683
        %v2685 = vpop.f32.mrb[0].mxu0
        %v2686 = vadd.f32 0.0, %v2685
        %2687 = vdwg.mxu0
        %v2688 = vadd.f32 %v2612, %v2680
        %v2689 = vadd.f32 %v2613, %v2682
        %v2690 = vadd.f32 %v2614, %v2684
        %v2691 = vadd.f32 %v2615, %v2686
        %s2692 = scalar_lea.vmem %s8, 32
        %v2693 = vld [vmem:[%s2692] sm:$0xf]
        %v2694 = vld [vmem:[%s2692 + $0x4] sm:$0x3]
        %v2695 = vpack.c.bf16 %v2395, %v2393
        %v2696 = vpack.c.bf16 %v2396, %v2394
        %v2699 = vunpack.c.l.b16 %v2693
        %v2700 = vunpack.c.l.b16 %v2694
        %v2701 = vpack.c.b16 %v2700, %v2699
        %v2703 = vsel %vm1763, %v2701, 0
        %2705 = vmatprep.subr.bf16.mxu0 %v2696
        %2706 = vmatpush1.bf16.msra.mxu0 %v2695
        %2707 = vmatprep.subr.bf16.mxu0 0
        %2708 = vmatpush1.bf16.msra.mxu0 0
        %2709 = vmatprep.subr.bf16.mxu0 0
        %2710 = vmatpush1.bf16.msra.mxu0 0
        %2711 = vmatprep.subr.bf16.mxu0 0
        %2712 = vmatpush1.bf16.msra.mxu0 0
        %2713 = vmatprep.subr.bf16.mxu0 0
        %2714 = vmatpush1.bf16.msra.mxu0 0
        %2715 = vmatprep.subr.bf16.mxu0 0
        %2716 = vmatpush1.bf16.msra.mxu0 0
        %2717 = vmatprep.subr.bf16.mxu0 0
        %2718 = vmatpush1.bf16.msra.mxu0 0
        %2719 = vmatprep.subr.bf16.mxu0 0
        %2720 = vmatpush1.bf16.msra.mxu0 0
        %2721 = vmatprep.subr.bf16.mxu0 0
        %2722 = vmatpush1.bf16.msra.mxu0 0
        %2723 = vmatprep.subr.bf16.mxu0 0
        %2724 = vmatpush1.bf16.msra.mxu0 0
        %2725 = vmatprep.subr.bf16.mxu0 0
        %2726 = vmatpush1.bf16.msra.mxu0 0
        %2727 = vmatprep.subr.bf16.mxu0 0
        %2728 = vmatpush1.bf16.msra.mxu0 0
        %2729 = vmatprep.subr.bf16.mxu0 0
        %2730 = vmatpush1.bf16.msra.mxu0 0
        %2731 = vmatprep.subr.bf16.mxu0 0
        %2732 = vmatpush1.bf16.msra.mxu0 0
        %2733 = vmatprep.subr.bf16.mxu0 0
        %2734 = vmatpush1.bf16.msra.mxu0 0
        %2735 = vmatprep.subr.bf16.mxu0 0
        %2736 = vmatpush1.bf16.msra.mxu0 0
        %2737 = vmatprep.mubr.bf16.mxu0 0
        %2738 = vmatmul.mubr.bf16.gmra.mrb[0].mxu0 %v2703
        %v2739 = vpop.f32.mrb[0].mxu0
        %v2740 = vadd.f32 0.0, %v2739
        %v2741 = vpop.f32.mrb[0].mxu0
        %v2742 = vadd.f32 0.0, %v2741
        %v2743 = vpop.f32.mrb[0].mxu0
        %v2744 = vadd.f32 0.0, %v2743
        %v2745 = vpop.f32.mrb[0].mxu0
        %v2746 = vadd.f32 0.0, %v2745
        %2747 = vdwg.mxu0
        %v2748 = vadd.f32 %v2688, %v2740
        %v2749 = vadd.f32 %v2689, %v2742
        %v2750 = vadd.f32 %v2690, %v2744
        %v2751 = vadd.f32 %v2691, %v2746
        %2752 = vrot.lane.b32.xlu0 %v2393, 127
        %v2753 = vpop.permute.xlu0 %2752
        %2754 = vrot.lane.b32.xlu0 %v2395, 127
        %v2755 = vpop.permute.xlu0 %2754
        %2756 = vrot.lane.b32.xlu0 %v2394, 127
        %v2757 = vpop.permute.xlu0 %2756
        %2758 = vrot.lane.b32.xlu0 %v2396, 127
        %v2759 = vpop.permute.xlu0 %2758
        %v2760 = vsel %vm782, %v2753, %v2757
        %v2761 = vsel %vm782, %v2755, %v2759
        %v2762 = vsel %vm782, %v2757, %v2753
        %v2763 = vsel %vm782, %v2759, %v2755
        %v2764 = vmul.f32 %v2760, %v415
        %v2765 = vmul.f32 %v2762, %v419
        %v2766 = vmul.f32 %v2761, %v415
        %v2767 = vmul.f32 %v2763, %v419
        %s2768 = scalar_lea.vmem %s8, 40
        %v2769 = vld [vmem:[%s2768] sm:$0xf]
        %v2770 = vld [vmem:[%s2768 + $0x4] sm:$0x3]
        %v2771 = vpack.c.bf16 %v2766, %v2764
        %v2772 = vpack.c.bf16 %v2767, %v2765
        %v2775 = vunpack.c.l.b16 %v2769
        %v2776 = vunpack.c.l.b16 %v2770
        %v2777 = vpack.c.b16 %v2776, %v2775
        %v2779 = vsel %vm1763, %v2777, 0
        %2781 = vmatprep.subr.bf16.mxu0 %v2772
        %2782 = vmatpush1.bf16.msra.mxu0 %v2771
        %2783 = vmatprep.subr.bf16.mxu0 0
        %2784 = vmatpush1.bf16.msra.mxu0 0
        %2785 = vmatprep.subr.bf16.mxu0 0
        %2786 = vmatpush1.bf16.msra.mxu0 0
        %2787 = vmatprep.subr.bf16.mxu0 0
        %2788 = vmatpush1.bf16.msra.mxu0 0
        %2789 = vmatprep.subr.bf16.mxu0 0
        %2790 = vmatpush1.bf16.msra.mxu0 0
        %2791 = vmatprep.subr.bf16.mxu0 0
        %2792 = vmatpush1.bf16.msra.mxu0 0
        %2793 = vmatprep.subr.bf16.mxu0 0
        %2794 = vmatpush1.bf16.msra.mxu0 0
        %2795 = vmatprep.subr.bf16.mxu0 0
        %2796 = vmatpush1.bf16.msra.mxu0 0
        %2797 = vmatprep.subr.bf16.mxu0 0
        %2798 = vmatpush1.bf16.msra.mxu0 0
        %2799 = vmatprep.subr.bf16.mxu0 0
        %2800 = vmatpush1.bf16.msra.mxu0 0
        %2801 = vmatprep.subr.bf16.mxu0 0
        %2802 = vmatpush1.bf16.msra.mxu0 0
        %2803 = vmatprep.subr.bf16.mxu0 0
        %2804 = vmatpush1.bf16.msra.mxu0 0
        %2805 = vmatprep.subr.bf16.mxu0 0
        %2806 = vmatpush1.bf16.msra.mxu0 0
        %2807 = vmatprep.subr.bf16.mxu0 0
        %2808 = vmatpush1.bf16.msra.mxu0 0
        %2809 = vmatprep.subr.bf16.mxu0 0
        %2810 = vmatpush1.bf16.msra.mxu0 0
        %2811 = vmatprep.subr.bf16.mxu0 0
        %2812 = vmatpush1.bf16.msra.mxu0 0
        %2813 = vmatprep.mubr.bf16.mxu0 0
        %2814 = vmatmul.mubr.bf16.gmra.mrb[0].mxu0 %v2779
        %v2815 = vpop.f32.mrb[0].mxu0
        %v2816 = vadd.f32 0.0, %v2815
        %v2817 = vpop.f32.mrb[0].mxu0
        %v2818 = vadd.f32 0.0, %v2817
        %v2819 = vpop.f32.mrb[0].mxu0
        %v2820 = vadd.f32 0.0, %v2819
        %v2821 = vpop.f32.mrb[0].mxu0
        %v2822 = vadd.f32 0.0, %v2821
        %2823 = vdwg.mxu0
        %v2824 = vadd.f32 %v2748, %v2816
        %v2825 = vadd.f32 %v2749, %v2818
        %v2826 = vadd.f32 %v2750, %v2820
        %v2827 = vadd.f32 %v2751, %v2822
        %2828 = vrot.lane.b32.xlu0 %v2393, 113
        %v2829 = vpop.permute.xlu0 %2828
        %2830 = vrot.lane.b32.xlu0 %v2395, 113
        %v2831 = vpop.permute.xlu0 %2830
        %2832 = vrot.lane.b32.xlu0 %v2394, 113
        %v2833 = vpop.permute.xlu0 %2832
        %2834 = vrot.lane.b32.xlu0 %v2396, 113
        %v2835 = vpop.permute.xlu0 %2834
        %v2836 = vsel %vm847, %v2829, %v2833
        %v2837 = vsel %vm847, %v2831, %v2835
        %v2838 = vsel %vm847, %v2833, %v2829
        %v2839 = vsel %vm847, %v2835, %v2831
        %v2840 = vmul.f32 %v2836, %v428
        %v2841 = vmul.f32 %v2838, %v432
        %v2842 = vmul.f32 %v2837, %v428
        %v2843 = vmul.f32 %v2839, %v432
        %s2844 = scalar_lea.vmem %s8, 48
        %v2845 = vld [vmem:[%s2844] sm:$0xf]
        %v2846 = vld [vmem:[%s2844 + $0x4] sm:$0x3]
        %v2847 = vpack.c.bf16 %v2842, %v2840
        %v2848 = vpack.c.bf16 %v2843, %v2841
        %v2851 = vunpack.c.l.b16 %v2845
        %v2852 = vunpack.c.l.b16 %v2846
        %v2853 = vpack.c.b16 %v2852, %v2851
        %v2855 = vsel %vm1763, %v2853, 0
        %2857 = vmatprep.subr.bf16.mxu0 %v2848
        %2858 = vmatpush1.bf16.msra.mxu0 %v2847
        %2859 = vmatprep.subr.bf16.mxu0 0
        %2860 = vmatpush1.bf16.msra.mxu0 0
        %2861 = vmatprep.subr.bf16.mxu0 0
        %2862 = vmatpush1.bf16.msra.mxu0 0
        %2863 = vmatprep.subr.bf16.mxu0 0
        %2864 = vmatpush1.bf16.msra.mxu0 0
        %2865 = vmatprep.subr.bf16.mxu0 0
        %2866 = vmatpush1.bf16.msra.mxu0 0
        %2867 = vmatprep.subr.bf16.mxu0 0
        %2868 = vmatpush1.bf16.msra.mxu0 0
        %2869 = vmatprep.subr.bf16.mxu0 0
        %2870 = vmatpush1.bf16.msra.mxu0 0
        %2871 = vmatprep.subr.bf16.mxu0 0
        %2872 = vmatpush1.bf16.msra.mxu0 0
        %2873 = vmatprep.subr.bf16.mxu0 0
        %2874 = vmatpush1.bf16.msra.mxu0 0
        %2875 = vmatprep.subr.bf16.mxu0 0
        %2876 = vmatpush1.bf16.msra.mxu0 0
        %2877 = vmatprep.subr.bf16.mxu0 0
        %2878 = vmatpush1.bf16.msra.mxu0 0
        %2879 = vmatprep.subr.bf16.mxu0 0
        %2880 = vmatpush1.bf16.msra.mxu0 0
        %2881 = vmatprep.subr.bf16.mxu0 0
        %2882 = vmatpush1.bf16.msra.mxu0 0
        %2883 = vmatprep.subr.bf16.mxu0 0
        %2884 = vmatpush1.bf16.msra.mxu0 0
        %2885 = vmatprep.subr.bf16.mxu0 0
        %2886 = vmatpush1.bf16.msra.mxu0 0
        %2887 = vmatprep.subr.bf16.mxu0 0
        %2888 = vmatpush1.bf16.msra.mxu0 0
        %2889 = vmatprep.mubr.bf16.mxu0 0
        %2890 = vmatmul.mubr.bf16.gmra.mrb[0].mxu0 %v2855
        %v2891 = vpop.f32.mrb[0].mxu0
        %v2892 = vadd.f32 0.0, %v2891
        %v2893 = vpop.f32.mrb[0].mxu0
        %v2894 = vadd.f32 0.0, %v2893
        %v2895 = vpop.f32.mrb[0].mxu0
        %v2896 = vadd.f32 0.0, %v2895
        %v2897 = vpop.f32.mrb[0].mxu0
        %v2898 = vadd.f32 0.0, %v2897
        %2899 = vdwg.mxu0
        %v2900 = vadd.f32 %v2824, %v2892
        %v2901 = vadd.f32 %v2825, %v2894
        %v2902 = vadd.f32 %v2826, %v2896
        %v2903 = vadd.f32 %v2827, %v2898
        %2904 = vrot.lane.b32.xlu0 %v2393, 112
        %v2905 = vpop.permute.xlu0 %2904
        %2906 = vrot.lane.b32.xlu0 %v2395, 112
        %v2907 = vpop.permute.xlu0 %2906
        %2908 = vrot.lane.b32.xlu0 %v2394, 112
        %v2909 = vpop.permute.xlu0 %2908
        %2910 = vrot.lane.b32.xlu0 %v2396, 112
        %v2911 = vpop.permute.xlu0 %2910
        %v2912 = vsel %vm912, %v2905, %v2909
        %v2913 = vsel %vm912, %v2907, %v2911
        %v2914 = vsel %vm912, %v2909, %v2905
        %v2915 = vsel %vm912, %v2911, %v2907
        %v2916 = vmul.f32 %v2912, %v441
        %v2917 = vmul.f32 %v2914, %v445
        %v2918 = vmul.f32 %v2913, %v441
        %v2919 = vmul.f32 %v2915, %v445
        %s2920 = scalar_lea.vmem %s8, 56
        %v2921 = vld [vmem:[%s2920] sm:$0xf]
        %v2922 = vld [vmem:[%s2920 + $0x4] sm:$0x3]
        %v2923 = vpack.c.bf16 %v2918, %v2916
        %v2924 = vpack.c.bf16 %v2919, %v2917
        %v2927 = vunpack.c.l.b16 %v2921
        %v2928 = vunpack.c.l.b16 %v2922
        %v2929 = vpack.c.b16 %v2928, %v2927
        %v2931 = vsel %vm1763, %v2929, 0
        %2933 = vmatprep.subr.bf16.mxu0 %v2924
        %2934 = vmatpush1.bf16.msra.mxu0 %v2923
        %2935 = vmatprep.subr.bf16.mxu0 0
        %2936 = vmatpush1.bf16.msra.mxu0 0
        %2937 = vmatprep.subr.bf16.mxu0 0
        %2938 = vmatpush1.bf16.msra.mxu0 0
        %2939 = vmatprep.subr.bf16.mxu0 0
        %2940 = vmatpush1.bf16.msra.mxu0 0
        %2941 = vmatprep.subr.bf16.mxu0 0
        %2942 = vmatpush1.bf16.msra.mxu0 0
        %2943 = vmatprep.subr.bf16.mxu0 0
        %2944 = vmatpush1.bf16.msra.mxu0 0
        %2945 = vmatprep.subr.bf16.mxu0 0
        %2946 = vmatpush1.bf16.msra.mxu0 0
        %2947 = vmatprep.subr.bf16.mxu0 0
        %2948 = vmatpush1.bf16.msra.mxu0 0
        %2949 = vmatprep.subr.bf16.mxu0 0
        %2950 = vmatpush1.bf16.msra.mxu0 0
        %2951 = vmatprep.subr.bf16.mxu0 0
        %2952 = vmatpush1.bf16.msra.mxu0 0
        %2953 = vmatprep.subr.bf16.mxu0 0
        %2954 = vmatpush1.bf16.msra.mxu0 0
        %2955 = vmatprep.subr.bf16.mxu0 0
        %2956 = vmatpush1.bf16.msra.mxu0 0
        %2957 = vmatprep.subr.bf16.mxu0 0
        %2958 = vmatpush1.bf16.msra.mxu0 0
        %2959 = vmatprep.subr.bf16.mxu0 0
        %2960 = vmatpush1.bf16.msra.mxu0 0
        %2961 = vmatprep.subr.bf16.mxu0 0
        %2962 = vmatpush1.bf16.msra.mxu0 0
        %2963 = vmatprep.subr.bf16.mxu0 0
        %2964 = vmatpush1.bf16.msra.mxu0 0
        %2965 = vmatprep.mubr.bf16.mxu0 0
        %2966 = vmatmul.mubr.bf16.gmra.mrb[0].mxu0 %v2931
        %v2967 = vpop.f32.mrb[0].mxu0
        %v2968 = vadd.f32 0.0, %v2967
        %v2969 = vpop.f32.mrb[0].mxu0
        %v2970 = vadd.f32 0.0, %v2969
        %v2971 = vpop.f32.mrb[0].mxu0
        %v2972 = vadd.f32 0.0, %v2971
        %v2973 = vpop.f32.mrb[0].mxu0
        %v2974 = vadd.f32 0.0, %v2973
        %2975 = vdwg.mxu0
        %v2976 = vadd.f32 %v2900, %v2968
        %v2977 = vadd.f32 %v2901, %v2970
        %v2978 = vadd.f32 %v2902, %v2972
        %v2979 = vadd.f32 %v2903, %v2974
        %2980 = vrot.lane.b32.xlu0 %v2393, 111
        %v2981 = vpop.permute.xlu0 %2980
        %2982 = vrot.lane.b32.xlu0 %v2395, 111
        %v2983 = vpop.permute.xlu0 %2982
        %2984 = vrot.lane.b32.xlu0 %v2394, 111
        %v2985 = vpop.permute.xlu0 %2984
        %2986 = vrot.lane.b32.xlu0 %v2396, 111
        %v2987 = vpop.permute.xlu0 %2986
        %v2988 = vsel %vm977, %v2981, %v2985
        %v2989 = vsel %vm977, %v2983, %v2987
        %v2990 = vsel %vm977, %v2985, %v2981
        %v2991 = vsel %vm977, %v2987, %v2983
        %v2992 = vmul.f32 %v2988, %v454
        %v2993 = vmul.f32 %v2990, %v458
        %v2994 = vmul.f32 %v2989, %v454
        %v2995 = vmul.f32 %v2991, %v458
        %s2996 = scalar_lea.vmem %s8, 64
        %v2997 = vld [vmem:[%s2996] sm:$0xf]
        %v2998 = vld [vmem:[%s2996 + $0x4] sm:$0x3]
        %v2999 = vpack.c.bf16 %v2994, %v2992
        %v3000 = vpack.c.bf16 %v2995, %v2993
        %v3003 = vunpack.c.l.b16 %v2997
        %v3004 = vunpack.c.l.b16 %v2998
        %v3005 = vpack.c.b16 %v3004, %v3003
        %v3007 = vsel %vm1763, %v3005, 0
        %3009 = vmatprep.subr.bf16.mxu0 %v3000
        %3010 = vmatpush1.bf16.msra.mxu0 %v2999
        %3011 = vmatprep.subr.bf16.mxu0 0
        %3012 = vmatpush1.bf16.msra.mxu0 0
        %3013 = vmatprep.subr.bf16.mxu0 0
        %3014 = vmatpush1.bf16.msra.mxu0 0
        %3015 = vmatprep.subr.bf16.mxu0 0
        %3016 = vmatpush1.bf16.msra.mxu0 0
        %3017 = vmatprep.subr.bf16.mxu0 0
        %3018 = vmatpush1.bf16.msra.mxu0 0
        %3019 = vmatprep.subr.bf16.mxu0 0
        %3020 = vmatpush1.bf16.msra.mxu0 0
        %3021 = vmatprep.subr.bf16.mxu0 0
        %3022 = vmatpush1.bf16.msra.mxu0 0
        %3023 = vmatprep.subr.bf16.mxu0 0
        %3024 = vmatpush1.bf16.msra.mxu0 0
        %3025 = vmatprep.subr.bf16.mxu0 0
        %3026 = vmatpush1.bf16.msra.mxu0 0
        %3027 = vmatprep.subr.bf16.mxu0 0
        %3028 = vmatpush1.bf16.msra.mxu0 0
        %3029 = vmatprep.subr.bf16.mxu0 0
        %3030 = vmatpush1.bf16.msra.mxu0 0
        %3031 = vmatprep.subr.bf16.mxu0 0
        %3032 = vmatpush1.bf16.msra.mxu0 0
        %3033 = vmatprep.subr.bf16.mxu0 0
        %3034 = vmatpush1.bf16.msra.mxu0 0
        %3035 = vmatprep.subr.bf16.mxu0 0
        %3036 = vmatpush1.bf16.msra.mxu0 0
        %3037 = vmatprep.subr.bf16.mxu0 0
        %3038 = vmatpush1.bf16.msra.mxu0 0
        %3039 = vmatprep.subr.bf16.mxu0 0
        %3040 = vmatpush1.bf16.msra.mxu0 0
        %3041 = vmatprep.mubr.bf16.mxu0 0
        %3042 = vmatmul.mubr.bf16.gmra.mrb[0].mxu0 %v3007
        %v3043 = vpop.f32.mrb[0].mxu0
        %v3044 = vadd.f32 0.0, %v3043
        %v3045 = vpop.f32.mrb[0].mxu0
        %v3046 = vadd.f32 0.0, %v3045
        %v3047 = vpop.f32.mrb[0].mxu0
        %v3048 = vadd.f32 0.0, %v3047
        %v3049 = vpop.f32.mrb[0].mxu0
        %v3050 = vadd.f32 0.0, %v3049
        %3051 = vdwg.mxu0
        %v3052 = vadd.f32 %v2976, %v3044
        %v3053 = vadd.f32 %v2977, %v3046
        %v3054 = vadd.f32 %v2978, %v3048
        %v3055 = vadd.f32 %v2979, %v3050
        %v3056 = vld [vmem:[%s9] sm:$0xff]
        %v3057 = vld [vmem:[%s9 + $0x8] sm:$0x7]
        %3059 = vset.pattern.permute.xlu0 0
        %3060 = vperm.xlu0 %3059, %v3056
        %v3061 = vpop.permute.xlu0 %3060
        %3064 = vset.pattern.permute.xlu0 0
        %3065 = vperm.xlu0 %3064, %v3057
        %v3066 = vpop.permute.xlu0 %3065
        %v3068 = vadd.f32 %v3052, %v3061
        %v3069 = vadd.f32 %v3053, %v3061
        %v3070 = vadd.f32 %v3054, %v3066
        %v3071 = vadd.f32 %v3055, %v3066
        %vm3072 = vcmask 1042432
        %v3073 = vsel %vm3072, %v3070, -inf
        %v3074 = vmax.f32 %v3068, %v3073
        %v3075 = vrot.slane %v3074, 4
        %v3076 = vmax.f32 %v3074, %v3075
        %v3077 = vrot.slane %v3076, 2
        %v3078 = vmax.f32 %v3076, %v3077
        %v3079 = vrot.slane %v3078, 1
        %v3080 = vmax.f32 %v3078, %v3079
        %v3081 = vsel %vm3072, %v3071, -inf
        %v3082 = vmax.f32 %v3069, %v3081
        %v3083 = vrot.slane %v3082, 4
        %v3084 = vmax.f32 %v3082, %v3083
        %v3085 = vrot.slane %v3084, 2
        %v3086 = vmax.f32 %v3084, %v3085
        %v3087 = vrot.slane %v3086, 1
        %v3088 = vmax.f32 %v3086, %v3087
        %v3089 = vsub.f32 %v3068, %v3080
        %v3090 = vsub.f32 %v3069, %v3088
        %v3091 = vsub.f32 %v3070, %v3080
        %v3092 = vsub.f32 %v3071, %v3088
        %v3093 = vmul.f32 %v3089, 1.442695
        %v3094 = vpow.pop %v3093
        %v3095 = vmul.f32 %v3090, 1.442695
        %v3096 = vpow.pop %v3095
        %v3097 = vmul.f32 %v3091, 1.442695
        %v3098 = vpow.pop %v3097
        %v3099 = vmul.f32 %v3092, 1.442695
        %v3100 = vpow.pop %v3099
        %v3101 = vsel %vm3072, %v3098, 0.0
        %v3102 = vadd.f32 %v3094, %v3101
        %v3103 = vrot.slane %v3102, 4
        %v3104 = vadd.f32 %v3102, %v3103
        %v3105 = vrot.slane %v3104, 2
        %v3106 = vadd.f32 %v3104, %v3105
        %v3107 = vrot.slane %v3106, 1
        %v3108 = vadd.f32 %v3106, %v3107
        %v3109 = vsel %vm3072, %v3100, 0.0
        %v3110 = vadd.f32 %v3096, %v3109
        %v3111 = vrot.slane %v3110, 4
        %v3112 = vadd.f32 %v3110, %v3111
        %v3113 = vrot.slane %v3112, 2
        %v3114 = vadd.f32 %v3112, %v3113
        %v3115 = vrot.slane %v3114, 1
        %v3116 = vadd.f32 %v3114, %v3115
        %v3117 = vrcp.pop %v3108
        %v3118 = vrcp.pop %v3116
        %v3119 = vmul.f32 %v3108, %v3117
        %v3120 = vmul.f32 %v3116, %v3118
        %v3121 = vsub.f32 2.0, %v3119
        %v3122 = vsub.f32 2.0, %v3120
        %v3123 = vmul.f32 %v3117, %v3121
        %v3124 = vmul.f32 %v3118, %v3122
        %v3125 = vmul.f32 %v3094, %v3123
        %v3126 = vmul.f32 %v3096, %v3124
        %v3127 = vmul.f32 %v3098, %v3123
        %v3128 = vmul.f32 %v3100, %v3124
        %3129 = vst [vmem:[%s349] sm:$0xff] %v3125
        %3130 = vst [vmem:[%s349 + $0x8] sm:$0xff] %v3126
        %3131 = vst [vmem:[%s349 + $0x10] sm:$0x7] %v3127
        %3132 = vst [vmem:[%s349 + $0x18] sm:$0x7] %v3128
        %s3133 = sand.u32 %s244, 1
        %s3134 = sand.u32 %s244, 1
        %s3135 = smul.addr %s3134, 32
        %s3136 = scalar_lea.vmem [#allocation2], %s3135
        // Predicated region
        $region61: #{parts_model_forward.1} parent=59 // pred_check
          %p3137 = pneg %p254
        $region62: #{parts_model_forward.1} parent=59 // pred_check_branch
          %3139 = sbr.rel (%p3137) target = $region64
        $region63: #{parts_model_forward.1} parent=59 // pred_region
          %s3140 = smul.u32 2, %s21
          %s3141 = smul.addr %s3140, 8
          %s3142 = scalar_lea.vmem %s10, %s3141
          // Predicated region
          $region65: #{parts_model_forward.1} parent=63 // pred_check
            _
          $region66: #{parts_model_forward.1} parent=63 // pred_check_branch
            %3144 = sbr.rel (0) target = $region68
          $region67: #{parts_model_forward.1} parent=63 // pred_region
            // Predicated region
            $region69: #{parts_model_forward.1} parent=67 // pred_check
              _
            $region70: #{parts_model_forward.1} parent=67 // pred_check_branch
              %3146 = sbr.rel (0) target = $region72
            $region71: #{parts_model_forward.1} parent=67 // pred_region
              loop: start=0, step=1, limit=1
              $region73: #{parts_model_forward.1} parent=71 // loop_pre_header
                _
              $region74: #{parts_model_forward.1} parent=71 // loop_header
                %s3148 = sphi 0, %s3152
                %p3149 = scmp.ge.s32.totalorder %s3148, 1
                %s3153 = sphi %s3136, %s3136
                %s3154 = sphi %s3142, %s3142
              $region75: #{parts_model_forward.1} parent=71 // loop_header_branch
                %3151 = sbr.rel (%p3149) target = $region79
              $region76: #{parts_model_forward.1} parent=71 // loop_body
                %v3155 = vld [vmem:[%s3153] sm:$0xff]
                %3156 = vst [vmem:[%s3154] sm:$0xff] %v3155
                %v3157 = vld [vmem:[%s3153 + $0x8] sm:$0xff]
                %3158 = vst [vmem:[%s3154 + $0x8] sm:$0xff] %v3157
                %v3159 = vld [vmem:[%s3153 + $0x10] sm:$0xff]
                %3160 = vst [vmem:[%s3154 + $0x20] sm:$0xff] %v3159
                %v3161 = vld [vmem:[%s3153 + $0x18] sm:$0xff]
                %3162 = vst [vmem:[%s3154 + $0x28] sm:$0xff] %v3161
              $region77: #{parts_model_forward.1} parent=71 // loop_footer
                %s3152 = sadd.s32 1, %s3148
              $region78: #{parts_model_forward.1} parent=71 // loop_footer_branch
                %3147 = sbr.rel target = $region74
              $region79: #{parts_model_forward.1} parent=71 // loop_exit
                _
            $region72: #{parts_model_forward.1} parent=67 // pred_fallthru
              _
            // Predicated region
            $region80: #{parts_model_forward.1} parent=67 // pred_check
              _
            $region81: #{parts_model_forward.1} parent=67 // pred_check_branch
              %3164 = sbr.rel target = $region83
            $region82: #{parts_model_forward.1} parent=67 // pred_region
              _
            $region83: #{parts_model_forward.1} parent=67 // pred_fallthru
              _
          $region68: #{parts_model_forward.1} parent=63 // pred_fallthru
            _
          %3165 = vnop
        $region64: #{parts_model_forward.1} parent=59 // pred_fallthru
          _
      $region60: #{parts_model_forward.1} parent=5 // pred_fallthru
        _
      %p3166 = scmp.le.s32.totalorder 2, %s16
      // Predicated region
      $region84: #{parts_model_forward.1} parent=5 // pred_check
        %p3167 = pneg %p3166
      $region85: #{parts_model_forward.1} parent=5 // pred_check_branch
        %3169 = sbr.rel (%p3167) target = $region87
      $region86: #{parts_model_forward.1} parent=5 // pred_region
        %s3170 = ssub.s32 %s16, 2
        // Predicated region
        $region88: #{parts_model_forward.1} parent=86 // pred_check
          %p3171 = pneg %p260
        $region89: #{parts_model_forward.1} parent=86 // pred_check_branch
          %3173 = sbr.rel (%p3171) target = $region91
        $region90: #{parts_model_forward.1} parent=86 // pred_region
          %s3174 = sand.u32 %s245, 1
          %s3175 = sand.u32 %s245, 1
          %s3176 = smul.addr %s3175, 32
          %s3177 = scalar_lea.vmem [#allocation2], %s3176
        $region91: #{parts_model_forward.1} parent=86 // pred_fallthru
          _
      $region87: #{parts_model_forward.1} parent=5 // pred_fallthru
        _
    $region6: #{parts_model_forward.1} parent=1 // loop_footer
      %s20 = sadd.s32 1, %s16
    $region7: #{parts_model_forward.1} parent=1 // loop_footer_branch
      %15 = sbr.rel target = $region3
    $region8: #{parts_model_forward.1} parent=1 // loop_exit
      _

</llo_original>
